<compile_context>
chip_gen: v5e
topology: v5e:2x2
jax: 0.10.0
libtpu: 0.0.40
codegen_flags: <defaults>
</compile_context>

<pallas_src>
import functools

import jax
import jax.numpy as jnp
from jax import lax
from jax.experimental import pallas as pl
from jax.experimental.pallas import tpu as pltpu


def _reflection_pad_nchw(x, kernel_size):
    """nn.ReflectionPad2d semantics (reflect, edge not repeated)."""
    k = kernel_size
    if k % 2 == 1:
        ph = (k // 2, k // 2)
        pw = (k // 2, k // 2)
    else:
        # PyTorch tuple is (left, right, top, bottom)
        ph = (k // 2, k // 2 - 1)
        pw = (k // 2, k // 2 - 1)
    return jnp.pad(x, ((0, 0), (0, 0), ph, pw), mode="reflect")


@functools.lru_cache(maxsize=None)
def _mxu_precision():
    """Prefer Precision.HIGH (3-pass bf16 MXU decomposition); fall back to the
    known-good HIGHEST (6-pass) if this Mosaic build rejects HIGH."""
    def probe(a_ref, b_ref, o_ref):
        o_ref[...] = jnp.dot(a_ref[...], b_ref[...],
                             preferred_element_type=jnp.float32,
                             precision=lax.Precision.HIGH)
    try:
        fn = pl.pallas_call(
            probe, out_shape=jax.ShapeDtypeStruct((8, 128), jnp.float32))
        jax.jit(fn).lower(
            jax.ShapeDtypeStruct((8, 128), jnp.float32),
            jax.ShapeDtypeStruct((128, 128), jnp.float32)).compile()
        return lax.Precision.HIGH
    except Exception:
        return lax.Precision.HIGHEST


def _vmem_limit_bytes():
    """Generation-aware scoped-VMEM limit: physical capacity minus ~16 MiB
    headroom, capped at 112 MiB (=> ~48 MiB on v7x, ~112 MiB on v5e/v6e)."""
    try:
        cap = pltpu.get_tpu_info().vmem_capacity_bytes
    except Exception:
        cap = 64 << 20                       # conservative (v7x-sized) fallback
    return int(max(min(cap - (16 << 20), 112 << 20), 32 << 20))


def _pick_channel_block(C, H, W, H_p, W_p, K, vmem_limit):
    """Largest channel block (divisor of C) whose working set fits the budget."""
    toep_bytes = K * W_p * W * 4             # persistent in-kernel Toeplitz scratch
    budget = vmem_limit - toep_bytes - (8 << 20)
    best = 1
    for c_t in range(1, C + 1):
        if C % c_t:
            continue
        need = (2 * c_t * H_p * W_p * 4      # double-buffered padded input block
                + 2 * c_t * H * W * 4        # double-buffered output block
                + c_t * H * W * 4            # f32 tap accumulator value
                + 2 * c_t * H * W_p * 4)     # per-tap slice / reshape temporaries
        if need <= budget:
            best = c_t
    return best


def _blur_kernel_body(k_ref, x_ref, o_ref, toep_ref, *, K, H, W, W_p,
                      precision, fuse_channels):
    # k_ref:    VMEM (1, K, K)          per-batch blur kernel weights (f32)
    # x_ref:    VMEM (1, C_t, H_p, W_p) reflection-padded planes for this block
    # o_ref:    VMEM (1, C_t, H, W)     blurred output block
    # toep_ref: VMEM (K, W_p, W) f32    banded Toeplitz scratch; persists across
    #                                   the channel-block axis, rebuilt per batch
    c_t = x_ref.shape[1]

    # Build the K banded Toeplitz matrices from the tiny (K, K) kernel once per
    # batch (first channel block only).  T_i[r, w] = kernel[i, r - w] for
    # 0 <= r - w < K (cross-correlation, matching F.conv2d).
    @pl.when(pl.program_id(1) == 0)
    def _build_toeplitz():
        r = lax.broadcasted_iota(jnp.int32, (W_p, W), 0)
        w = lax.broadcasted_iota(jnp.int32, (W_p, W), 1)
        diff = r - w
        for i in range(K):
            t = jnp.zeros((W_p, W), jnp.float32)
            for j in range(K):
                kv = k_ref[0, i:i + 1, j:j + 1]        # (1, 1) scalar tile
                t = jnp.where(diff == j, kv, t)
            toep_ref[i] = t

    if fuse_channels:
        # One fused (C_t*H, W_p) @ (W_p, W) MXU matmul per tap; accumulate as a
        # value and store once (no scratch accumulator, no per-tap VMEM RMW).
        acc = None
        for i in range(K):
            lhs = x_ref[0, :, i:i + H, :].reshape(c_t * H, W_p)
            contrib = jnp.dot(lhs, toep_ref[i],
                              preferred_element_type=jnp.float32,
                              precision=precision)
            acc = contrib if acc is None else acc + contrib
        o_ref[0] = acc.reshape(c_t, H, W).astype(o_ref.dtype)
    else:
        # TODO(synk): conservative fallback when H is not a multiple of the
        # sublane tile (8): keep per-channel 2-D matmuls to avoid the reshape.
        for c in range(c_t):
            acc = None
            for i in range(K):
                contrib = jnp.dot(x_ref[0, c, i:i + H, :], toep_ref[i],
                                  preferred_element_type=jnp.float32,
                                  precision=precision)
                acc = contrib if acc is None else acc + contrib
            o_ref[0, c] = acc.astype(o_ref.dtype)


def _batch_blur_grouped(x, kernel, K):
    """x: (B, C, H, W) f32; kernel: (B, K, K) f32 (one kernel per batch, shared
    across that batch's channels).  Returns (B, C, H, W) f32."""
    B, C, H, W = x.shape
    x_pad = _reflection_pad_nchw(x, K)
    H_p, W_p = x_pad.shape[-2:]

    vmem_limit = _vmem_limit_bytes()
    c_t = _pick_channel_block(C, H, W, H_p, W_p, K, vmem_limit)
    precision = _mxu_precision()
    fuse_channels = (H % 8 == 0) or (c_t == 1)

    body = functools.partial(_blur_kernel_body, K=K, H=H, W=W, W_p=W_p,
                             precision=precision, fuse_channels=fuse_channels)

    return pl.pallas_call(
        body,
        out_shape=jax.ShapeDtypeStruct((B, C, H, W), jnp.float32),
        grid_spec=pltpu.PrefetchScalarGridSpec(
            num_scalar_prefetch=0,
            grid=(B, C // c_t),
            in_specs=[
                # Tiny per-batch blur kernel; its block index only depends on b,
                # so the DMA is skipped across the inner channel-block axis.
                pl.BlockSpec((1, K, K), lambda b, c: (b, 0, 0)),
                # C_t reflection-padded image planes of batch b per grid step.
                pl.BlockSpec((1, c_t, H_p, W_p), lambda b, c: (b, c, 0, 0)),
            ],
            out_specs=pl.BlockSpec((1, c_t, H, W), lambda b, c: (b, c, 0, 0)),
            # Banded Toeplitz built in-kernel; persists across channel blocks.
            scratch_shapes=[pltpu.VMEM((K, W_p, W), jnp.float32)],
        ),
        compiler_params=pltpu.CompilerParams(
            # Channel axis carries the Toeplitz scratch -> must stay "arbitrary";
            # batch axis is "parallel" for megacore sharding.
            dimension_semantics=("parallel", "arbitrary"),
            vmem_limit_bytes=vmem_limit,
        ),
    )(kernel, x_pad)


def batch_blur(x, kernel, kernel_size):
    """BatchBlur.forward.

    x:      (B, C, H, W) float32
    kernel: (K, K)      -> shared-kernel branch, or
            (B, K, K)   -> per-batch kernel branch
    returns (B, C, H, W) with x's dtype
    """
    B, C, H, W = x.shape
    K = kernel_size
    if kernel.ndim == 2:
        # Shared-kernel branch: one kernel over all B*C planes.  Flatten (B, C)
        # into one channel axis so blocks can span batches and the Toeplitz is
        # built exactly once for the whole call.
        xg = x.reshape(1, B * C, H, W).astype(jnp.float32)
        kg = kernel.reshape(1, K, K).astype(jnp.float32)
    else:
        xg = x.astype(jnp.float32)
        kg = kernel.reshape(B, K, K).astype(jnp.float32)
    out = _batch_blur_grouped(xg, kg, K)
    return out.reshape(B, C, H, W).astype(x.dtype)


def _reference_batch_blur(x, kernel, kernel_size):
    """Pure-JAX reference mirroring the PyTorch grouped-conv branch."""
    B, C, H, W = x.shape
    K = kernel_size
    if kernel.ndim == 2:
        kernel = jnp.broadcast_to(kernel, (B, K, K))
    x_pad = _reflection_pad_nchw(x, K)
    H_p, W_p = x_pad.shape[-2:]
    inp = x_pad.reshape(1, B * C, H_p, W_p)
    ker = jnp.repeat(kernel[:, None, :, :], C, axis=1).reshape(B * C, 1, K, K)
    out = lax.conv_general_dilated(
        inp, ker, window_strides=(1, 1), padding="VALID",
        dimension_numbers=("NCHW", "OIHW", "NCHW"),
        feature_group_count=B * C,
        precision=lax.Precision.HIGHEST,
    )
    return out.reshape(B, C, H, W)


if __name__ == "__main__":
    B, C, H, W = 2, 4, 16, 16
    KSIZE = 7  # module default is 21; 7 keeps pad < spatial at this demo size

    key = jax.random.PRNGKey(0)
    kx, kk = jax.random.split(key)
    x = jax.random.normal(kx, (B, C, H, W), dtype=jnp.float32)

    # deterministic per-batch blur kernels, normalized to sum to 1
    raw = jax.random.uniform(kk, (B, KSIZE, KSIZE), dtype=jnp.float32)
    blur_k = raw / jnp.sum(raw, axis=(-2, -1), keepdims=True)

    # per-batch kernel branch (kernel.ndim == 3)
    out3 = jax.block_until_ready(batch_blur(x, blur_k, KSIZE))
    ref3 = _reference_batch_blur(x, blur_k, KSIZE)
    assert out3.shape == (B, C, H, W)
    assert jnp.allclose(out3, ref3, atol=1e-4, rtol=1e-4)

    # shared kernel branch (kernel.ndim == 2)
    out2 = jax.block_until_ready(batch_blur(x, blur_k[0], KSIZE))
    ref2 = _reference_batch_blur(x, blur_k[0], KSIZE)
    assert jnp.allclose(out2, ref2, atol=1e-4, rtol=1e-4)

    print("KERNEL_OK")
</pallas_src>

<mosaic_0001>
module attributes {stable_mosaic.version = 11 : i64} {
  func.func @_blur_kernel_body(%arg0: i32, %arg1: i32, %arg2: memref<1x7x7xf32, #tpu.memory_space<vmem>>, %arg3: memref<1x4x22x22xf32, #tpu.memory_space<vmem>>, %arg4: memref<1x4x16x16xf32, #tpu.memory_space<vmem>>, %arg5: memref<7x22x16xf32, #tpu.memory_space<vmem>>) attributes {dimension_semantics = [#tpu.dimension_semantics<parallel>, #tpu.dimension_semantics<arbitrary>], iteration_bounds = array<i64: 2, 1>, scalar_prefetch = 0 : i64, scratch_operands = 1 : i64, tpu.core_type = #tpu.core_type<tc>, window_params = [{transform_indices = @transform_0, window_bounds = array<i64: 1, 7, 7>}, {transform_indices = @transform_1, window_bounds = array<i64: 1, 4, 22, 22>}, {transform_indices = @transform_2, window_bounds = array<i64: 1, 4, 16, 16>}]} {
    %c0_i32 = arith.constant 0 : i32
    %0 = arith.cmpi eq, %arg1, %c0_i32 : i32
    %1 = arith.extui %0 : i1 to i32
    %c0_i32_0 = arith.constant 0 : i32
    %2 = arith.cmpi ne, %1, %c0_i32_0 : i32
    scf.if %2 {
      %55 = tpu.iota {dimensions = array<i32: 0>} : vector<22x16xi32>
      %56 = tpu.iota {dimensions = array<i32: 1>} : vector<22x16xi32>
      %57 = arith.subi %55, %56 : vector<22x16xi32>
      %cst_53 = arith.constant 0.000000e+00 : f32
      %58 = vector.broadcast %cst_53 : f32 to vector<22x16xf32>
      %c0_54 = arith.constant 0 : index
      %c0_55 = arith.constant 0 : index
      %c0_56 = arith.constant 0 : index
      %59 = vector.load %arg2[%c0_54, %c0_55, %c0_56] : memref<1x7x7xf32, #tpu.memory_space<vmem>>, vector<1x1x1xf32>
      %60 = vector.shape_cast %59 : vector<1x1x1xf32> to vector<1x1xf32>
      %c0_i32_57 = arith.constant 0 : i32
      %61 = vector.broadcast %c0_i32_57 : i32 to vector<22x16xi32>
      %62 = arith.cmpi eq, %57, %61 : vector<22x16xi32>
      %63 = vector.shape_cast %60 : vector<1x1xf32> to vector<1x1xf32>
      %64 = vector.broadcast %63 : vector<1x1xf32> to vector<22x16xf32>
      %65 = arith.select %62, %64, %58 : vector<22x16xi1>, vector<22x16xf32>
      %c0_58 = arith.constant 0 : index
      %c0_59 = arith.constant 0 : index
      %c1_60 = arith.constant 1 : index
      %66 = vector.load %arg2[%c0_58, %c0_59, %c1_60] : memref<1x7x7xf32, #tpu.memory_space<vmem>>, vector<1x1x1xf32>
      %67 = vector.shape_cast %66 : vector<1x1x1xf32> to vector<1x1xf32>
      %c1_i32 = arith.constant 1 : i32
      %68 = vector.broadcast %c1_i32 : i32 to vector<22x16xi32>
      %69 = arith.cmpi eq, %57, %68 : vector<22x16xi32>
      %70 = vector.shape_cast %67 : vector<1x1xf32> to vector<1x1xf32>
      %71 = vector.broadcast %70 : vector<1x1xf32> to vector<22x16xf32>
      %72 = arith.select %69, %71, %65 : vector<22x16xi1>, vector<22x16xf32>
      %c0_61 = arith.constant 0 : index
      %c0_62 = arith.constant 0 : index
      %c2_63 = arith.constant 2 : index
      %73 = vector.load %arg2[%c0_61, %c0_62, %c2_63] : memref<1x7x7xf32, #tpu.memory_space<vmem>>, vector<1x1x1xf32>
      %74 = vector.shape_cast %73 : vector<1x1x1xf32> to vector<1x1xf32>
      %c2_i32 = arith.constant 2 : i32
      %75 = vector.broadcast %c2_i32 : i32 to vector<22x16xi32>
      %76 = arith.cmpi eq, %57, %75 : vector<22x16xi32>
      %77 = vector.shape_cast %74 : vector<1x1xf32> to vector<1x1xf32>
      %78 = vector.broadcast %77 : vector<1x1xf32> to vector<22x16xf32>
      %79 = arith.select %76, %78, %72 : vector<22x16xi1>, vector<22x16xf32>
      %c0_64 = arith.constant 0 : index
      %c0_65 = arith.constant 0 : index
      %c3_66 = arith.constant 3 : index
      %80 = vector.load %arg2[%c0_64, %c0_65, %c3_66] : memref<1x7x7xf32, #tpu.memory_space<vmem>>, vector<1x1x1xf32>
      %81 = vector.shape_cast %80 : vector<1x1x1xf32> to vector<1x1xf32>
      %c3_i32 = arith.constant 3 : i32
      %82 = vector.broadcast %c3_i32 : i32 to vector<22x16xi32>
      %83 = arith.cmpi eq, %57, %82 : vector<22x16xi32>
      %84 = vector.shape_cast %81 : vector<1x1xf32> to vector<1x1xf32>
      %85 = vector.broadcast %84 : vector<1x1xf32> to vector<22x16xf32>
      %86 = arith.select %83, %85, %79 : vector<22x16xi1>, vector<22x16xf32>
      %c0_67 = arith.constant 0 : index
      %c0_68 = arith.constant 0 : index
      %c4_69 = arith.constant 4 : index
      %87 = vector.load %arg2[%c0_67, %c0_68, %c4_69] : memref<1x7x7xf32, #tpu.memory_space<vmem>>, vector<1x1x1xf32>
      %88 = vector.shape_cast %87 : vector<1x1x1xf32> to vector<1x1xf32>
      %c4_i32 = arith.constant 4 : i32
      %89 = vector.broadcast %c4_i32 : i32 to vector<22x16xi32>
      %90 = arith.cmpi eq, %57, %89 : vector<22x16xi32>
      %91 = vector.shape_cast %88 : vector<1x1xf32> to vector<1x1xf32>
      %92 = vector.broadcast %91 : vector<1x1xf32> to vector<22x16xf32>
      %93 = arith.select %90, %92, %86 : vector<22x16xi1>, vector<22x16xf32>
      %c0_70 = arith.constant 0 : index
      %c0_71 = arith.constant 0 : index
      %c5_72 = arith.constant 5 : index
      %94 = vector.load %arg2[%c0_70, %c0_71, %c5_72] : memref<1x7x7xf32, #tpu.memory_space<vmem>>, vector<1x1x1xf32>
      %95 = vector.shape_cast %94 : vector<1x1x1xf32> to vector<1x1xf32>
      %c5_i32 = arith.constant 5 : i32
      %96 = vector.broadcast %c5_i32 : i32 to vector<22x16xi32>
      %97 = arith.cmpi eq, %57, %96 : vector<22x16xi32>
      %98 = vector.shape_cast %95 : vector<1x1xf32> to vector<1x1xf32>
      %99 = vector.broadcast %98 : vector<1x1xf32> to vector<22x16xf32>
      %100 = arith.select %97, %99, %93 : vector<22x16xi1>, vector<22x16xf32>
      %c0_73 = arith.constant 0 : index
      %c0_74 = arith.constant 0 : index
      %c6_75 = arith.constant 6 : index
      %101 = vector.load %arg2[%c0_73, %c0_74, %c6_75] : memref<1x7x7xf32, #tpu.memory_space<vmem>>, vector<1x1x1xf32>
      %102 = vector.shape_cast %101 : vector<1x1x1xf32> to vector<1x1xf32>
      %c6_i32 = arith.constant 6 : i32
      %103 = vector.broadcast %c6_i32 : i32 to vector<22x16xi32>
      %104 = arith.cmpi eq, %57, %103 : vector<22x16xi32>
      %105 = vector.shape_cast %102 : vector<1x1xf32> to vector<1x1xf32>
      %106 = vector.broadcast %105 : vector<1x1xf32> to vector<22x16xf32>
      %107 = arith.select %104, %106, %100 : vector<22x16xi1>, vector<22x16xf32>
      %c0_76 = arith.constant 0 : index
      %c0_77 = arith.constant 0 : index
      %c0_78 = arith.constant 0 : index
      %108 = vector.load %arg5[%c0_76, %c0_77, %c0_78] : memref<7x22x16xf32, #tpu.memory_space<vmem>>, vector<1x22x16xf32>
      %109 = vector.shape_cast %108 : vector<1x22x16xf32> to vector<22x16xf32>
      %110 = vector.shape_cast %107 : vector<22x16xf32> to vector<1x22x16xf32>
      tpu.vector_store %arg5[%c0_76, %c0_77, %c0_78], %110 {strides = array<i32>} : memref<7x22x16xf32, #tpu.memory_space<vmem>>, vector<1x22x16xf32>,
      %cst_79 = arith.constant 0.000000e+00 : f32
      %111 = vector.broadcast %cst_79 : f32 to vector<22x16xf32>
      %c0_80 = arith.constant 0 : index
      %c1_81 = arith.constant 1 : index
      %c0_82 = arith.constant 0 : index
      %112 = vector.load %arg2[%c0_80, %c1_81, %c0_82] : memref<1x7x7xf32, #tpu.memory_space<vmem>>, vector<1x1x1xf32>
      %113 = vector.shape_cast %112 : vector<1x1x1xf32> to vector<1x1xf32>
      %c0_i32_83 = arith.constant 0 : i32
      %114 = vector.broadcast %c0_i32_83 : i32 to vector<22x16xi32>
      %115 = arith.cmpi eq, %57, %114 : vector<22x16xi32>
      %116 = vector.shape_cast %113 : vector<1x1xf32> to vector<1x1xf32>
      %117 = vector.broadcast %116 : vector<1x1xf32> to vector<22x16xf32>
      %118 = arith.select %115, %117, %111 : vector<22x16xi1>, vector<22x16xf32>
      %c0_84 = arith.constant 0 : index
      %c1_85 = arith.constant 1 : index
      %c1_86 = arith.constant 1 : index
      %119 = vector.load %arg2[%c0_84, %c1_85, %c1_86] : memref<1x7x7xf32, #tpu.memory_space<vmem>>, vector<1x1x1xf32>
      %120 = vector.shape_cast %119 : vector<1x1x1xf32> to vector<1x1xf32>
      %c1_i32_87 = arith.constant 1 : i32
      %121 = vector.broadcast %c1_i32_87 : i32 to vector<22x16xi32>
      %122 = arith.cmpi eq, %57, %121 : vector<22x16xi32>
      %123 = vector.shape_cast %120 : vector<1x1xf32> to vector<1x1xf32>
      %124 = vector.broadcast %123 : vector<1x1xf32> to vector<22x16xf32>
      %125 = arith.select %122, %124, %118 : vector<22x16xi1>, vector<22x16xf32>
      %c0_88 = arith.constant 0 : index
      %c1_89 = arith.constant 1 : index
      %c2_90 = arith.constant 2 : index
      %126 = vector.load %arg2[%c0_88, %c1_89, %c2_90] : memref<1x7x7xf32, #tpu.memory_space<vmem>>, vector<1x1x1xf32>
      %127 = vector.shape_cast %126 : vector<1x1x1xf32> to vector<1x1xf32>
      %c2_i32_91 = arith.constant 2 : i32
      %128 = vector.broadcast %c2_i32_91 : i32 to vector<22x16xi32>
      %129 = arith.cmpi eq, %57, %128 : vector<22x16xi32>
      %130 = vector.shape_cast %127 : vector<1x1xf32> to vector<1x1xf32>
      %131 = vector.broadcast %130 : vector<1x1xf32> to vector<22x16xf32>
      %132 = arith.select %129, %131, %125 : vector<22x16xi1>, vector<22x16xf32>
      %c0_92 = arith.constant 0 : index
      %c1_93 = arith.constant 1 : index
      %c3_94 = arith.constant 3 : index
      %133 = vector.load %arg2[%c0_92, %c1_93, %c3_94] : memref<1x7x7xf32, #tpu.memory_space<vmem>>, vector<1x1x1xf32>
      %134 = vector.shape_cast %133 : vector<1x1x1xf32> to vector<1x1xf32>
      %c3_i32_95 = arith.constant 3 : i32
      %135 = vector.broadcast %c3_i32_95 : i32 to vector<22x16xi32>
      %136 = arith.cmpi eq, %57, %135 : vector<22x16xi32>
      %137 = vector.shape_cast %134 : vector<1x1xf32> to vector<1x1xf32>
      %138 = vector.broadcast %137 : vector<1x1xf32> to vector<22x16xf32>
      %139 = arith.select %136, %138, %132 : vector<22x16xi1>, vector<22x16xf32>
      %c0_96 = arith.constant 0 : index
      %c1_97 = arith.constant 1 : index
      %c4_98 = arith.constant 4 : index
      %140 = vector.load %arg2[%c0_96, %c1_97, %c4_98] : memref<1x7x7xf32, #tpu.memory_space<vmem>>, vector<1x1x1xf32>
      %141 = vector.shape_cast %140 : vector<1x1x1xf32> to vector<1x1xf32>
      %c4_i32_99 = arith.constant 4 : i32
      %142 = vector.broadcast %c4_i32_99 : i32 to vector<22x16xi32>
      %143 = arith.cmpi eq, %57, %142 : vector<22x16xi32>
      %144 = vector.shape_cast %141 : vector<1x1xf32> to vector<1x1xf32>
      %145 = vector.broadcast %144 : vector<1x1xf32> to vector<22x16xf32>
      %146 = arith.select %143, %145, %139 : vector<22x16xi1>, vector<22x16xf32>
      %c0_100 = arith.constant 0 : index
      %c1_101 = arith.constant 1 : index
      %c5_102 = arith.constant 5 : index
      %147 = vector.load %arg2[%c0_100, %c1_101, %c5_102] : memref<1x7x7xf32, #tpu.memory_space<vmem>>, vector<1x1x1xf32>
      %148 = vector.shape_cast %147 : vector<1x1x1xf32> to vector<1x1xf32>
      %c5_i32_103 = arith.constant 5 : i32
      %149 = vector.broadcast %c5_i32_103 : i32 to vector<22x16xi32>
      %150 = arith.cmpi eq, %57, %149 : vector<22x16xi32>
      %151 = vector.shape_cast %148 : vector<1x1xf32> to vector<1x1xf32>
      %152 = vector.broadcast %151 : vector<1x1xf32> to vector<22x16xf32>
      %153 = arith.select %150, %152, %146 : vector<22x16xi1>, vector<22x16xf32>
      %c0_104 = arith.constant 0 : index
      %c1_105 = arith.constant 1 : index
      %c6_106 = arith.constant 6 : index
      %154 = vector.load %arg2[%c0_104, %c1_105, %c6_106] : memref<1x7x7xf32, #tpu.memory_space<vmem>>, vector<1x1x1xf32>
      %155 = vector.shape_cast %154 : vector<1x1x1xf32> to vector<1x1xf32>
      %c6_i32_107 = arith.constant 6 : i32
      %156 = vector.broadcast %c6_i32_107 : i32 to vector<22x16xi32>
      %157 = arith.cmpi eq, %57, %156 : vector<22x16xi32>
      %158 = vector.shape_cast %155 : vector<1x1xf32> to vector<1x1xf32>
      %159 = vector.broadcast %158 : vector<1x1xf32> to vector<22x16xf32>
      %160 = arith.select %157, %159, %153 : vector<22x16xi1>, vector<22x16xf32>
      %c1_108 = arith.constant 1 : index
      %c0_109 = arith.constant 0 : index
      %c0_110 = arith.constant 0 : index
      %161 = vector.load %arg5[%c1_108, %c0_109, %c0_110] : memref<7x22x16xf32, #tpu.memory_space<vmem>>, vector<1x22x16xf32>
      %162 = vector.shape_cast %161 : vector<1x22x16xf32> to vector<22x16xf32>
      %163 = vector.shape_cast %160 : vector<22x16xf32> to vector<1x22x16xf32>
      tpu.vector_store %arg5[%c1_108, %c0_109, %c0_110], %163 {strides = array<i32>} : memref<7x22x16xf32, #tpu.memory_space<vmem>>, vector<1x22x16xf32>,
      %cst_111 = arith.constant 0.000000e+00 : f32
      %164 = vector.broadcast %cst_111 : f32 to vector<22x16xf32>
      %c0_112 = arith.constant 0 : index
      %c2_113 = arith.constant 2 : index
      %c0_114 = arith.constant 0 : index
      %165 = vector.load %arg2[%c0_112, %c2_113, %c0_114] : memref<1x7x7xf32, #tpu.memory_space<vmem>>, vector<1x1x1xf32>
      %166 = vector.shape_cast %165 : vector<1x1x1xf32> to vector<1x1xf32>
      %c0_i32_115 = arith.constant 0 : i32
      %167 = vector.broadcast %c0_i32_115 : i32 to vector<22x16xi32>
      %168 = arith.cmpi eq, %57, %167 : vector<22x16xi32>
      %169 = vector.shape_cast %166 : vector<1x1xf32> to vector<1x1xf32>
      %170 = vector.broadcast %169 : vector<1x1xf32> to vector<22x16xf32>
      %171 = arith.select %168, %170, %164 : vector<22x16xi1>, vector<22x16xf32>
      %c0_116 = arith.constant 0 : index
      %c2_117 = arith.constant 2 : index
      %c1_118 = arith.constant 1 : index
      %172 = vector.load %arg2[%c0_116, %c2_117, %c1_118] : memref<1x7x7xf32, #tpu.memory_space<vmem>>, vector<1x1x1xf32>
      %173 = vector.shape_cast %172 : vector<1x1x1xf32> to vector<1x1xf32>
      %c1_i32_119 = arith.constant 1 : i32
      %174 = vector.broadcast %c1_i32_119 : i32 to vector<22x16xi32>
      %175 = arith.cmpi eq, %57, %174 : vector<22x16xi32>
      %176 = vector.shape_cast %173 : vector<1x1xf32> to vector<1x1xf32>
      %177 = vector.broadcast %176 : vector<1x1xf32> to vector<22x16xf32>
      %178 = arith.select %175, %177, %171 : vector<22x16xi1>, vector<22x16xf32>
      %c0_120 = arith.constant 0 : index
      %c2_121 = arith.constant 2 : index
      %c2_122 = arith.constant 2 : index
      %179 = vector.load %arg2[%c0_120, %c2_121, %c2_122] : memref<1x7x7xf32, #tpu.memory_space<vmem>>, vector<1x1x1xf32>
      %180 = vector.shape_cast %179 : vector<1x1x1xf32> to vector<1x1xf32>
      %c2_i32_123 = arith.constant 2 : i32
      %181 = vector.broadcast %c2_i32_123 : i32 to vector<22x16xi32>
      %182 = arith.cmpi eq, %57, %181 : vector<22x16xi32>
      %183 = vector.shape_cast %180 : vector<1x1xf32> to vector<1x1xf32>
      %184 = vector.broadcast %183 : vector<1x1xf32> to vector<22x16xf32>
      %185 = arith.select %182, %184, %178 : vector<22x16xi1>, vector<22x16xf32>
      %c0_124 = arith.constant 0 : index
      %c2_125 = arith.constant 2 : index
      %c3_126 = arith.constant 3 : index
      %186 = vector.load %arg2[%c0_124, %c2_125, %c3_126] : memref<1x7x7xf32, #tpu.memory_space<vmem>>, vector<1x1x1xf32>
      %187 = vector.shape_cast %186 : vector<1x1x1xf32> to vector<1x1xf32>
      %c3_i32_127 = arith.constant 3 : i32
      %188 = vector.broadcast %c3_i32_127 : i32 to vector<22x16xi32>
      %189 = arith.cmpi eq, %57, %188 : vector<22x16xi32>
      %190 = vector.shape_cast %187 : vector<1x1xf32> to vector<1x1xf32>
      %191 = vector.broadcast %190 : vector<1x1xf32> to vector<22x16xf32>
      %192 = arith.select %189, %191, %185 : vector<22x16xi1>, vector<22x16xf32>
      %c0_128 = arith.constant 0 : index
      %c2_129 = arith.constant 2 : index
      %c4_130 = arith.constant 4 : index
      %193 = vector.load %arg2[%c0_128, %c2_129, %c4_130] : memref<1x7x7xf32, #tpu.memory_space<vmem>>, vector<1x1x1xf32>
      %194 = vector.shape_cast %193 : vector<1x1x1xf32> to vector<1x1xf32>
      %c4_i32_131 = arith.constant 4 : i32
      %195 = vector.broadcast %c4_i32_131 : i32 to vector<22x16xi32>
      %196 = arith.cmpi eq, %57, %195 : vector<22x16xi32>
      %197 = vector.shape_cast %194 : vector<1x1xf32> to vector<1x1xf32>
      %198 = vector.broadcast %197 : vector<1x1xf32> to vector<22x16xf32>
      %199 = arith.select %196, %198, %192 : vector<22x16xi1>, vector<22x16xf32>
      %c0_132 = arith.constant 0 : index
      %c2_133 = arith.constant 2 : index
      %c5_134 = arith.constant 5 : index
      %200 = vector.load %arg2[%c0_132, %c2_133, %c5_134] : memref<1x7x7xf32, #tpu.memory_space<vmem>>, vector<1x1x1xf32>
      %201 = vector.shape_cast %200 : vector<1x1x1xf32> to vector<1x1xf32>
      %c5_i32_135 = arith.constant 5 : i32
      %202 = vector.broadcast %c5_i32_135 : i32 to vector<22x16xi32>
      %203 = arith.cmpi eq, %57, %202 : vector<22x16xi32>
      %204 = vector.shape_cast %201 : vector<1x1xf32> to vector<1x1xf32>
      %205 = vector.broadcast %204 : vector<1x1xf32> to vector<22x16xf32>
      %206 = arith.select %203, %205, %199 : vector<22x16xi1>, vector<22x16xf32>
      %c0_136 = arith.constant 0 : index
      %c2_137 = arith.constant 2 : index
      %c6_138 = arith.constant 6 : index
      %207 = vector.load %arg2[%c0_136, %c2_137, %c6_138] : memref<1x7x7xf32, #tpu.memory_space<vmem>>, vector<1x1x1xf32>
      %208 = vector.shape_cast %207 : vector<1x1x1xf32> to vector<1x1xf32>
      %c6_i32_139 = arith.constant 6 : i32
      %209 = vector.broadcast %c6_i32_139 : i32 to vector<22x16xi32>
      %210 = arith.cmpi eq, %57, %209 : vector<22x16xi32>
      %211 = vector.shape_cast %208 : vector<1x1xf32> to vector<1x1xf32>
      %212 = vector.broadcast %211 : vector<1x1xf32> to vector<22x16xf32>
      %213 = arith.select %210, %212, %206 : vector<22x16xi1>, vector<22x16xf32>
      %c2_140 = arith.constant 2 : index
      %c0_141 = arith.constant 0 : index
      %c0_142 = arith.constant 0 : index
      %214 = vector.load %arg5[%c2_140, %c0_141, %c0_142] : memref<7x22x16xf32, #tpu.memory_space<vmem>>, vector<1x22x16xf32>
      %215 = vector.shape_cast %214 : vector<1x22x16xf32> to vector<22x16xf32>
      %216 = vector.shape_cast %213 : vector<22x16xf32> to vector<1x22x16xf32>
      tpu.vector_store %arg5[%c2_140, %c0_141, %c0_142], %216 {strides = array<i32>} : memref<7x22x16xf32, #tpu.memory_space<vmem>>, vector<1x22x16xf32>,
      %cst_143 = arith.constant 0.000000e+00 : f32
      %217 = vector.broadcast %cst_143 : f32 to vector<22x16xf32>
      %c0_144 = arith.constant 0 : index
      %c3_145 = arith.constant 3 : index
      %c0_146 = arith.constant 0 : index
      %218 = vector.load %arg2[%c0_144, %c3_145, %c0_146] : memref<1x7x7xf32, #tpu.memory_space<vmem>>, vector<1x1x1xf32>
      %219 = vector.shape_cast %218 : vector<1x1x1xf32> to vector<1x1xf32>
      %c0_i32_147 = arith.constant 0 : i32
      %220 = vector.broadcast %c0_i32_147 : i32 to vector<22x16xi32>
      %221 = arith.cmpi eq, %57, %220 : vector<22x16xi32>
      %222 = vector.shape_cast %219 : vector<1x1xf32> to vector<1x1xf32>
      %223 = vector.broadcast %222 : vector<1x1xf32> to vector<22x16xf32>
      %224 = arith.select %221, %223, %217 : vector<22x16xi1>, vector<22x16xf32>
      %c0_148 = arith.constant 0 : index
      %c3_149 = arith.constant 3 : index
      %c1_150 = arith.constant 1 : index
      %225 = vector.load %arg2[%c0_148, %c3_149, %c1_150] : memref<1x7x7xf32, #tpu.memory_space<vmem>>, vector<1x1x1xf32>
      %226 = vector.shape_cast %225 : vector<1x1x1xf32> to vector<1x1xf32>
      %c1_i32_151 = arith.constant 1 : i32
      %227 = vector.broadcast %c1_i32_151 : i32 to vector<22x16xi32>
      %228 = arith.cmpi eq, %57, %227 : vector<22x16xi32>
      %229 = vector.shape_cast %226 : vector<1x1xf32> to vector<1x1xf32>
      %230 = vector.broadcast %229 : vector<1x1xf32> to vector<22x16xf32>
      %231 = arith.select %228, %230, %224 : vector<22x16xi1>, vector<22x16xf32>
      %c0_152 = arith.constant 0 : index
      %c3_153 = arith.constant 3 : index
      %c2_154 = arith.constant 2 : index
      %232 = vector.load %arg2[%c0_152, %c3_153, %c2_154] : memref<1x7x7xf32, #tpu.memory_space<vmem>>, vector<1x1x1xf32>
      %233 = vector.shape_cast %232 : vector<1x1x1xf32> to vector<1x1xf32>
      %c2_i32_155 = arith.constant 2 : i32
      %234 = vector.broadcast %c2_i32_155 : i32 to vector<22x16xi32>
      %235 = arith.cmpi eq, %57, %234 : vector<22x16xi32>
      %236 = vector.shape_cast %233 : vector<1x1xf32> to vector<1x1xf32>
      %237 = vector.broadcast %236 : vector<1x1xf32> to vector<22x16xf32>
      %238 = arith.select %235, %237, %231 : vector<22x16xi1>, vector<22x16xf32>
      %c0_156 = arith.constant 0 : index
      %c3_157 = arith.constant 3 : index
      %c3_158 = arith.constant 3 : index
      %239 = vector.load %arg2[%c0_156, %c3_157, %c3_158] : memref<1x7x7xf32, #tpu.memory_space<vmem>>, vector<1x1x1xf32>
      %240 = vector.shape_cast %239 : vector<1x1x1xf32> to vector<1x1xf32>
      %c3_i32_159 = arith.constant 3 : i32
      %241 = vector.broadcast %c3_i32_159 : i32 to vector<22x16xi32>
      %242 = arith.cmpi eq, %57, %241 : vector<22x16xi32>
      %243 = vector.shape_cast %240 : vector<1x1xf32> to vector<1x1xf32>
      %244 = vector.broadcast %243 : vector<1x1xf32> to vector<22x16xf32>
      %245 = arith.select %242, %244, %238 : vector<22x16xi1>, vector<22x16xf32>
      %c0_160 = arith.constant 0 : index
      %c3_161 = arith.constant 3 : index
      %c4_162 = arith.constant 4 : index
      %246 = vector.load %arg2[%c0_160, %c3_161, %c4_162] : memref<1x7x7xf32, #tpu.memory_space<vmem>>, vector<1x1x1xf32>
      %247 = vector.shape_cast %246 : vector<1x1x1xf32> to vector<1x1xf32>
      %c4_i32_163 = arith.constant 4 : i32
      %248 = vector.broadcast %c4_i32_163 : i32 to vector<22x16xi32>
      %249 = arith.cmpi eq, %57, %248 : vector<22x16xi32>
      %250 = vector.shape_cast %247 : vector<1x1xf32> to vector<1x1xf32>
      %251 = vector.broadcast %250 : vector<1x1xf32> to vector<22x16xf32>
      %252 = arith.select %249, %251, %245 : vector<22x16xi1>, vector<22x16xf32>
      %c0_164 = arith.constant 0 : index
      %c3_165 = arith.constant 3 : index
      %c5_166 = arith.constant 5 : index
      %253 = vector.load %arg2[%c0_164, %c3_165, %c5_166] : memref<1x7x7xf32, #tpu.memory_space<vmem>>, vector<1x1x1xf32>
      %254 = vector.shape_cast %253 : vector<1x1x1xf32> to vector<1x1xf32>
      %c5_i32_167 = arith.constant 5 : i32
      %255 = vector.broadcast %c5_i32_167 : i32 to vector<22x16xi32>
      %256 = arith.cmpi eq, %57, %255 : vector<22x16xi32>
      %257 = vector.shape_cast %254 : vector<1x1xf32> to vector<1x1xf32>
      %258 = vector.broadcast %257 : vector<1x1xf32> to vector<22x16xf32>
      %259 = arith.select %256, %258, %252 : vector<22x16xi1>, vector<22x16xf32>
      %c0_168 = arith.constant 0 : index
      %c3_169 = arith.constant 3 : index
      %c6_170 = arith.constant 6 : index
      %260 = vector.load %arg2[%c0_168, %c3_169, %c6_170] : memref<1x7x7xf32, #tpu.memory_space<vmem>>, vector<1x1x1xf32>
      %261 = vector.shape_cast %260 : vector<1x1x1xf32> to vector<1x1xf32>
      %c6_i32_171 = arith.constant 6 : i32
      %262 = vector.broadcast %c6_i32_171 : i32 to vector<22x16xi32>
      %263 = arith.cmpi eq, %57, %262 : vector<22x16xi32>
      %264 = vector.shape_cast %261 : vector<1x1xf32> to vector<1x1xf32>
      %265 = vector.broadcast %264 : vector<1x1xf32> to vector<22x16xf32>
      %266 = arith.select %263, %265, %259 : vector<22x16xi1>, vector<22x16xf32>
      %c3_172 = arith.constant 3 : index
      %c0_173 = arith.constant 0 : index
      %c0_174 = arith.constant 0 : index
      %267 = vector.load %arg5[%c3_172, %c0_173, %c0_174] : memref<7x22x16xf32, #tpu.memory_space<vmem>>, vector<1x22x16xf32>
      %268 = vector.shape_cast %267 : vector<1x22x16xf32> to vector<22x16xf32>
      %269 = vector.shape_cast %266 : vector<22x16xf32> to vector<1x22x16xf32>
      tpu.vector_store %arg5[%c3_172, %c0_173, %c0_174], %269 {strides = array<i32>} : memref<7x22x16xf32, #tpu.memory_space<vmem>>, vector<1x22x16xf32>,
      %cst_175 = arith.constant 0.000000e+00 : f32
      %270 = vector.broadcast %cst_175 : f32 to vector<22x16xf32>
      %c0_176 = arith.constant 0 : index
      %c4_177 = arith.constant 4 : index
      %c0_178 = arith.constant 0 : index
      %271 = vector.load %arg2[%c0_176, %c4_177, %c0_178] : memref<1x7x7xf32, #tpu.memory_space<vmem>>, vector<1x1x1xf32>
      %272 = vector.shape_cast %271 : vector<1x1x1xf32> to vector<1x1xf32>
      %c0_i32_179 = arith.constant 0 : i32
      %273 = vector.broadcast %c0_i32_179 : i32 to vector<22x16xi32>
      %274 = arith.cmpi eq, %57, %273 : vector<22x16xi32>
      %275 = vector.shape_cast %272 : vector<1x1xf32> to vector<1x1xf32>
      %276 = vector.broadcast %275 : vector<1x1xf32> to vector<22x16xf32>
      %277 = arith.select %274, %276, %270 : vector<22x16xi1>, vector<22x16xf32>
      %c0_180 = arith.constant 0 : index
      %c4_181 = arith.constant 4 : index
      %c1_182 = arith.constant 1 : index
      %278 = vector.load %arg2[%c0_180, %c4_181, %c1_182] : memref<1x7x7xf32, #tpu.memory_space<vmem>>, vector<1x1x1xf32>
      %279 = vector.shape_cast %278 : vector<1x1x1xf32> to vector<1x1xf32>
      %c1_i32_183 = arith.constant 1 : i32
      %280 = vector.broadcast %c1_i32_183 : i32 to vector<22x16xi32>
      %281 = arith.cmpi eq, %57, %280 : vector<22x16xi32>
      %282 = vector.shape_cast %279 : vector<1x1xf32> to vector<1x1xf32>
      %283 = vector.broadcast %282 : vector<1x1xf32> to vector<22x16xf32>
      %284 = arith.select %281, %283, %277 : vector<22x16xi1>, vector<22x16xf32>
      %c0_184 = arith.constant 0 : index
      %c4_185 = arith.constant 4 : index
      %c2_186 = arith.constant 2 : index
      %285 = vector.load %arg2[%c0_184, %c4_185, %c2_186] : memref<1x7x7xf32, #tpu.memory_space<vmem>>, vector<1x1x1xf32>
      %286 = vector.shape_cast %285 : vector<1x1x1xf32> to vector<1x1xf32>
      %c2_i32_187 = arith.constant 2 : i32
      %287 = vector.broadcast %c2_i32_187 : i32 to vector<22x16xi32>
      %288 = arith.cmpi eq, %57, %287 : vector<22x16xi32>
      %289 = vector.shape_cast %286 : vector<1x1xf32> to vector<1x1xf32>
      %290 = vector.broadcast %289 : vector<1x1xf32> to vector<22x16xf32>
      %291 = arith.select %288, %290, %284 : vector<22x16xi1>, vector<22x16xf32>
      %c0_188 = arith.constant 0 : index
      %c4_189 = arith.constant 4 : index
      %c3_190 = arith.constant 3 : index
      %292 = vector.load %arg2[%c0_188, %c4_189, %c3_190] : memref<1x7x7xf32, #tpu.memory_space<vmem>>, vector<1x1x1xf32>
      %293 = vector.shape_cast %292 : vector<1x1x1xf32> to vector<1x1xf32>
      %c3_i32_191 = arith.constant 3 : i32
      %294 = vector.broadcast %c3_i32_191 : i32 to vector<22x16xi32>
      %295 = arith.cmpi eq, %57, %294 : vector<22x16xi32>
      %296 = vector.shape_cast %293 : vector<1x1xf32> to vector<1x1xf32>
      %297 = vector.broadcast %296 : vector<1x1xf32> to vector<22x16xf32>
      %298 = arith.select %295, %297, %291 : vector<22x16xi1>, vector<22x16xf32>
      %c0_192 = arith.constant 0 : index
      %c4_193 = arith.constant 4 : index
      %c4_194 = arith.constant 4 : index
      %299 = vector.load %arg2[%c0_192, %c4_193, %c4_194] : memref<1x7x7xf32, #tpu.memory_space<vmem>>, vector<1x1x1xf32>
      %300 = vector.shape_cast %299 : vector<1x1x1xf32> to vector<1x1xf32>
      %c4_i32_195 = arith.constant 4 : i32
      %301 = vector.broadcast %c4_i32_195 : i32 to vector<22x16xi32>
      %302 = arith.cmpi eq, %57, %301 : vector<22x16xi32>
      %303 = vector.shape_cast %300 : vector<1x1xf32> to vector<1x1xf32>
      %304 = vector.broadcast %303 : vector<1x1xf32> to vector<22x16xf32>
      %305 = arith.select %302, %304, %298 : vector<22x16xi1>, vector<22x16xf32>
      %c0_196 = arith.constant 0 : index
      %c4_197 = arith.constant 4 : index
      %c5_198 = arith.constant 5 : index
      %306 = vector.load %arg2[%c0_196, %c4_197, %c5_198] : memref<1x7x7xf32, #tpu.memory_space<vmem>>, vector<1x1x1xf32>
      %307 = vector.shape_cast %306 : vector<1x1x1xf32> to vector<1x1xf32>
      %c5_i32_199 = arith.constant 5 : i32
      %308 = vector.broadcast %c5_i32_199 : i32 to vector<22x16xi32>
      %309 = arith.cmpi eq, %57, %308 : vector<22x16xi32>
      %310 = vector.shape_cast %307 : vector<1x1xf32> to vector<1x1xf32>
      %311 = vector.broadcast %310 : vector<1x1xf32> to vector<22x16xf32>
      %312 = arith.select %309, %311, %305 : vector<22x16xi1>, vector<22x16xf32>
      %c0_200 = arith.constant 0 : index
      %c4_201 = arith.constant 4 : index
      %c6_202 = arith.constant 6 : index
      %313 = vector.load %arg2[%c0_200, %c4_201, %c6_202] : memref<1x7x7xf32, #tpu.memory_space<vmem>>, vector<1x1x1xf32>
      %314 = vector.shape_cast %313 : vector<1x1x1xf32> to vector<1x1xf32>
      %c6_i32_203 = arith.constant 6 : i32
      %315 = vector.broadcast %c6_i32_203 : i32 to vector<22x16xi32>
      %316 = arith.cmpi eq, %57, %315 : vector<22x16xi32>
      %317 = vector.shape_cast %314 : vector<1x1xf32> to vector<1x1xf32>
      %318 = vector.broadcast %317 : vector<1x1xf32> to vector<22x16xf32>
      %319 = arith.select %316, %318, %312 : vector<22x16xi1>, vector<22x16xf32>
      %c4_204 = arith.constant 4 : index
      %c0_205 = arith.constant 0 : index
      %c0_206 = arith.constant 0 : index
      %320 = vector.load %arg5[%c4_204, %c0_205, %c0_206] : memref<7x22x16xf32, #tpu.memory_space<vmem>>, vector<1x22x16xf32>
      %321 = vector.shape_cast %320 : vector<1x22x16xf32> to vector<22x16xf32>
      %322 = vector.shape_cast %319 : vector<22x16xf32> to vector<1x22x16xf32>
      tpu.vector_store %arg5[%c4_204, %c0_205, %c0_206], %322 {strides = array<i32>} : memref<7x22x16xf32, #tpu.memory_space<vmem>>, vector<1x22x16xf32>,
      %cst_207 = arith.constant 0.000000e+00 : f32
      %323 = vector.broadcast %cst_207 : f32 to vector<22x16xf32>
      %c0_208 = arith.constant 0 : index
      %c5_209 = arith.constant 5 : index
      %c0_210 = arith.constant 0 : index
      %324 = vector.load %arg2[%c0_208, %c5_209, %c0_210] : memref<1x7x7xf32, #tpu.memory_space<vmem>>, vector<1x1x1xf32>
      %325 = vector.shape_cast %324 : vector<1x1x1xf32> to vector<1x1xf32>
      %c0_i32_211 = arith.constant 0 : i32
      %326 = vector.broadcast %c0_i32_211 : i32 to vector<22x16xi32>
      %327 = arith.cmpi eq, %57, %326 : vector<22x16xi32>
      %328 = vector.shape_cast %325 : vector<1x1xf32> to vector<1x1xf32>
      %329 = vector.broadcast %328 : vector<1x1xf32> to vector<22x16xf32>
      %330 = arith.select %327, %329, %323 : vector<22x16xi1>, vector<22x16xf32>
      %c0_212 = arith.constant 0 : index
      %c5_213 = arith.constant 5 : index
      %c1_214 = arith.constant 1 : index
      %331 = vector.load %arg2[%c0_212, %c5_213, %c1_214] : memref<1x7x7xf32, #tpu.memory_space<vmem>>, vector<1x1x1xf32>
      %332 = vector.shape_cast %331 : vector<1x1x1xf32> to vector<1x1xf32>
      %c1_i32_215 = arith.constant 1 : i32
      %333 = vector.broadcast %c1_i32_215 : i32 to vector<22x16xi32>
      %334 = arith.cmpi eq, %57, %333 : vector<22x16xi32>
      %335 = vector.shape_cast %332 : vector<1x1xf32> to vector<1x1xf32>
      %336 = vector.broadcast %335 : vector<1x1xf32> to vector<22x16xf32>
      %337 = arith.select %334, %336, %330 : vector<22x16xi1>, vector<22x16xf32>
      %c0_216 = arith.constant 0 : index
      %c5_217 = arith.constant 5 : index
      %c2_218 = arith.constant 2 : index
      %338 = vector.load %arg2[%c0_216, %c5_217, %c2_218] : memref<1x7x7xf32, #tpu.memory_space<vmem>>, vector<1x1x1xf32>
      %339 = vector.shape_cast %338 : vector<1x1x1xf32> to vector<1x1xf32>
      %c2_i32_219 = arith.constant 2 : i32
      %340 = vector.broadcast %c2_i32_219 : i32 to vector<22x16xi32>
      %341 = arith.cmpi eq, %57, %340 : vector<22x16xi32>
      %342 = vector.shape_cast %339 : vector<1x1xf32> to vector<1x1xf32>
      %343 = vector.broadcast %342 : vector<1x1xf32> to vector<22x16xf32>
      %344 = arith.select %341, %343, %337 : vector<22x16xi1>, vector<22x16xf32>
      %c0_220 = arith.constant 0 : index
      %c5_221 = arith.constant 5 : index
      %c3_222 = arith.constant 3 : index
      %345 = vector.load %arg2[%c0_220, %c5_221, %c3_222] : memref<1x7x7xf32, #tpu.memory_space<vmem>>, vector<1x1x1xf32>
      %346 = vector.shape_cast %345 : vector<1x1x1xf32> to vector<1x1xf32>
      %c3_i32_223 = arith.constant 3 : i32
      %347 = vector.broadcast %c3_i32_223 : i32 to vector<22x16xi32>
      %348 = arith.cmpi eq, %57, %347 : vector<22x16xi32>
      %349 = vector.shape_cast %346 : vector<1x1xf32> to vector<1x1xf32>
      %350 = vector.broadcast %349 : vector<1x1xf32> to vector<22x16xf32>
      %351 = arith.select %348, %350, %344 : vector<22x16xi1>, vector<22x16xf32>
      %c0_224 = arith.constant 0 : index
      %c5_225 = arith.constant 5 : index
      %c4_226 = arith.constant 4 : index
      %352 = vector.load %arg2[%c0_224, %c5_225, %c4_226] : memref<1x7x7xf32, #tpu.memory_space<vmem>>, vector<1x1x1xf32>
      %353 = vector.shape_cast %352 : vector<1x1x1xf32> to vector<1x1xf32>
      %c4_i32_227 = arith.constant 4 : i32
      %354 = vector.broadcast %c4_i32_227 : i32 to vector<22x16xi32>
      %355 = arith.cmpi eq, %57, %354 : vector<22x16xi32>
      %356 = vector.shape_cast %353 : vector<1x1xf32> to vector<1x1xf32>
      %357 = vector.broadcast %356 : vector<1x1xf32> to vector<22x16xf32>
      %358 = arith.select %355, %357, %351 : vector<22x16xi1>, vector<22x16xf32>
      %c0_228 = arith.constant 0 : index
      %c5_229 = arith.constant 5 : index
      %c5_230 = arith.constant 5 : index
      %359 = vector.load %arg2[%c0_228, %c5_229, %c5_230] : memref<1x7x7xf32, #tpu.memory_space<vmem>>, vector<1x1x1xf32>
      %360 = vector.shape_cast %359 : vector<1x1x1xf32> to vector<1x1xf32>
      %c5_i32_231 = arith.constant 5 : i32
      %361 = vector.broadcast %c5_i32_231 : i32 to vector<22x16xi32>
      %362 = arith.cmpi eq, %57, %361 : vector<22x16xi32>
      %363 = vector.shape_cast %360 : vector<1x1xf32> to vector<1x1xf32>
      %364 = vector.broadcast %363 : vector<1x1xf32> to vector<22x16xf32>
      %365 = arith.select %362, %364, %358 : vector<22x16xi1>, vector<22x16xf32>
      %c0_232 = arith.constant 0 : index
      %c5_233 = arith.constant 5 : index
      %c6_234 = arith.constant 6 : index
      %366 = vector.load %arg2[%c0_232, %c5_233, %c6_234] : memref<1x7x7xf32, #tpu.memory_space<vmem>>, vector<1x1x1xf32>
      %367 = vector.shape_cast %366 : vector<1x1x1xf32> to vector<1x1xf32>
      %c6_i32_235 = arith.constant 6 : i32
      %368 = vector.broadcast %c6_i32_235 : i32 to vector<22x16xi32>
      %369 = arith.cmpi eq, %57, %368 : vector<22x16xi32>
      %370 = vector.shape_cast %367 : vector<1x1xf32> to vector<1x1xf32>
      %371 = vector.broadcast %370 : vector<1x1xf32> to vector<22x16xf32>
      %372 = arith.select %369, %371, %365 : vector<22x16xi1>, vector<22x16xf32>
      %c5_236 = arith.constant 5 : index
      %c0_237 = arith.constant 0 : index
      %c0_238 = arith.constant 0 : index
      %373 = vector.load %arg5[%c5_236, %c0_237, %c0_238] : memref<7x22x16xf32, #tpu.memory_space<vmem>>, vector<1x22x16xf32>
      %374 = vector.shape_cast %373 : vector<1x22x16xf32> to vector<22x16xf32>
      %375 = vector.shape_cast %372 : vector<22x16xf32> to vector<1x22x16xf32>
      tpu.vector_store %arg5[%c5_236, %c0_237, %c0_238], %375 {strides = array<i32>} : memref<7x22x16xf32, #tpu.memory_space<vmem>>, vector<1x22x16xf32>,
      %cst_239 = arith.constant 0.000000e+00 : f32
      %376 = vector.broadcast %cst_239 : f32 to vector<22x16xf32>
      %c0_240 = arith.constant 0 : index
      %c6_241 = arith.constant 6 : index
      %c0_242 = arith.constant 0 : index
      %377 = vector.load %arg2[%c0_240, %c6_241, %c0_242] : memref<1x7x7xf32, #tpu.memory_space<vmem>>, vector<1x1x1xf32>
      %378 = vector.shape_cast %377 : vector<1x1x1xf32> to vector<1x1xf32>
      %c0_i32_243 = arith.constant 0 : i32
      %379 = vector.broadcast %c0_i32_243 : i32 to vector<22x16xi32>
      %380 = arith.cmpi eq, %57, %379 : vector<22x16xi32>
      %381 = vector.shape_cast %378 : vector<1x1xf32> to vector<1x1xf32>
      %382 = vector.broadcast %381 : vector<1x1xf32> to vector<22x16xf32>
      %383 = arith.select %380, %382, %376 : vector<22x16xi1>, vector<22x16xf32>
      %c0_244 = arith.constant 0 : index
      %c6_245 = arith.constant 6 : index
      %c1_246 = arith.constant 1 : index
      %384 = vector.load %arg2[%c0_244, %c6_245, %c1_246] : memref<1x7x7xf32, #tpu.memory_space<vmem>>, vector<1x1x1xf32>
      %385 = vector.shape_cast %384 : vector<1x1x1xf32> to vector<1x1xf32>
      %c1_i32_247 = arith.constant 1 : i32
      %386 = vector.broadcast %c1_i32_247 : i32 to vector<22x16xi32>
      %387 = arith.cmpi eq, %57, %386 : vector<22x16xi32>
      %388 = vector.shape_cast %385 : vector<1x1xf32> to vector<1x1xf32>
      %389 = vector.broadcast %388 : vector<1x1xf32> to vector<22x16xf32>
      %390 = arith.select %387, %389, %383 : vector<22x16xi1>, vector<22x16xf32>
      %c0_248 = arith.constant 0 : index
      %c6_249 = arith.constant 6 : index
      %c2_250 = arith.constant 2 : index
      %391 = vector.load %arg2[%c0_248, %c6_249, %c2_250] : memref<1x7x7xf32, #tpu.memory_space<vmem>>, vector<1x1x1xf32>
      %392 = vector.shape_cast %391 : vector<1x1x1xf32> to vector<1x1xf32>
      %c2_i32_251 = arith.constant 2 : i32
      %393 = vector.broadcast %c2_i32_251 : i32 to vector<22x16xi32>
      %394 = arith.cmpi eq, %57, %393 : vector<22x16xi32>
      %395 = vector.shape_cast %392 : vector<1x1xf32> to vector<1x1xf32>
      %396 = vector.broadcast %395 : vector<1x1xf32> to vector<22x16xf32>
      %397 = arith.select %394, %396, %390 : vector<22x16xi1>, vector<22x16xf32>
      %c0_252 = arith.constant 0 : index
      %c6_253 = arith.constant 6 : index
      %c3_254 = arith.constant 3 : index
      %398 = vector.load %arg2[%c0_252, %c6_253, %c3_254] : memref<1x7x7xf32, #tpu.memory_space<vmem>>, vector<1x1x1xf32>
      %399 = vector.shape_cast %398 : vector<1x1x1xf32> to vector<1x1xf32>
      %c3_i32_255 = arith.constant 3 : i32
      %400 = vector.broadcast %c3_i32_255 : i32 to vector<22x16xi32>
      %401 = arith.cmpi eq, %57, %400 : vector<22x16xi32>
      %402 = vector.shape_cast %399 : vector<1x1xf32> to vector<1x1xf32>
      %403 = vector.broadcast %402 : vector<1x1xf32> to vector<22x16xf32>
      %404 = arith.select %401, %403, %397 : vector<22x16xi1>, vector<22x16xf32>
      %c0_256 = arith.constant 0 : index
      %c6_257 = arith.constant 6 : index
      %c4_258 = arith.constant 4 : index
      %405 = vector.load %arg2[%c0_256, %c6_257, %c4_258] : memref<1x7x7xf32, #tpu.memory_space<vmem>>, vector<1x1x1xf32>
      %406 = vector.shape_cast %405 : vector<1x1x1xf32> to vector<1x1xf32>
      %c4_i32_259 = arith.constant 4 : i32
      %407 = vector.broadcast %c4_i32_259 : i32 to vector<22x16xi32>
      %408 = arith.cmpi eq, %57, %407 : vector<22x16xi32>
      %409 = vector.shape_cast %406 : vector<1x1xf32> to vector<1x1xf32>
      %410 = vector.broadcast %409 : vector<1x1xf32> to vector<22x16xf32>
      %411 = arith.select %408, %410, %404 : vector<22x16xi1>, vector<22x16xf32>
      %c0_260 = arith.constant 0 : index
      %c6_261 = arith.constant 6 : index
      %c5_262 = arith.constant 5 : index
      %412 = vector.load %arg2[%c0_260, %c6_261, %c5_262] : memref<1x7x7xf32, #tpu.memory_space<vmem>>, vector<1x1x1xf32>
      %413 = vector.shape_cast %412 : vector<1x1x1xf32> to vector<1x1xf32>
      %c5_i32_263 = arith.constant 5 : i32
      %414 = vector.broadcast %c5_i32_263 : i32 to vector<22x16xi32>
      %415 = arith.cmpi eq, %57, %414 : vector<22x16xi32>
      %416 = vector.shape_cast %413 : vector<1x1xf32> to vector<1x1xf32>
      %417 = vector.broadcast %416 : vector<1x1xf32> to vector<22x16xf32>
      %418 = arith.select %415, %417, %411 : vector<22x16xi1>, vector<22x16xf32>
      %c0_264 = arith.constant 0 : index
      %c6_265 = arith.constant 6 : index
      %c6_266 = arith.constant 6 : index
      %419 = vector.load %arg2[%c0_264, %c6_265, %c6_266] : memref<1x7x7xf32, #tpu.memory_space<vmem>>, vector<1x1x1xf32>
      %420 = vector.shape_cast %419 : vector<1x1x1xf32> to vector<1x1xf32>
      %c6_i32_267 = arith.constant 6 : i32
      %421 = vector.broadcast %c6_i32_267 : i32 to vector<22x16xi32>
      %422 = arith.cmpi eq, %57, %421 : vector<22x16xi32>
      %423 = vector.shape_cast %420 : vector<1x1xf32> to vector<1x1xf32>
      %424 = vector.broadcast %423 : vector<1x1xf32> to vector<22x16xf32>
      %425 = arith.select %422, %424, %418 : vector<22x16xi1>, vector<22x16xf32>
      %c6_268 = arith.constant 6 : index
      %c0_269 = arith.constant 0 : index
      %c0_270 = arith.constant 0 : index
      %426 = vector.load %arg5[%c6_268, %c0_269, %c0_270] : memref<7x22x16xf32, #tpu.memory_space<vmem>>, vector<1x22x16xf32>
      %427 = vector.shape_cast %426 : vector<1x22x16xf32> to vector<22x16xf32>
      %428 = vector.shape_cast %425 : vector<22x16xf32> to vector<1x22x16xf32>
      tpu.vector_store %arg5[%c6_268, %c0_269, %c0_270], %428 {strides = array<i32>} : memref<7x22x16xf32, #tpu.memory_space<vmem>>, vector<1x22x16xf32>,
    } else {
    }
    %c0 = arith.constant 0 : index
    %c0_1 = arith.constant 0 : index
    %c0_2 = arith.constant 0 : index
    %c0_3 = arith.constant 0 : index
    %3 = vector.load %arg3[%c0, %c0_1, %c0_2, %c0_3] : memref<1x4x22x22xf32, #tpu.memory_space<vmem>>, vector<1x4x16x22xf32>
    %4 = vector.shape_cast %3 : vector<1x4x16x22xf32> to vector<4x16x22xf32>
    %5 = vector.shape_cast %4 : vector<4x16x22xf32> to vector<64x22xf32>
    %c0_4 = arith.constant 0 : index
    %c0_5 = arith.constant 0 : index
    %c0_6 = arith.constant 0 : index
    %6 = vector.load %arg5[%c0_4, %c0_5, %c0_6] : memref<7x22x16xf32, #tpu.memory_space<vmem>>, vector<1x22x16xf32>
    %7 = vector.shape_cast %6 : vector<1x22x16xf32> to vector<22x16xf32>
    %cst = arith.constant dense<0.000000e+00> : vector<64x16xf32>
    %8 = tpu.matmul %5, %7, %cst {dimension_numbers = #tpu.dot_dimension_numbers<[1], [0], [0], [1], [0, 0, 1, 1], [], []>, precision = #tpu.contract_precision<fp32>} : vector<64x22xf32>, vector<22x16xf32>, vector<64x16xf32> -> vector<64x16xf32>
    %c0_7 = arith.constant 0 : index
    %c0_8 = arith.constant 0 : index
    %c1 = arith.constant 1 : index
    %c0_9 = arith.constant 0 : index
    %9 = vector.load %arg3[%c0_7, %c0_8, %c1, %c0_9] : memref<1x4x22x22xf32, #tpu.memory_space<vmem>>, vector<1x4x16x22xf32>
    %10 = vector.shape_cast %9 : vector<1x4x16x22xf32> to vector<4x16x22xf32>
    %11 = vector.shape_cast %10 : vector<4x16x22xf32> to vector<64x22xf32>
    %c1_10 = arith.constant 1 : index
    %c0_11 = arith.constant 0 : index
    %c0_12 = arith.constant 0 : index
    %12 = vector.load %arg5[%c1_10, %c0_11, %c0_12] : memref<7x22x16xf32, #tpu.memory_space<vmem>>, vector<1x22x16xf32>
    %13 = vector.shape_cast %12 : vector<1x22x16xf32> to vector<22x16xf32>
    %cst_13 = arith.constant dense<0.000000e+00> : vector<64x16xf32>
    %14 = tpu.matmul %11, %13, %cst_13 {dimension_numbers = #tpu.dot_dimension_numbers<[1], [0], [0], [1], [0, 0, 1, 1], [], []>, precision = #tpu.contract_precision<fp32>} : vector<64x22xf32>, vector<22x16xf32>, vector<64x16xf32> -> vector<64x16xf32>
    %15 = arith.addf %8, %14 : vector<64x16xf32>
    %c0_14 = arith.constant 0 : index
    %c0_15 = arith.constant 0 : index
    %c2 = arith.constant 2 : index
    %c0_16 = arith.constant 0 : index
    %16 = vector.load %arg3[%c0_14, %c0_15, %c2, %c0_16] : memref<1x4x22x22xf32, #tpu.memory_space<vmem>>, vector<1x4x16x22xf32>
    %17 = vector.shape_cast %16 : vector<1x4x16x22xf32> to vector<4x16x22xf32>
    %18 = vector.shape_cast %17 : vector<4x16x22xf32> to vector<64x22xf32>
    %c2_17 = arith.constant 2 : index
    %c0_18 = arith.constant 0 : index
    %c0_19 = arith.constant 0 : index
    %19 = vector.load %arg5[%c2_17, %c0_18, %c0_19] : memref<7x22x16xf32, #tpu.memory_space<vmem>>, vector<1x22x16xf32>
    %20 = vector.shape_cast %19 : vector<1x22x16xf32> to vector<22x16xf32>
    %cst_20 = arith.constant dense<0.000000e+00> : vector<64x16xf32>
    %21 = tpu.matmul %18, %20, %cst_20 {dimension_numbers = #tpu.dot_dimension_numbers<[1], [0], [0], [1], [0, 0, 1, 1], [], []>, precision = #tpu.contract_precision<fp32>} : vector<64x22xf32>, vector<22x16xf32>, vector<64x16xf32> -> vector<64x16xf32>
    %22 = arith.addf %15, %21 : vector<64x16xf32>
    %c0_21 = arith.constant 0 : index
    %c0_22 = arith.constant 0 : index
    %c3 = arith.constant 3 : index
    %c0_23 = arith.constant 0 : index
    %23 = vector.load %arg3[%c0_21, %c0_22, %c3, %c0_23] : memref<1x4x22x22xf32, #tpu.memory_space<vmem>>, vector<1x4x16x22xf32>
    %24 = vector.shape_cast %23 : vector<1x4x16x22xf32> to vector<4x16x22xf32>
    %25 = vector.shape_cast %24 : vector<4x16x22xf32> to vector<64x22xf32>
    %c3_24 = arith.constant 3 : index
    %c0_25 = arith.constant 0 : index
    %c0_26 = arith.constant 0 : index
    %26 = vector.load %arg5[%c3_24, %c0_25, %c0_26] : memref<7x22x16xf32, #tpu.memory_space<vmem>>, vector<1x22x16xf32>
    %27 = vector.shape_cast %26 : vector<1x22x16xf32> to vector<22x16xf32>
    %cst_27 = arith.constant dense<0.000000e+00> : vector<64x16xf32>
    %28 = tpu.matmul %25, %27, %cst_27 {dimension_numbers = #tpu.dot_dimension_numbers<[1], [0], [0], [1], [0, 0, 1, 1], [], []>, precision = #tpu.contract_precision<fp32>} : vector<64x22xf32>, vector<22x16xf32>, vector<64x16xf32> -> vector<64x16xf32>
    %29 = arith.addf %22, %28 : vector<64x16xf32>
    %c0_28 = arith.constant 0 : index
    %c0_29 = arith.constant 0 : index
    %c4 = arith.constant 4 : index
    %c0_30 = arith.constant 0 : index
    %30 = vector.load %arg3[%c0_28, %c0_29, %c4, %c0_30] : memref<1x4x22x22xf32, #tpu.memory_space<vmem>>, vector<1x4x16x22xf32>
    %31 = vector.shape_cast %30 : vector<1x4x16x22xf32> to vector<4x16x22xf32>
    %32 = vector.shape_cast %31 : vector<4x16x22xf32> to vector<64x22xf32>
    %c4_31 = arith.constant 4 : index
    %c0_32 = arith.constant 0 : index
    %c0_33 = arith.constant 0 : index
    %33 = vector.load %arg5[%c4_31, %c0_32, %c0_33] : memref<7x22x16xf32, #tpu.memory_space<vmem>>, vector<1x22x16xf32>
    %34 = vector.shape_cast %33 : vector<1x22x16xf32> to vector<22x16xf32>
    %cst_34 = arith.constant dense<0.000000e+00> : vector<64x16xf32>
    %35 = tpu.matmul %32, %34, %cst_34 {dimension_numbers = #tpu.dot_dimension_numbers<[1], [0], [0], [1], [0, 0, 1, 1], [], []>, precision = #tpu.contract_precision<fp32>} : vector<64x22xf32>, vector<22x16xf32>, vector<64x16xf32> -> vector<64x16xf32>
    %36 = arith.addf %29, %35 : vector<64x16xf32>
    %c0_35 = arith.constant 0 : index
    %c0_36 = arith.constant 0 : index
    %c5 = arith.constant 5 : index
    %c0_37 = arith.constant 0 : index
    %37 = vector.load %arg3[%c0_35, %c0_36, %c5, %c0_37] : memref<1x4x22x22xf32, #tpu.memory_space<vmem>>, vector<1x4x16x22xf32>
    %38 = vector.shape_cast %37 : vector<1x4x16x22xf32> to vector<4x16x22xf32>
    %39 = vector.shape_cast %38 : vector<4x16x22xf32> to vector<64x22xf32>
    %c5_38 = arith.constant 5 : index
    %c0_39 = arith.constant 0 : index
    %c0_40 = arith.constant 0 : index
    %40 = vector.load %arg5[%c5_38, %c0_39, %c0_40] : memref<7x22x16xf32, #tpu.memory_space<vmem>>, vector<1x22x16xf32>
    %41 = vector.shape_cast %40 : vector<1x22x16xf32> to vector<22x16xf32>
    %cst_41 = arith.constant dense<0.000000e+00> : vector<64x16xf32>
    %42 = tpu.matmul %39, %41, %cst_41 {dimension_numbers = #tpu.dot_dimension_numbers<[1], [0], [0], [1], [0, 0, 1, 1], [], []>, precision = #tpu.contract_precision<fp32>} : vector<64x22xf32>, vector<22x16xf32>, vector<64x16xf32> -> vector<64x16xf32>
    %43 = arith.addf %36, %42 : vector<64x16xf32>
    %c0_42 = arith.constant 0 : index
    %c0_43 = arith.constant 0 : index
    %c6 = arith.constant 6 : index
    %c0_44 = arith.constant 0 : index
    %44 = vector.load %arg3[%c0_42, %c0_43, %c6, %c0_44] : memref<1x4x22x22xf32, #tpu.memory_space<vmem>>, vector<1x4x16x22xf32>
    %45 = vector.shape_cast %44 : vector<1x4x16x22xf32> to vector<4x16x22xf32>
    %46 = vector.shape_cast %45 : vector<4x16x22xf32> to vector<64x22xf32>
    %c6_45 = arith.constant 6 : index
    %c0_46 = arith.constant 0 : index
    %c0_47 = arith.constant 0 : index
    %47 = vector.load %arg5[%c6_45, %c0_46, %c0_47] : memref<7x22x16xf32, #tpu.memory_space<vmem>>, vector<1x22x16xf32>
    %48 = vector.shape_cast %47 : vector<1x22x16xf32> to vector<22x16xf32>
    %cst_48 = arith.constant dense<0.000000e+00> : vector<64x16xf32>
    %49 = tpu.matmul %46, %48, %cst_48 {dimension_numbers = #tpu.dot_dimension_numbers<[1], [0], [0], [1], [0, 0, 1, 1], [], []>, precision = #tpu.contract_precision<fp32>} : vector<64x22xf32>, vector<22x16xf32>, vector<64x16xf32> -> vector<64x16xf32>
    %50 = arith.addf %43, %49 : vector<64x16xf32>
    %51 = vector.shape_cast %50 : vector<64x16xf32> to vector<4x16x16xf32>
    %c0_49 = arith.constant 0 : index
    %c0_50 = arith.constant 0 : index
    %c0_51 = arith.constant 0 : index
    %c0_52 = arith.constant 0 : index
    %52 = vector.load %arg4[%c0_49, %c0_50, %c0_51, %c0_52] : memref<1x4x16x16xf32, #tpu.memory_space<vmem>>, vector<1x4x16x16xf32>
    %53 = vector.shape_cast %52 : vector<1x4x16x16xf32> to vector<4x16x16xf32>
    %54 = vector.shape_cast %51 : vector<4x16x16xf32> to vector<1x4x16x16xf32>
    tpu.vector_store %arg4[%c0_49, %c0_50, %c0_51, %c0_52], %54 {strides = array<i32>} : memref<1x4x16x16xf32, #tpu.memory_space<vmem>>, vector<1x4x16x16xf32>,
    return
  }
  func.func @transform_0(%arg0: i32, %arg1: i32) -> (i32, i32, i32) {
    %c0_i32 = arith.constant 0 : i32
    %c0_i32_0 = arith.constant 0 : i32
    %c0_i32_1 = arith.constant 0 : i32
    return %arg0, %c0_i32, %c0_i32_0 : i32, i32, i32
  }
  func.func @transform_1(%arg0: i32, %arg1: i32) -> (i32, i32, i32, i32) {
    %c0_i32 = arith.constant 0 : i32
    %c0_i32_0 = arith.constant 0 : i32
    %c0_i32_1 = arith.constant 0 : i32
    return %arg0, %arg1, %c0_i32, %c0_i32_0 : i32, i32, i32, i32
  }
  func.func @transform_2(%arg0: i32, %arg1: i32) -> (i32, i32, i32, i32) {
    %c0_i32 = arith.constant 0 : i32
    %c0_i32_0 = arith.constant 0 : i32
    %c0_i32_1 = arith.constant 0 : i32
    return %arg0, %arg1, %c0_i32, %c0_i32_0 : i32, i32, i32, i32
  }
}

</mosaic_0001>

<llo_original>
// kernel: tpu_custom_call.1
$region0: #{tpu_custom_call.1}
  #allocation0 [shape = 'u32[]', space=smem, size = 0x4, offset = 0x4, fixed_abs, tag = 'smem constant byte address 0x4 - core index']
  #allocation1 [shape = 'u32[72,128]{1,0:T(1,128)}', space=vmem, size = 0x9000, scoped, tag = 'internal scratch']
  #allocation2 [shape = 'f32[7,22,16]{2,1,0:T(8,128)}', space=vmem, size = 0x15000, scoped, tag = 'scratch operand']
  %s0 = inlined_call_operand.vmem [shape: f32[2,7,7], index: 0, kind: input, shape index: {}]
  %s1 = inlined_call_operand.vmem [shape: f32[2,4,22,22], index: 1, kind: input, shape index: {}]
  %s2 = inlined_call_operand.hbm [shape: f32[2,4,16,16], index: 2, kind: output, shape index: {}]
  %s3 = sld [smem:[#allocation0]]
  $region45: #{tpu_custom_call.1} parent=0
    _
  %s5 = ssub.s32 1, %s3
  %s6 = scalar_select 0, %s5, %s3
  $region1: #{tpu_custom_call.1} parent=0
    #allocation3 [shape = 'u8[65536]{0}', space=vmem, size = 0x10000, scoped, tag = 'output window, operand 0']
    #allocation4 [shape = 's32[2]{0}', space=sflag, size = 0x8, scoped, tag = 'scoped memory for tpu_custom_call.1']
    %7 = vsyncpa [#allocation4], 0
    %s8 = scalar_lea.sflag [#allocation4], 1
    %9 = vsyncpa %s8, 0
    loop: start=0, step=1, limit=4
    $region2: #{tpu_custom_call.1} parent=1 // loop_pre_header
      _
    $region3: #{tpu_custom_call.1} parent=1 // loop_header
      %s11 = sphi 0, %s15
      %p12 = scmp.ge.s32.totalorder %s11, 4
      %s18 = sphi 0, %s30
      %s19 = sphi 0, %s26
      %s20 = sphi 0, %s18
      %s21 = sphi 0, %s19
      %s22 = sphi 0, %s20
      %s23 = sphi 0, %s21
      %s33 = sphi 0, %s35
      %s36 = sphi 0, %s33
      %s37 = sphi 0, %s36
      %s53 = sphi 0, %s37
      %s61 = sphi 0, %s63
      %s64 = sphi 0, %s61
      %s65 = sphi 0, %s64
      %s81 = sphi 0, %s65
      %s89 = sphi 0, %s91
      %s92 = sphi 0, %s89
      %s93 = sphi 0, %s92
      %s109 = sphi 0, %s93
    $region4: #{tpu_custom_call.1} parent=1 // loop_header_branch
      %14 = sbr.rel (%p12) target = $region8
    $region5: #{tpu_custom_call.1} parent=1 // loop_body
      %s16 = ssub.s32 %s11, 1
      %s17 = ssub.s32 %s11, 2
      %s24 = sadd.s32 1, %s19
      %p25 = scmp.ge.s32.totalorder %s24, 1
      %s26 = scalar_select %p25, 0, %s24
      %s27 = sadd.s32 1, %s18
      %s28 = scalar_select %p25, %s27, %s18
      %p29 = scmp.ge.s32.totalorder %s28, 2
      %s30 = scalar_select %p29, 0, %s28
      %s31 = ssub.s32 %s18, %s30
      %p32 = scmp.eq.s32.totalorder %s31, 0
      %s34 = sadd.s32 %s33, 1
      %s35 = scalar_select %p32, %s33, %s34
      %p38 = pneg %p32
      %p39 = scmp.eq.s32.totalorder %s11, 1
      %p40 = por %p38, %p39
      %p41 = scmp.ne.s32.totalorder %s33, %s36
      %p42 = scmp.eq.s32.totalorder %s11, 0
      %p43 = por %p41, %p42
      %p44 = scmp.ne.s32.totalorder %s33, %s36
      %p45 = scmp.eq.s32.totalorder %s16, 1
      %p46 = por %p44, %p45
      %p47 = scmp.ne.s32.totalorder %s36, %s37
      %p48 = scmp.eq.s32.totalorder %s16, 0
      %p49 = por %p47, %p48
      %p50 = scmp.ne.s32.totalorder %s36, %s37
      %p51 = scmp.eq.s32.totalorder %s17, 1
      %p52 = por %p50, %p51
      %p54 = scmp.ne.s32.totalorder %s37, %s53
      %p55 = scmp.eq.s32.totalorder %s17, 0
      %p56 = por %p54, %p55
      %s57 = ssub.s32 %s18, %s30
      %s58 = ssub.s32 %s19, %s26
      %s59 = sor.u32 %s57, %s58
      %p60 = scmp.eq.s32.totalorder %s59, 0
      %s62 = sadd.s32 %s61, 1
      %s63 = scalar_select %p60, %s61, %s62
      %p66 = pneg %p60
      %p67 = scmp.eq.s32.totalorder %s11, 1
      %p68 = por %p66, %p67
      %p69 = scmp.ne.s32.totalorder %s61, %s64
      %p70 = scmp.eq.s32.totalorder %s11, 0
      %p71 = por %p69, %p70
      %p72 = scmp.ne.s32.totalorder %s61, %s64
      %p73 = scmp.eq.s32.totalorder %s16, 1
      %p74 = por %p72, %p73
      %p75 = scmp.ne.s32.totalorder %s64, %s65
      %p76 = scmp.eq.s32.totalorder %s16, 0
      %p77 = por %p75, %p76
      %p78 = scmp.ne.s32.totalorder %s64, %s65
      %p79 = scmp.eq.s32.totalorder %s17, 1
      %p80 = por %p78, %p79
      %p82 = scmp.ne.s32.totalorder %s65, %s81
      %p83 = scmp.eq.s32.totalorder %s17, 0
      %p84 = por %p82, %p83
      %s85 = ssub.s32 %s18, %s30
      %s86 = ssub.s32 %s19, %s26
      %s87 = sor.u32 %s85, %s86
      %p88 = scmp.eq.s32.totalorder %s87, 0
      %s90 = sadd.s32 %s89, 1
      %s91 = scalar_select %p88, %s89, %s90
      %p94 = pneg %p88
      %p95 = scmp.eq.s32.totalorder %s11, 1
      %p96 = por %p94, %p95
      %p97 = scmp.ne.s32.totalorder %s89, %s92
      %p98 = scmp.eq.s32.totalorder %s11, 0
      %p99 = por %p97, %p98
      %p100 = scmp.ne.s32.totalorder %s89, %s92
      %p101 = scmp.eq.s32.totalorder %s16, 1
      %p102 = por %p100, %p101
      %p103 = scmp.ne.s32.totalorder %s92, %s93
      %p104 = scmp.eq.s32.totalorder %s16, 0
      %p105 = por %p103, %p104
      %p106 = scmp.ne.s32.totalorder %s92, %s93
      %p107 = scmp.eq.s32.totalorder %s17, 1
      %p108 = por %p106, %p107
      %p110 = scmp.ne.s32.totalorder %s93, %s109
      %p111 = scmp.eq.s32.totalorder %s17, 0
      %p112 = por %p110, %p111
      %p113 = scmp.le.s32.totalorder 1, %s11
      %p114 = scmp.lt.s32.totalorder %s11, 3
      %p115 = pnand %p113, %p114
      %p116 = pneg %p115
      // Predicated region
      $region9: #{tpu_custom_call.1} parent=5 // pred_check
        _
      $region10: #{tpu_custom_call.1} parent=5 // pred_check_branch
        %118 = sbr.rel (%p115) target = $region12
      $region11: #{tpu_custom_call.1} parent=5 // pred_region
        %s119 = ssub.s32 %s11, 1
      $region12: #{tpu_custom_call.1} parent=5 // pred_fallthru
        _
      %p120 = scmp.lt.s32.totalorder %s11, 2
      // Predicated region
      $region13: #{tpu_custom_call.1} parent=5 // pred_check
        %p121 = pneg %p120
      $region14: #{tpu_custom_call.1} parent=5 // pred_check_branch
        %123 = sbr.rel (%p121) target = $region16
      $region15: #{tpu_custom_call.1} parent=5 // pred_region
        // Predicated region
        $region17: #{tpu_custom_call.1} parent=15 // pred_check
          %p124 = pneg %p43
        $region18: #{tpu_custom_call.1} parent=15 // pred_check_branch
          %126 = sbr.rel (%p124) target = $region20
        $region19: #{tpu_custom_call.1} parent=15 // pred_region
          %p127 = scmp.lt.s32.totalorder %s18, 1
          %s128 = scalar_select %p127, %s18, 1
          %s129 = smul.addr %s128, 8
          %s130 = scalar_lea.vmem %s0, %s129
        $region20: #{tpu_custom_call.1} parent=15 // pred_fallthru
          _
        // Predicated region
        $region21: #{tpu_custom_call.1} parent=15 // pred_check
          %p131 = pneg %p71
        $region22: #{tpu_custom_call.1} parent=15 // pred_check_branch
          %133 = sbr.rel (%p131) target = $region24
        $region23: #{tpu_custom_call.1} parent=15 // pred_region
          %s134 = smul.u32 4, %s19
          %p135 = scmp.lt.s32.totalorder %s18, 1
          %s136 = scalar_select %p135, %s18, 1
          %p137 = scmp.lt.s32.totalorder %s134, 3
          %s138 = scalar_select %p137, %s134, 3
          %s139 = smul.addr %s138, 3
          %s140 = smul.addr %s136, 12
          %s141 = sadd.s32 %s139, %s140
          %s142 = smul.addr %s141, 8
          %s143 = scalar_lea.vmem %s1, %s142
          %s144 = smul.u32 4, %s19
        $region24: #{tpu_custom_call.1} parent=15 // pred_fallthru
          _
      $region16: #{tpu_custom_call.1} parent=5 // pred_fallthru
        _
      %p145 = scmp.le.s32.totalorder 1, %s11
      %p146 = scmp.lt.s32.totalorder %s11, 3
      %p147 = pnand %p145, %p146
      %p148 = pneg %p147
      // Predicated region
      $region25: #{tpu_custom_call.1} parent=5 // pred_check
        _
      $region26: #{tpu_custom_call.1} parent=5 // pred_check_branch
        %150 = sbr.rel (%p147) target = $region28
      $region27: #{tpu_custom_call.1} parent=5 // pred_region
        %s151 = ssub.s32 %s11, 1
        %p152 = scmp.lt.s32.totalorder %s20, 1
        %s153 = scalar_select %p152, %s20, 1
        %s154 = smul.addr %s153, 8
        %s155 = scalar_lea.vmem %s0, %s154
        %p156 = pneg %p49
        %p157 = pneg %p46
        %s158 = smul.u32 4, %s21
        %p159 = scmp.lt.s32.totalorder %s20, 1
        %s160 = scalar_select %p159, %s20, 1
        %p161 = scmp.lt.s32.totalorder %s158, 3
        %s162 = scalar_select %p161, %s158, 3
        %s163 = smul.addr %s162, 3
        %s164 = smul.addr %s160, 12
        %s165 = sadd.s32 %s163, %s164
        %s166 = smul.addr %s165, 8
        %s167 = scalar_lea.vmem %s1, %s166
        %p168 = pneg %p77
        %p169 = pneg %p74
        %p170 = pneg %p105
        %p171 = pneg %p102
        %s172 = sand.u32 %s92, 1
        %s173 = scalar_lea.sflag [#allocation4], %s172
        %s174 = sand.u32 %s92, 1
        %s175 = smul.addr %s174, 64
        %s176 = scalar_lea.vmem [#allocation3], %s175
        %p177 = scmp.lt.s32.totalorder %s20, 1
        %s178 = scalar_select %p177, %s20, 1
        %s179 = smul.addr %s178, 8
        %s180 = scalar_lea.vmem %s0, %s179
        %s181 = smul.u32 4, %s21
        %p182 = scmp.lt.s32.totalorder %s20, 1
        %s183 = scalar_select %p182, %s20, 1
        %p184 = scmp.lt.s32.totalorder %s181, 3
        %s185 = scalar_select %p184, %s181, 3
        %s186 = smul.addr %s185, 3
        %s187 = smul.addr %s183, 12
        %s188 = sadd.s32 %s186, %s187
        %s189 = smul.addr %s188, 8
        %s190 = scalar_lea.vmem %s1, %s189
        %s191 = smul.u32 4, %s21
        %s192 = smul.u32 4, %s21
        %p193 = scmp.eq.s32.totalorder %s21, 0
        // Predicated region
        $region29: #{tpu_custom_call.1} parent=27 // pred_check
          %p194 = pneg %p193
        $region30: #{tpu_custom_call.1} parent=27 // pred_check_branch
          %196 = sbr.rel (%p194) target = $region32
        $region31: #{tpu_custom_call.1} parent=27 // pred_region
          %v197 = vlaneseq
          %v198 = vshrl.u32 %v197, 7
          %v199 = vadd.s32 %v198, 8
          %v200 = vadd.s32 %v198, 16
          %v201 = vlaneseq
          %v202 = vand.u32 %v201, 127
          %v203 = vsub.s32 %v198, %v202
          %v204 = vsub.s32 %v199, %v202
          %v205 = vsub.s32 %v200, %v202
          %v206 = vld [vmem:[%s180] sm:$0x1]
          %vm207 = vcmp.eq.s32.totalorder %v203, 0
          %vm208 = vcmp.eq.s32.totalorder %v204, 0
          %vm209 = vcmp.eq.s32.totalorder %v205, 0
          %s211 = vtos %v206
          %v212 = vstv %s211
          %v214 = vsel %vm207, %v212, 0.0
          %v215 = vsel %vm208, %v212, 0.0
          %v216 = vsel %vm209, %v212, 0.0
          %vm217 = vcmp.eq.s32.totalorder %v203, 1
          %vm218 = vcmp.eq.s32.totalorder %v204, 1
          %vm219 = vcmp.eq.s32.totalorder %v205, 1
          %220 = vrot.lane.b32.xlu0 %v206, 127
          %v221 = vpop.permute.xlu0 %220
          %s222 = vtos %v221
          %v223 = vstv %s222
          %v225 = vsel %vm217, %v223, %v214
          %v226 = vsel %vm218, %v223, %v215
          %v227 = vsel %vm219, %v223, %v216
          %vm228 = vcmp.eq.s32.totalorder %v203, 2
          %vm229 = vcmp.eq.s32.totalorder %v204, 2
          %vm230 = vcmp.eq.s32.totalorder %v205, 2
          %231 = vrot.lane.b32.xlu0 %v206, 126
          %v232 = vpop.permute.xlu0 %231
          %s233 = vtos %v232
          %v234 = vstv %s233
          %v236 = vsel %vm228, %v234, %v225
          %v237 = vsel %vm229, %v234, %v226
          %v238 = vsel %vm230, %v234, %v227
          %vm239 = vcmp.eq.s32.totalorder %v203, 3
          %vm240 = vcmp.eq.s32.totalorder %v204, 3
          %vm241 = vcmp.eq.s32.totalorder %v205, 3
          %242 = vrot.lane.b32.xlu0 %v206, 125
          %v243 = vpop.permute.xlu0 %242
          %s244 = vtos %v243
          %v245 = vstv %s244
          %v247 = vsel %vm239, %v245, %v236
          %v248 = vsel %vm240, %v245, %v237
          %v249 = vsel %vm241, %v245, %v238
          %vm250 = vcmp.eq.s32.totalorder %v203, 4
          %vm251 = vcmp.eq.s32.totalorder %v204, 4
          %vm252 = vcmp.eq.s32.totalorder %v205, 4
          %253 = vrot.lane.b32.xlu0 %v206, 124
          %v254 = vpop.permute.xlu0 %253
          %s255 = vtos %v254
          %v256 = vstv %s255
          %v258 = vsel %vm250, %v256, %v247
          %v259 = vsel %vm251, %v256, %v248
          %v260 = vsel %vm252, %v256, %v249
          %vm261 = vcmp.eq.s32.totalorder %v203, 5
          %vm262 = vcmp.eq.s32.totalorder %v204, 5
          %vm263 = vcmp.eq.s32.totalorder %v205, 5
          %264 = vrot.lane.b32.xlu0 %v206, 123
          %v265 = vpop.permute.xlu0 %264
          %s266 = vtos %v265
          %v267 = vstv %s266
          %v269 = vsel %vm261, %v267, %v258
          %v270 = vsel %vm262, %v267, %v259
          %v271 = vsel %vm263, %v267, %v260
          %vm272 = vcmp.eq.s32.totalorder %v203, 6
          %vm273 = vcmp.eq.s32.totalorder %v204, 6
          %vm274 = vcmp.eq.s32.totalorder %v205, 6
          %275 = vrot.lane.b32.xlu0 %v206, 122
          %v276 = vpop.permute.xlu0 %275
          %s277 = vtos %v276
          %v278 = vstv %s277
          %v280 = vsel %vm272, %v278, %v269
          %v281 = vsel %vm273, %v278, %v270
          %v282 = vsel %vm274, %v278, %v271
          %vm283 = vcmask 130048
          %284 = vst.msk [vmem:[#allocation2] sm:$0xff] %vm283, %v280
          %285 = vst.msk [vmem:[#allocation2 + $0x8] sm:$0xff] %vm283, %v281
          %vm286 = vcmask 128000
          %287 = vst.msk [vmem:[#allocation2 + $0x10] sm:$0x3f] %vm286, %v282
          %v288 = vld [vmem:[%s180 + $0x1] sm:$0x1]
          %s290 = vtos %v288
          %v291 = vstv %s290
          %v293 = vsel %vm207, %v291, 0.0
          %v294 = vsel %vm208, %v291, 0.0
          %v295 = vsel %vm209, %v291, 0.0
          %296 = vrot.lane.b32.xlu0 %v288, 127
          %v297 = vpop.permute.xlu0 %296
          %s298 = vtos %v297
          %v299 = vstv %s298
          %v301 = vsel %vm217, %v299, %v293
          %v302 = vsel %vm218, %v299, %v294
          %v303 = vsel %vm219, %v299, %v295
          %304 = vrot.lane.b32.xlu0 %v288, 126
          %v305 = vpop.permute.xlu0 %304
          %s306 = vtos %v305
          %v307 = vstv %s306
          %v309 = vsel %vm228, %v307, %v301
          %v310 = vsel %vm229, %v307, %v302
          %v311 = vsel %vm230, %v307, %v303
          %312 = vrot.lane.b32.xlu0 %v288, 125
          %v313 = vpop.permute.xlu0 %312
          %s314 = vtos %v313
          %v315 = vstv %s314
          %v317 = vsel %vm239, %v315, %v309
          %v318 = vsel %vm240, %v315, %v310
          %v319 = vsel %vm241, %v315, %v311
          %320 = vrot.lane.b32.xlu0 %v288, 124
          %v321 = vpop.permute.xlu0 %320
          %s322 = vtos %v321
          %v323 = vstv %s322
          %v325 = vsel %vm250, %v323, %v317
          %v326 = vsel %vm251, %v323, %v318
          %v327 = vsel %vm252, %v323, %v319
          %328 = vrot.lane.b32.xlu0 %v288, 123
          %v329 = vpop.permute.xlu0 %328
          %s330 = vtos %v329
          %v331 = vstv %s330
          %v333 = vsel %vm261, %v331, %v325
          %v334 = vsel %vm262, %v331, %v326
          %v335 = vsel %vm263, %v331, %v327
          %336 = vrot.lane.b32.xlu0 %v288, 122
          %v337 = vpop.permute.xlu0 %336
          %s338 = vtos %v337
          %v339 = vstv %s338
          %v341 = vsel %vm272, %v339, %v333
          %v342 = vsel %vm273, %v339, %v334
          %v343 = vsel %vm274, %v339, %v335
          %s344 = scalar_lea.vmem [#allocation2], 24
          %345 = vst.msk [vmem:[%s344] sm:$0xff] %vm283, %v341
          %346 = vst.msk [vmem:[%s344 + $0x8] sm:$0xff] %vm283, %v342
          %347 = vst.msk [vmem:[%s344 + $0x10] sm:$0x3f] %vm286, %v343
          %v348 = vld [vmem:[%s180 + $0x2] sm:$0x1]
          %s350 = vtos %v348
          %v351 = vstv %s350
          %v353 = vsel %vm207, %v351, 0.0
          %v354 = vsel %vm208, %v351, 0.0
          %v355 = vsel %vm209, %v351, 0.0
          %356 = vrot.lane.b32.xlu0 %v348, 127
          %v357 = vpop.permute.xlu0 %356
          %s358 = vtos %v357
          %v359 = vstv %s358
          %v361 = vsel %vm217, %v359, %v353
          %v362 = vsel %vm218, %v359, %v354
          %v363 = vsel %vm219, %v359, %v355
          %364 = vrot.lane.b32.xlu0 %v348, 126
          %v365 = vpop.permute.xlu0 %364
          %s366 = vtos %v365
          %v367 = vstv %s366
          %v369 = vsel %vm228, %v367, %v361
          %v370 = vsel %vm229, %v367, %v362
          %v371 = vsel %vm230, %v367, %v363
          %372 = vrot.lane.b32.xlu0 %v348, 125
          %v373 = vpop.permute.xlu0 %372
          %s374 = vtos %v373
          %v375 = vstv %s374
          %v377 = vsel %vm239, %v375, %v369
          %v378 = vsel %vm240, %v375, %v370
          %v379 = vsel %vm241, %v375, %v371
          %380 = vrot.lane.b32.xlu0 %v348, 124
          %v381 = vpop.permute.xlu0 %380
          %s382 = vtos %v381
          %v383 = vstv %s382
          %v385 = vsel %vm250, %v383, %v377
          %v386 = vsel %vm251, %v383, %v378
          %v387 = vsel %vm252, %v383, %v379
          %388 = vrot.lane.b32.xlu0 %v348, 123
          %v389 = vpop.permute.xlu0 %388
          %s390 = vtos %v389
          %v391 = vstv %s390
          %v393 = vsel %vm261, %v391, %v385
          %v394 = vsel %vm262, %v391, %v386
          %v395 = vsel %vm263, %v391, %v387
          %396 = vrot.lane.b32.xlu0 %v348, 122
          %v397 = vpop.permute.xlu0 %396
          %s398 = vtos %v397
          %v399 = vstv %s398
          %v401 = vsel %vm272, %v399, %v393
          %v402 = vsel %vm273, %v399, %v394
          %v403 = vsel %vm274, %v399, %v395
          %s404 = scalar_lea.vmem [#allocation2], 48
          %405 = vst.msk [vmem:[%s404] sm:$0xff] %vm283, %v401
          %406 = vst.msk [vmem:[%s404 + $0x8] sm:$0xff] %vm283, %v402
          %407 = vst.msk [vmem:[%s404 + $0x10] sm:$0x3f] %vm286, %v403
          %v408 = vld [vmem:[%s180 + $0x3] sm:$0x1]
          %s410 = vtos %v408
          %v411 = vstv %s410
          %v413 = vsel %vm207, %v411, 0.0
          %v414 = vsel %vm208, %v411, 0.0
          %v415 = vsel %vm209, %v411, 0.0
          %416 = vrot.lane.b32.xlu0 %v408, 127
          %v417 = vpop.permute.xlu0 %416
          %s418 = vtos %v417
          %v419 = vstv %s418
          %v421 = vsel %vm217, %v419, %v413
          %v422 = vsel %vm218, %v419, %v414
          %v423 = vsel %vm219, %v419, %v415
          %424 = vrot.lane.b32.xlu0 %v408, 126
          %v425 = vpop.permute.xlu0 %424
          %s426 = vtos %v425
          %v427 = vstv %s426
          %v429 = vsel %vm228, %v427, %v421
          %v430 = vsel %vm229, %v427, %v422
          %v431 = vsel %vm230, %v427, %v423
          %432 = vrot.lane.b32.xlu0 %v408, 125
          %v433 = vpop.permute.xlu0 %432
          %s434 = vtos %v433
          %v435 = vstv %s434
          %v437 = vsel %vm239, %v435, %v429
          %v438 = vsel %vm240, %v435, %v430
          %v439 = vsel %vm241, %v435, %v431
          %440 = vrot.lane.b32.xlu0 %v408, 124
          %v441 = vpop.permute.xlu0 %440
          %s442 = vtos %v441
          %v443 = vstv %s442
          %v445 = vsel %vm250, %v443, %v437
          %v446 = vsel %vm251, %v443, %v438
          %v447 = vsel %vm252, %v443, %v439
          %448 = vrot.lane.b32.xlu0 %v408, 123
          %v449 = vpop.permute.xlu0 %448
          %s450 = vtos %v449
          %v451 = vstv %s450
          %v453 = vsel %vm261, %v451, %v445
          %v454 = vsel %vm262, %v451, %v446
          %v455 = vsel %vm263, %v451, %v447
          %456 = vrot.lane.b32.xlu0 %v408, 122
          %v457 = vpop.permute.xlu0 %456
          %s458 = vtos %v457
          %v459 = vstv %s458
          %v461 = vsel %vm272, %v459, %v453
          %v462 = vsel %vm273, %v459, %v454
          %v463 = vsel %vm274, %v459, %v455
          %s464 = scalar_lea.vmem [#allocation2], 72
          %465 = vst.msk [vmem:[%s464] sm:$0xff] %vm283, %v461
          %466 = vst.msk [vmem:[%s464 + $0x8] sm:$0xff] %vm283, %v462
          %467 = vst.msk [vmem:[%s464 + $0x10] sm:$0x3f] %vm286, %v463
          %v468 = vld [vmem:[%s180 + $0x4] sm:$0x1]
          %s470 = vtos %v468
          %v471 = vstv %s470
          %v473 = vsel %vm207, %v471, 0.0
          %v474 = vsel %vm208, %v471, 0.0
          %v475 = vsel %vm209, %v471, 0.0
          %476 = vrot.lane.b32.xlu0 %v468, 127
          %v477 = vpop.permute.xlu0 %476
          %s478 = vtos %v477
          %v479 = vstv %s478
          %v481 = vsel %vm217, %v479, %v473
          %v482 = vsel %vm218, %v479, %v474
          %v483 = vsel %vm219, %v479, %v475
          %484 = vrot.lane.b32.xlu0 %v468, 126
          %v485 = vpop.permute.xlu0 %484
          %s486 = vtos %v485
          %v487 = vstv %s486
          %v489 = vsel %vm228, %v487, %v481
          %v490 = vsel %vm229, %v487, %v482
          %v491 = vsel %vm230, %v487, %v483
          %492 = vrot.lane.b32.xlu0 %v468, 125
          %v493 = vpop.permute.xlu0 %492
          %s494 = vtos %v493
          %v495 = vstv %s494
          %v497 = vsel %vm239, %v495, %v489
          %v498 = vsel %vm240, %v495, %v490
          %v499 = vsel %vm241, %v495, %v491
          %500 = vrot.lane.b32.xlu0 %v468, 124
          %v501 = vpop.permute.xlu0 %500
          %s502 = vtos %v501
          %v503 = vstv %s502
          %v505 = vsel %vm250, %v503, %v497
          %v506 = vsel %vm251, %v503, %v498
          %v507 = vsel %vm252, %v503, %v499
          %508 = vrot.lane.b32.xlu0 %v468, 123
          %v509 = vpop.permute.xlu0 %508
          %s510 = vtos %v509
          %v511 = vstv %s510
          %v513 = vsel %vm261, %v511, %v505
          %v514 = vsel %vm262, %v511, %v506
          %v515 = vsel %vm263, %v511, %v507
          %516 = vrot.lane.b32.xlu0 %v468, 122
          %v517 = vpop.permute.xlu0 %516
          %s518 = vtos %v517
          %v519 = vstv %s518
          %v521 = vsel %vm272, %v519, %v513
          %v522 = vsel %vm273, %v519, %v514
          %v523 = vsel %vm274, %v519, %v515
          %s524 = scalar_lea.vmem [#allocation2], 96
          %525 = vst.msk [vmem:[%s524] sm:$0xff] %vm283, %v521
          %526 = vst.msk [vmem:[%s524 + $0x8] sm:$0xff] %vm283, %v522
          %527 = vst.msk [vmem:[%s524 + $0x10] sm:$0x3f] %vm286, %v523
          %v528 = vld [vmem:[%s180 + $0x5] sm:$0x1]
          %s530 = vtos %v528
          %v531 = vstv %s530
          %v533 = vsel %vm207, %v531, 0.0
          %v534 = vsel %vm208, %v531, 0.0
          %v535 = vsel %vm209, %v531, 0.0
          %536 = vrot.lane.b32.xlu0 %v528, 127
          %v537 = vpop.permute.xlu0 %536
          %s538 = vtos %v537
          %v539 = vstv %s538
          %v541 = vsel %vm217, %v539, %v533
          %v542 = vsel %vm218, %v539, %v534
          %v543 = vsel %vm219, %v539, %v535
          %544 = vrot.lane.b32.xlu0 %v528, 126
          %v545 = vpop.permute.xlu0 %544
          %s546 = vtos %v545
          %v547 = vstv %s546
          %v549 = vsel %vm228, %v547, %v541
          %v550 = vsel %vm229, %v547, %v542
          %v551 = vsel %vm230, %v547, %v543
          %552 = vrot.lane.b32.xlu0 %v528, 125
          %v553 = vpop.permute.xlu0 %552
          %s554 = vtos %v553
          %v555 = vstv %s554
          %v557 = vsel %vm239, %v555, %v549
          %v558 = vsel %vm240, %v555, %v550
          %v559 = vsel %vm241, %v555, %v551
          %560 = vrot.lane.b32.xlu0 %v528, 124
          %v561 = vpop.permute.xlu0 %560
          %s562 = vtos %v561
          %v563 = vstv %s562
          %v565 = vsel %vm250, %v563, %v557
          %v566 = vsel %vm251, %v563, %v558
          %v567 = vsel %vm252, %v563, %v559
          %568 = vrot.lane.b32.xlu0 %v528, 123
          %v569 = vpop.permute.xlu0 %568
          %s570 = vtos %v569
          %v571 = vstv %s570
          %v573 = vsel %vm261, %v571, %v565
          %v574 = vsel %vm262, %v571, %v566
          %v575 = vsel %vm263, %v571, %v567
          %576 = vrot.lane.b32.xlu0 %v528, 122
          %v577 = vpop.permute.xlu0 %576
          %s578 = vtos %v577
          %v579 = vstv %s578
          %v581 = vsel %vm272, %v579, %v573
          %v582 = vsel %vm273, %v579, %v574
          %v583 = vsel %vm274, %v579, %v575
          %s584 = scalar_lea.vmem [#allocation2], 120
          %585 = vst.msk [vmem:[%s584] sm:$0xff] %vm283, %v581
          %586 = vst.msk [vmem:[%s584 + $0x8] sm:$0xff] %vm283, %v582
          %587 = vst.msk [vmem:[%s584 + $0x10] sm:$0x3f] %vm286, %v583
          %v588 = vld [vmem:[%s180 + $0x6] sm:$0x1]
          %s590 = vtos %v588
          %v591 = vstv %s590
          %v593 = vsel %vm207, %v591, 0.0
          %v594 = vsel %vm208, %v591, 0.0
          %v595 = vsel %vm209, %v591, 0.0
          %596 = vrot.lane.b32.xlu0 %v588, 127
          %v597 = vpop.permute.xlu0 %596
          %s598 = vtos %v597
          %v599 = vstv %s598
          %v601 = vsel %vm217, %v599, %v593
          %v602 = vsel %vm218, %v599, %v594
          %v603 = vsel %vm219, %v599, %v595
          %604 = vrot.lane.b32.xlu0 %v588, 126
          %v605 = vpop.permute.xlu0 %604
          %s606 = vtos %v605
          %v607 = vstv %s606
          %v609 = vsel %vm228, %v607, %v601
          %v610 = vsel %vm229, %v607, %v602
          %v611 = vsel %vm230, %v607, %v603
          %612 = vrot.lane.b32.xlu0 %v588, 125
          %v613 = vpop.permute.xlu0 %612
          %s614 = vtos %v613
          %v615 = vstv %s614
          %v617 = vsel %vm239, %v615, %v609
          %v618 = vsel %vm240, %v615, %v610
          %v619 = vsel %vm241, %v615, %v611
          %620 = vrot.lane.b32.xlu0 %v588, 124
          %v621 = vpop.permute.xlu0 %620
          %s622 = vtos %v621
          %v623 = vstv %s622
          %v625 = vsel %vm250, %v623, %v617
          %v626 = vsel %vm251, %v623, %v618
          %v627 = vsel %vm252, %v623, %v619
          %628 = vrot.lane.b32.xlu0 %v588, 123
          %v629 = vpop.permute.xlu0 %628
          %s630 = vtos %v629
          %v631 = vstv %s630
          %v633 = vsel %vm261, %v631, %v625
          %v634 = vsel %vm262, %v631, %v626
          %v635 = vsel %vm263, %v631, %v627
          %636 = vrot.lane.b32.xlu0 %v588, 122
          %v637 = vpop.permute.xlu0 %636
          %s638 = vtos %v637
          %v639 = vstv %s638
          %v641 = vsel %vm272, %v639, %v633
          %v642 = vsel %vm273, %v639, %v634
          %v643 = vsel %vm274, %v639, %v635
          %s644 = scalar_lea.vmem [#allocation2], 144
          %645 = vst.msk [vmem:[%s644] sm:$0xff] %vm283, %v641
          %646 = vst.msk [vmem:[%s644 + $0x8] sm:$0xff] %vm283, %v642
          %647 = vst.msk [vmem:[%s644 + $0x10] sm:$0x3f] %vm286, %v643
        $region32: #{tpu_custom_call.1} parent=27 // pred_fallthru
          _
        %v648 = vld [vmem:[%s190] sm:$0xff]
        %v649 = vld [vmem:[%s190 + $0x8] sm:$0xff]
        %v650 = vld [vmem:[%s190 + $0x18] sm:$0xff]
        %v651 = vld [vmem:[%s190 + $0x20] sm:$0xff]
        %v652 = vld [vmem:[%s190 + $0x30] sm:$0xff]
        %v653 = vld [vmem:[%s190 + $0x38] sm:$0xff]
        %v654 = vld [vmem:[%s190 + $0x48] sm:$0xff]
        %v655 = vld [vmem:[%s190 + $0x50] sm:$0xff]
        %v656 = vld [vmem:[#allocation2] sm:$0xff]
        %v657 = vld [vmem:[#allocation2 + $0x8] sm:$0xff]
        %v658 = vld [vmem:[#allocation2 + $0x10] sm:$0x3f]
        %v659 = vld [vmem:[%s190 + $0x1] sm:$0xff]
        %v660 = vld [vmem:[%s190 + $0x9] sm:$0xff]
        %v661 = vld [vmem:[%s190 + $0x19] sm:$0xff]
        %v662 = vld [vmem:[%s190 + $0x21] sm:$0xff]
        %v663 = vld [vmem:[%s190 + $0x31] sm:$0xff]
        %v664 = vld [vmem:[%s190 + $0x39] sm:$0xff]
        %v665 = vld [vmem:[%s190 + $0x49] sm:$0xff]
        %v666 = vld [vmem:[%s190 + $0x51] sm:$0xff]
        %s667 = scalar_lea.vmem [#allocation2], 24
        %v668 = vld [vmem:[%s667] sm:$0xff]
        %v669 = vld [vmem:[%s667 + $0x8] sm:$0xff]
        %v670 = vld [vmem:[%s667 + $0x10] sm:$0x3f]
        %vm671 = vcmask 179200
        %v673 = vsel %vm671, %v659, 0
        %v676 = vsel %vm671, %v660, 0
        %v679 = vsel %vm671, %v661, 0
        %v682 = vsel %vm671, %v662, 0
        %v685 = vsel %vm671, %v663, 0
        %v688 = vsel %vm671, %v664, 0
        %v691 = vsel %vm671, %v665, 0
        %v694 = vsel %vm671, %v666, 0
        %vm696 = vcmask 1045504
        %v698 = vsel %vm696, %v670, 0
        %700 = vmatpush.msra.mxu0 0.0
        %701 = vmatpush.msra.mxu0 0.0
        %702 = vmatpush.msra.mxu0 0.0
        %703 = vmatpush.msra.mxu0 0.0
        %704 = vmatpush.msra.mxu0 0.0
        %705 = vmatpush.msra.mxu0 0.0
        %706 = vmatpush.msra.mxu0 0.0
        %707 = vmatpush.msra.mxu0 0.0
        %708 = vmatpush.msra.mxu0 0.0
        %709 = vmatpush.msra.mxu0 0.0
        %710 = vmatpush.msra.mxu0 0.0
        %711 = vmatpush.msra.mxu0 0.0
        %712 = vmatpush.msra.mxu0 0.0
        %v713 = vand.u32 %v698, 4294901760
        %714 = vmatpush.msra.mxu0 %v713
        %v715 = vand.u32 %v669, 4294901760
        %716 = vmatpush.msra.mxu0 %v715
        %v717 = vand.u32 %v668, 4294901760
        %718 = vmatpush.msra.mxu0 %v717
        %v719 = vand.u32 %v673, 4294901760
        %v720 = vsub.f32 %v673, %v719
        %v721 = vand.u32 %v720, 4294901760
        %v722 = vsub.f32 %v720, %v721
        %v723 = vand.u32 %v722, 4294901760
        %724 = vmatmul.f32.gmra.mxu0 %v723
        %v725 = vpop.f32.mrf.mxu0
        %v726 = vadd.f32 0.0, %v725
        %v727 = vand.u32 %v676, 4294901760
        %v728 = vsub.f32 %v676, %v727
        %v729 = vand.u32 %v728, 4294901760
        %v730 = vsub.f32 %v728, %v729
        %v731 = vand.u32 %v730, 4294901760
        %732 = vmatmul.f32.gmra.mxu0 %v731
        %v733 = vpop.f32.mrf.mxu0
        %v734 = vadd.f32 0.0, %v733
        %v735 = vand.u32 %v679, 4294901760
        %v736 = vsub.f32 %v679, %v735
        %v737 = vand.u32 %v736, 4294901760
        %v738 = vsub.f32 %v736, %v737
        %v739 = vand.u32 %v738, 4294901760
        %740 = vmatmul.f32.gmra.mxu0 %v739
        %v741 = vpop.f32.mrf.mxu0
        %v742 = vadd.f32 0.0, %v741
        %v743 = vand.u32 %v682, 4294901760
        %v744 = vsub.f32 %v682, %v743
        %v745 = vand.u32 %v744, 4294901760
        %v746 = vsub.f32 %v744, %v745
        %v747 = vand.u32 %v746, 4294901760
        %748 = vmatmul.f32.gmra.mxu0 %v747
        %v749 = vpop.f32.mrf.mxu0
        %v750 = vadd.f32 0.0, %v749
        %v751 = vand.u32 %v685, 4294901760
        %v752 = vsub.f32 %v685, %v751
        %v753 = vand.u32 %v752, 4294901760
        %v754 = vsub.f32 %v752, %v753
        %v755 = vand.u32 %v754, 4294901760
        %756 = vmatmul.f32.gmra.mxu0 %v755
        %v757 = vpop.f32.mrf.mxu0
        %v758 = vadd.f32 0.0, %v757
        %v759 = vand.u32 %v688, 4294901760
        %v760 = vsub.f32 %v688, %v759
        %v761 = vand.u32 %v760, 4294901760
        %v762 = vsub.f32 %v760, %v761
        %v763 = vand.u32 %v762, 4294901760
        %764 = vmatmul.f32.gmra.mxu0 %v763
        %v765 = vpop.f32.mrf.mxu0
        %v766 = vadd.f32 0.0, %v765
        %v767 = vand.u32 %v691, 4294901760
        %v768 = vsub.f32 %v691, %v767
        %v769 = vand.u32 %v768, 4294901760
        %v770 = vsub.f32 %v768, %v769
        %v771 = vand.u32 %v770, 4294901760
        %772 = vmatmul.f32.gmra.mxu0 %v771
        %v773 = vpop.f32.mrf.mxu0
        %v774 = vadd.f32 0.0, %v773
        %v775 = vand.u32 %v694, 4294901760
        %v776 = vsub.f32 %v694, %v775
        %v777 = vand.u32 %v776, 4294901760
        %v778 = vsub.f32 %v776, %v777
        %v779 = vand.u32 %v778, 4294901760
        %780 = vmatmul.f32.gmra.mxu0 %v779
        %v781 = vpop.f32.mrf.mxu0
        %v782 = vadd.f32 0.0, %v781
        %783 = vdwg.mxu0
        %784 = vmatpush.msra.mxu0 0.0
        %785 = vmatpush.msra.mxu0 0.0
        %786 = vmatpush.msra.mxu0 0.0
        %787 = vmatpush.msra.mxu0 0.0
        %788 = vmatpush.msra.mxu0 0.0
        %789 = vmatpush.msra.mxu0 0.0
        %790 = vmatpush.msra.mxu0 0.0
        %791 = vmatpush.msra.mxu0 0.0
        %792 = vmatpush.msra.mxu0 0.0
        %793 = vmatpush.msra.mxu0 0.0
        %794 = vmatpush.msra.mxu0 0.0
        %795 = vmatpush.msra.mxu0 0.0
        %796 = vmatpush.msra.mxu0 0.0
        %v797 = vand.u32 %v698, 4294901760
        %v798 = vsub.f32 %v698, %v797
        %v799 = vand.u32 %v798, 4294901760
        %v800 = vsub.f32 %v798, %v799
        %v801 = vand.u32 %v800, 4294901760
        %802 = vmatpush.msra.mxu0 %v801
        %v803 = vand.u32 %v669, 4294901760
        %v804 = vsub.f32 %v669, %v803
        %v805 = vand.u32 %v804, 4294901760
        %v806 = vsub.f32 %v804, %v805
        %v807 = vand.u32 %v806, 4294901760
        %808 = vmatpush.msra.mxu0 %v807
        %v809 = vand.u32 %v668, 4294901760
        %v810 = vsub.f32 %v668, %v809
        %v811 = vand.u32 %v810, 4294901760
        %v812 = vsub.f32 %v810, %v811
        %v813 = vand.u32 %v812, 4294901760
        %814 = vmatpush.msra.mxu0 %v813
        %v815 = vand.u32 %v673, 4294901760
        %816 = vmatmul.f32.gmra.mxu0 %v815
        %v817 = vpop.f32.mrf.mxu0
        %v818 = vadd.f32 %v726, %v817
        %v819 = vand.u32 %v676, 4294901760
        %820 = vmatmul.f32.gmra.mxu0 %v819
        %v821 = vpop.f32.mrf.mxu0
        %v822 = vadd.f32 %v734, %v821
        %v823 = vand.u32 %v679, 4294901760
        %824 = vmatmul.f32.gmra.mxu0 %v823
        %v825 = vpop.f32.mrf.mxu0
        %v826 = vadd.f32 %v742, %v825
        %v827 = vand.u32 %v682, 4294901760
        %828 = vmatmul.f32.gmra.mxu0 %v827
        %v829 = vpop.f32.mrf.mxu0
        %v830 = vadd.f32 %v750, %v829
        %v831 = vand.u32 %v685, 4294901760
        %832 = vmatmul.f32.gmra.mxu0 %v831
        %v833 = vpop.f32.mrf.mxu0
        %v834 = vadd.f32 %v758, %v833
        %v835 = vand.u32 %v688, 4294901760
        %836 = vmatmul.f32.gmra.mxu0 %v835
        %v837 = vpop.f32.mrf.mxu0
        %v838 = vadd.f32 %v766, %v837
        %v839 = vand.u32 %v691, 4294901760
        %840 = vmatmul.f32.gmra.mxu0 %v839
        %v841 = vpop.f32.mrf.mxu0
        %v842 = vadd.f32 %v774, %v841
        %v843 = vand.u32 %v694, 4294901760
        %844 = vmatmul.f32.gmra.mxu0 %v843
        %v845 = vpop.f32.mrf.mxu0
        %v846 = vadd.f32 %v782, %v845
        %847 = vdwg.mxu0
        %848 = vmatpush.msra.mxu0 0.0
        %849 = vmatpush.msra.mxu0 0.0
        %850 = vmatpush.msra.mxu0 0.0
        %851 = vmatpush.msra.mxu0 0.0
        %852 = vmatpush.msra.mxu0 0.0
        %853 = vmatpush.msra.mxu0 0.0
        %854 = vmatpush.msra.mxu0 0.0
        %855 = vmatpush.msra.mxu0 0.0
        %856 = vmatpush.msra.mxu0 0.0
        %857 = vmatpush.msra.mxu0 0.0
        %858 = vmatpush.msra.mxu0 0.0
        %859 = vmatpush.msra.mxu0 0.0
        %860 = vmatpush.msra.mxu0 0.0
        %v861 = vand.u32 %v698, 4294901760
        %v862 = vsub.f32 %v698, %v861
        %863 = vmatpush.msra.mxu0 %v862
        %v864 = vand.u32 %v669, 4294901760
        %v865 = vsub.f32 %v669, %v864
        %866 = vmatpush.msra.mxu0 %v865
        %v867 = vand.u32 %v668, 4294901760
        %v868 = vsub.f32 %v668, %v867
        %869 = vmatpush.msra.mxu0 %v868
        %v870 = vand.u32 %v673, 4294901760
        %v871 = vsub.f32 %v673, %v870
        %872 = vmatmul.f32.gmra.mxu0 %v871
        %v873 = vpop.f32.mrf.mxu0
        %v874 = vadd.f32 %v818, %v873
        %v875 = vand.u32 %v676, 4294901760
        %v876 = vsub.f32 %v676, %v875
        %877 = vmatmul.f32.gmra.mxu0 %v876
        %v878 = vpop.f32.mrf.mxu0
        %v879 = vadd.f32 %v822, %v878
        %v880 = vand.u32 %v679, 4294901760
        %v881 = vsub.f32 %v679, %v880
        %882 = vmatmul.f32.gmra.mxu0 %v881
        %v883 = vpop.f32.mrf.mxu0
        %v884 = vadd.f32 %v826, %v883
        %v885 = vand.u32 %v682, 4294901760
        %v886 = vsub.f32 %v682, %v885
        %887 = vmatmul.f32.gmra.mxu0 %v886
        %v888 = vpop.f32.mrf.mxu0
        %v889 = vadd.f32 %v830, %v888
        %v890 = vand.u32 %v685, 4294901760
        %v891 = vsub.f32 %v685, %v890
        %892 = vmatmul.f32.gmra.mxu0 %v891
        %v893 = vpop.f32.mrf.mxu0
        %v894 = vadd.f32 %v834, %v893
        %v895 = vand.u32 %v688, 4294901760
        %v896 = vsub.f32 %v688, %v895
        %897 = vmatmul.f32.gmra.mxu0 %v896
        %v898 = vpop.f32.mrf.mxu0
        %v899 = vadd.f32 %v838, %v898
        %v900 = vand.u32 %v691, 4294901760
        %v901 = vsub.f32 %v691, %v900
        %902 = vmatmul.f32.gmra.mxu0 %v901
        %v903 = vpop.f32.mrf.mxu0
        %v904 = vadd.f32 %v842, %v903
        %v905 = vand.u32 %v694, 4294901760
        %v906 = vsub.f32 %v694, %v905
        %907 = vmatmul.f32.gmra.mxu0 %v906
        %v908 = vpop.f32.mrf.mxu0
        %v909 = vadd.f32 %v846, %v908
        %910 = vdwg.mxu0
        %911 = vmatpush.msra.mxu0 0.0
        %912 = vmatpush.msra.mxu0 0.0
        %913 = vmatpush.msra.mxu0 0.0
        %914 = vmatpush.msra.mxu0 0.0
        %915 = vmatpush.msra.mxu0 0.0
        %916 = vmatpush.msra.mxu0 0.0
        %917 = vmatpush.msra.mxu0 0.0
        %918 = vmatpush.msra.mxu0 0.0
        %919 = vmatpush.msra.mxu0 0.0
        %920 = vmatpush.msra.mxu0 0.0
        %921 = vmatpush.msra.mxu0 0.0
        %922 = vmatpush.msra.mxu0 0.0
        %923 = vmatpush.msra.mxu0 0.0
        %v924 = vand.u32 %v698, 4294901760
        %925 = vmatpush.msra.mxu0 %v924
        %v926 = vand.u32 %v669, 4294901760
        %927 = vmatpush.msra.mxu0 %v926
        %v928 = vand.u32 %v668, 4294901760
        %929 = vmatpush.msra.mxu0 %v928
        %v930 = vand.u32 %v673, 4294901760
        %v931 = vsub.f32 %v673, %v930
        %v932 = vand.u32 %v931, 4294901760
        %933 = vmatmul.f32.gmra.mxu0 %v932
        %v934 = vpop.f32.mrf.mxu0
        %v935 = vadd.f32 %v874, %v934
        %v936 = vand.u32 %v676, 4294901760
        %v937 = vsub.f32 %v676, %v936
        %v938 = vand.u32 %v937, 4294901760
        %939 = vmatmul.f32.gmra.mxu0 %v938
        %v940 = vpop.f32.mrf.mxu0
        %v941 = vadd.f32 %v879, %v940
        %v942 = vand.u32 %v679, 4294901760
        %v943 = vsub.f32 %v679, %v942
        %v944 = vand.u32 %v943, 4294901760
        %945 = vmatmul.f32.gmra.mxu0 %v944
        %v946 = vpop.f32.mrf.mxu0
        %v947 = vadd.f32 %v884, %v946
        %v948 = vand.u32 %v682, 4294901760
        %v949 = vsub.f32 %v682, %v948
        %v950 = vand.u32 %v949, 4294901760
        %951 = vmatmul.f32.gmra.mxu0 %v950
        %v952 = vpop.f32.mrf.mxu0
        %v953 = vadd.f32 %v889, %v952
        %v954 = vand.u32 %v685, 4294901760
        %v955 = vsub.f32 %v685, %v954
        %v956 = vand.u32 %v955, 4294901760
        %957 = vmatmul.f32.gmra.mxu0 %v956
        %v958 = vpop.f32.mrf.mxu0
        %v959 = vadd.f32 %v894, %v958
        %v960 = vand.u32 %v688, 4294901760
        %v961 = vsub.f32 %v688, %v960
        %v962 = vand.u32 %v961, 4294901760
        %963 = vmatmul.f32.gmra.mxu0 %v962
        %v964 = vpop.f32.mrf.mxu0
        %v965 = vadd.f32 %v899, %v964
        %v966 = vand.u32 %v691, 4294901760
        %v967 = vsub.f32 %v691, %v966
        %v968 = vand.u32 %v967, 4294901760
        %969 = vmatmul.f32.gmra.mxu0 %v968
        %v970 = vpop.f32.mrf.mxu0
        %v971 = vadd.f32 %v904, %v970
        %v972 = vand.u32 %v694, 4294901760
        %v973 = vsub.f32 %v694, %v972
        %v974 = vand.u32 %v973, 4294901760
        %975 = vmatmul.f32.gmra.mxu0 %v974
        %v976 = vpop.f32.mrf.mxu0
        %v977 = vadd.f32 %v909, %v976
        %978 = vdwg.mxu0
        %979 = vmatpush.msra.mxu0 0.0
        %980 = vmatpush.msra.mxu0 0.0
        %981 = vmatpush.msra.mxu0 0.0
        %982 = vmatpush.msra.mxu0 0.0
        %983 = vmatpush.msra.mxu0 0.0
        %984 = vmatpush.msra.mxu0 0.0
        %985 = vmatpush.msra.mxu0 0.0
        %986 = vmatpush.msra.mxu0 0.0
        %987 = vmatpush.msra.mxu0 0.0
        %988 = vmatpush.msra.mxu0 0.0
        %989 = vmatpush.msra.mxu0 0.0
        %990 = vmatpush.msra.mxu0 0.0
        %991 = vmatpush.msra.mxu0 0.0
        %v992 = vand.u32 %v698, 4294901760
        %v993 = vsub.f32 %v698, %v992
        %v994 = vand.u32 %v993, 4294901760
        %995 = vmatpush.msra.mxu0 %v994
        %v996 = vand.u32 %v669, 4294901760
        %v997 = vsub.f32 %v669, %v996
        %v998 = vand.u32 %v997, 4294901760
        %999 = vmatpush.msra.mxu0 %v998
        %v1000 = vand.u32 %v668, 4294901760
        %v1001 = vsub.f32 %v668, %v1000
        %v1002 = vand.u32 %v1001, 4294901760
        %1003 = vmatpush.msra.mxu0 %v1002
        %v1004 = vand.u32 %v673, 4294901760
        %1005 = vmatmul.f32.gmra.mxu0 %v1004
        %v1006 = vpop.f32.mrf.mxu0
        %v1007 = vadd.f32 %v935, %v1006
        %v1008 = vand.u32 %v676, 4294901760
        %1009 = vmatmul.f32.gmra.mxu0 %v1008
        %v1010 = vpop.f32.mrf.mxu0
        %v1011 = vadd.f32 %v941, %v1010
        %v1012 = vand.u32 %v679, 4294901760
        %1013 = vmatmul.f32.gmra.mxu0 %v1012
        %v1014 = vpop.f32.mrf.mxu0
        %v1015 = vadd.f32 %v947, %v1014
        %v1016 = vand.u32 %v682, 4294901760
        %1017 = vmatmul.f32.gmra.mxu0 %v1016
        %v1018 = vpop.f32.mrf.mxu0
        %v1019 = vadd.f32 %v953, %v1018
        %v1020 = vand.u32 %v685, 4294901760
        %1021 = vmatmul.f32.gmra.mxu0 %v1020
        %v1022 = vpop.f32.mrf.mxu0
        %v1023 = vadd.f32 %v959, %v1022
        %v1024 = vand.u32 %v688, 4294901760
        %1025 = vmatmul.f32.gmra.mxu0 %v1024
        %v1026 = vpop.f32.mrf.mxu0
        %v1027 = vadd.f32 %v965, %v1026
        %v1028 = vand.u32 %v691, 4294901760
        %1029 = vmatmul.f32.gmra.mxu0 %v1028
        %v1030 = vpop.f32.mrf.mxu0
        %v1031 = vadd.f32 %v971, %v1030
        %v1032 = vand.u32 %v694, 4294901760
        %1033 = vmatmul.f32.gmra.mxu0 %v1032
        %v1034 = vpop.f32.mrf.mxu0
        %v1035 = vadd.f32 %v977, %v1034
        %1036 = vdwg.mxu0
        %1037 = vmatpush.msra.mxu0 0.0
        %1038 = vmatpush.msra.mxu0 0.0
        %1039 = vmatpush.msra.mxu0 0.0
        %1040 = vmatpush.msra.mxu0 0.0
        %1041 = vmatpush.msra.mxu0 0.0
        %1042 = vmatpush.msra.mxu0 0.0
        %1043 = vmatpush.msra.mxu0 0.0
        %1044 = vmatpush.msra.mxu0 0.0
        %1045 = vmatpush.msra.mxu0 0.0
        %1046 = vmatpush.msra.mxu0 0.0
        %1047 = vmatpush.msra.mxu0 0.0
        %1048 = vmatpush.msra.mxu0 0.0
        %1049 = vmatpush.msra.mxu0 0.0
        %v1050 = vand.u32 %v698, 4294901760
        %1051 = vmatpush.msra.mxu0 %v1050
        %v1052 = vand.u32 %v669, 4294901760
        %1053 = vmatpush.msra.mxu0 %v1052
        %v1054 = vand.u32 %v668, 4294901760
        %1055 = vmatpush.msra.mxu0 %v1054
        %v1056 = vand.u32 %v673, 4294901760
        %1057 = vmatmul.f32.gmra.mxu0 %v1056
        %v1058 = vpop.f32.mrf.mxu0
        %v1059 = vadd.f32 %v1007, %v1058
        %v1060 = vand.u32 %v676, 4294901760
        %1061 = vmatmul.f32.gmra.mxu0 %v1060
        %v1062 = vpop.f32.mrf.mxu0
        %v1063 = vadd.f32 %v1011, %v1062
        %v1064 = vand.u32 %v679, 4294901760
        %1065 = vmatmul.f32.gmra.mxu0 %v1064
        %v1066 = vpop.f32.mrf.mxu0
        %v1067 = vadd.f32 %v1015, %v1066
        %v1068 = vand.u32 %v682, 4294901760
        %1069 = vmatmul.f32.gmra.mxu0 %v1068
        %v1070 = vpop.f32.mrf.mxu0
        %v1071 = vadd.f32 %v1019, %v1070
        %v1072 = vand.u32 %v685, 4294901760
        %1073 = vmatmul.f32.gmra.mxu0 %v1072
        %v1074 = vpop.f32.mrf.mxu0
        %v1075 = vadd.f32 %v1023, %v1074
        %v1076 = vand.u32 %v688, 4294901760
        %1077 = vmatmul.f32.gmra.mxu0 %v1076
        %v1078 = vpop.f32.mrf.mxu0
        %v1079 = vadd.f32 %v1027, %v1078
        %v1080 = vand.u32 %v691, 4294901760
        %1081 = vmatmul.f32.gmra.mxu0 %v1080
        %v1082 = vpop.f32.mrf.mxu0
        %v1083 = vadd.f32 %v1031, %v1082
        %v1084 = vand.u32 %v694, 4294901760
        %1085 = vmatmul.f32.gmra.mxu0 %v1084
        %v1086 = vpop.f32.mrf.mxu0
        %v1087 = vadd.f32 %v1035, %v1086
        %1088 = vdwg.mxu0
        %v1090 = vsel %vm671, %v648, 0
        %v1093 = vsel %vm671, %v649, 0
        %v1096 = vsel %vm671, %v650, 0
        %v1099 = vsel %vm671, %v651, 0
        %v1102 = vsel %vm671, %v652, 0
        %v1105 = vsel %vm671, %v653, 0
        %v1108 = vsel %vm671, %v654, 0
        %v1111 = vsel %vm671, %v655, 0
        %v1114 = vsel %vm696, %v658, 0
        %1116 = vmatpush.msra.mxu0 0.0
        %1117 = vmatpush.msra.mxu0 0.0
        %1118 = vmatpush.msra.mxu0 0.0
        %1119 = vmatpush.msra.mxu0 0.0
        %1120 = vmatpush.msra.mxu0 0.0
        %1121 = vmatpush.msra.mxu0 0.0
        %1122 = vmatpush.msra.mxu0 0.0
        %1123 = vmatpush.msra.mxu0 0.0
        %1124 = vmatpush.msra.mxu0 0.0
        %1125 = vmatpush.msra.mxu0 0.0
        %1126 = vmatpush.msra.mxu0 0.0
        %1127 = vmatpush.msra.mxu0 0.0
        %1128 = vmatpush.msra.mxu0 0.0
        %v1129 = vand.u32 %v1114, 4294901760
        %1130 = vmatpush.msra.mxu0 %v1129
        %v1131 = vand.u32 %v657, 4294901760
        %1132 = vmatpush.msra.mxu0 %v1131
        %v1133 = vand.u32 %v656, 4294901760
        %1134 = vmatpush.msra.mxu0 %v1133
        %v1135 = vand.u32 %v1090, 4294901760
        %v1136 = vsub.f32 %v1090, %v1135
        %v1137 = vand.u32 %v1136, 4294901760
        %v1138 = vsub.f32 %v1136, %v1137
        %v1139 = vand.u32 %v1138, 4294901760
        %1140 = vmatmul.f32.gmra.mxu0 %v1139
        %v1141 = vpop.f32.mrf.mxu0
        %v1142 = vadd.f32 %v1059, %v1141
        %v1143 = vand.u32 %v1093, 4294901760
        %v1144 = vsub.f32 %v1093, %v1143
        %v1145 = vand.u32 %v1144, 4294901760
        %v1146 = vsub.f32 %v1144, %v1145
        %v1147 = vand.u32 %v1146, 4294901760
        %1148 = vmatmul.f32.gmra.mxu0 %v1147
        %v1149 = vpop.f32.mrf.mxu0
        %v1150 = vadd.f32 %v1063, %v1149
        %v1151 = vand.u32 %v1096, 4294901760
        %v1152 = vsub.f32 %v1096, %v1151
        %v1153 = vand.u32 %v1152, 4294901760
        %v1154 = vsub.f32 %v1152, %v1153
        %v1155 = vand.u32 %v1154, 4294901760
        %1156 = vmatmul.f32.gmra.mxu0 %v1155
        %v1157 = vpop.f32.mrf.mxu0
        %v1158 = vadd.f32 %v1067, %v1157
        %v1159 = vand.u32 %v1099, 4294901760
        %v1160 = vsub.f32 %v1099, %v1159
        %v1161 = vand.u32 %v1160, 4294901760
        %v1162 = vsub.f32 %v1160, %v1161
        %v1163 = vand.u32 %v1162, 4294901760
        %1164 = vmatmul.f32.gmra.mxu0 %v1163
        %v1165 = vpop.f32.mrf.mxu0
        %v1166 = vadd.f32 %v1071, %v1165
        %v1167 = vand.u32 %v1102, 4294901760
        %v1168 = vsub.f32 %v1102, %v1167
        %v1169 = vand.u32 %v1168, 4294901760
        %v1170 = vsub.f32 %v1168, %v1169
        %v1171 = vand.u32 %v1170, 4294901760
        %1172 = vmatmul.f32.gmra.mxu0 %v1171
        %v1173 = vpop.f32.mrf.mxu0
        %v1174 = vadd.f32 %v1075, %v1173
        %v1175 = vand.u32 %v1105, 4294901760
        %v1176 = vsub.f32 %v1105, %v1175
        %v1177 = vand.u32 %v1176, 4294901760
        %v1178 = vsub.f32 %v1176, %v1177
        %v1179 = vand.u32 %v1178, 4294901760
        %1180 = vmatmul.f32.gmra.mxu0 %v1179
        %v1181 = vpop.f32.mrf.mxu0
        %v1182 = vadd.f32 %v1079, %v1181
        %v1183 = vand.u32 %v1108, 4294901760
        %v1184 = vsub.f32 %v1108, %v1183
        %v1185 = vand.u32 %v1184, 4294901760
        %v1186 = vsub.f32 %v1184, %v1185
        %v1187 = vand.u32 %v1186, 4294901760
        %1188 = vmatmul.f32.gmra.mxu0 %v1187
        %v1189 = vpop.f32.mrf.mxu0
        %v1190 = vadd.f32 %v1083, %v1189
        %v1191 = vand.u32 %v1111, 4294901760
        %v1192 = vsub.f32 %v1111, %v1191
        %v1193 = vand.u32 %v1192, 4294901760
        %v1194 = vsub.f32 %v1192, %v1193
        %v1195 = vand.u32 %v1194, 4294901760
        %1196 = vmatmul.f32.gmra.mxu0 %v1195
        %v1197 = vpop.f32.mrf.mxu0
        %v1198 = vadd.f32 %v1087, %v1197
        %1199 = vdwg.mxu0
        %1200 = vmatpush.msra.mxu0 0.0
        %1201 = vmatpush.msra.mxu0 0.0
        %1202 = vmatpush.msra.mxu0 0.0
        %1203 = vmatpush.msra.mxu0 0.0
        %1204 = vmatpush.msra.mxu0 0.0
        %1205 = vmatpush.msra.mxu0 0.0
        %1206 = vmatpush.msra.mxu0 0.0
        %1207 = vmatpush.msra.mxu0 0.0
        %1208 = vmatpush.msra.mxu0 0.0
        %1209 = vmatpush.msra.mxu0 0.0
        %1210 = vmatpush.msra.mxu0 0.0
        %1211 = vmatpush.msra.mxu0 0.0
        %1212 = vmatpush.msra.mxu0 0.0
        %v1213 = vand.u32 %v1114, 4294901760
        %v1214 = vsub.f32 %v1114, %v1213
        %v1215 = vand.u32 %v1214, 4294901760
        %v1216 = vsub.f32 %v1214, %v1215
        %v1217 = vand.u32 %v1216, 4294901760
        %1218 = vmatpush.msra.mxu0 %v1217
        %v1219 = vand.u32 %v657, 4294901760
        %v1220 = vsub.f32 %v657, %v1219
        %v1221 = vand.u32 %v1220, 4294901760
        %v1222 = vsub.f32 %v1220, %v1221
        %v1223 = vand.u32 %v1222, 4294901760
        %1224 = vmatpush.msra.mxu0 %v1223
        %v1225 = vand.u32 %v656, 4294901760
        %v1226 = vsub.f32 %v656, %v1225
        %v1227 = vand.u32 %v1226, 4294901760
        %v1228 = vsub.f32 %v1226, %v1227
        %v1229 = vand.u32 %v1228, 4294901760
        %1230 = vmatpush.msra.mxu0 %v1229
        %v1231 = vand.u32 %v1090, 4294901760
        %1232 = vmatmul.f32.gmra.mxu0 %v1231
        %v1233 = vpop.f32.mrf.mxu0
        %v1234 = vadd.f32 %v1142, %v1233
        %v1235 = vand.u32 %v1093, 4294901760
        %1236 = vmatmul.f32.gmra.mxu0 %v1235
        %v1237 = vpop.f32.mrf.mxu0
        %v1238 = vadd.f32 %v1150, %v1237
        %v1239 = vand.u32 %v1096, 4294901760
        %1240 = vmatmul.f32.gmra.mxu0 %v1239
        %v1241 = vpop.f32.mrf.mxu0
        %v1242 = vadd.f32 %v1158, %v1241
        %v1243 = vand.u32 %v1099, 4294901760
        %1244 = vmatmul.f32.gmra.mxu0 %v1243
        %v1245 = vpop.f32.mrf.mxu0
        %v1246 = vadd.f32 %v1166, %v1245
        %v1247 = vand.u32 %v1102, 4294901760
        %1248 = vmatmul.f32.gmra.mxu0 %v1247
        %v1249 = vpop.f32.mrf.mxu0
        %v1250 = vadd.f32 %v1174, %v1249
        %v1251 = vand.u32 %v1105, 4294901760
        %1252 = vmatmul.f32.gmra.mxu0 %v1251
        %v1253 = vpop.f32.mrf.mxu0
        %v1254 = vadd.f32 %v1182, %v1253
        %v1255 = vand.u32 %v1108, 4294901760
        %1256 = vmatmul.f32.gmra.mxu0 %v1255
        %v1257 = vpop.f32.mrf.mxu0
        %v1258 = vadd.f32 %v1190, %v1257
        %v1259 = vand.u32 %v1111, 4294901760
        %1260 = vmatmul.f32.gmra.mxu0 %v1259
        %v1261 = vpop.f32.mrf.mxu0
        %v1262 = vadd.f32 %v1198, %v1261
        %1263 = vdwg.mxu0
        %1264 = vmatpush.msra.mxu0 0.0
        %1265 = vmatpush.msra.mxu0 0.0
        %1266 = vmatpush.msra.mxu0 0.0
        %1267 = vmatpush.msra.mxu0 0.0
        %1268 = vmatpush.msra.mxu0 0.0
        %1269 = vmatpush.msra.mxu0 0.0
        %1270 = vmatpush.msra.mxu0 0.0
        %1271 = vmatpush.msra.mxu0 0.0
        %1272 = vmatpush.msra.mxu0 0.0
        %1273 = vmatpush.msra.mxu0 0.0
        %1274 = vmatpush.msra.mxu0 0.0
        %1275 = vmatpush.msra.mxu0 0.0
        %1276 = vmatpush.msra.mxu0 0.0
        %v1277 = vand.u32 %v1114, 4294901760
        %v1278 = vsub.f32 %v1114, %v1277
        %1279 = vmatpush.msra.mxu0 %v1278
        %v1280 = vand.u32 %v657, 4294901760
        %v1281 = vsub.f32 %v657, %v1280
        %1282 = vmatpush.msra.mxu0 %v1281
        %v1283 = vand.u32 %v656, 4294901760
        %v1284 = vsub.f32 %v656, %v1283
        %1285 = vmatpush.msra.mxu0 %v1284
        %v1286 = vand.u32 %v1090, 4294901760
        %v1287 = vsub.f32 %v1090, %v1286
        %1288 = vmatmul.f32.gmra.mxu0 %v1287
        %v1289 = vpop.f32.mrf.mxu0
        %v1290 = vadd.f32 %v1234, %v1289
        %v1291 = vand.u32 %v1093, 4294901760
        %v1292 = vsub.f32 %v1093, %v1291
        %1293 = vmatmul.f32.gmra.mxu0 %v1292
        %v1294 = vpop.f32.mrf.mxu0
        %v1295 = vadd.f32 %v1238, %v1294
        %v1296 = vand.u32 %v1096, 4294901760
        %v1297 = vsub.f32 %v1096, %v1296
        %1298 = vmatmul.f32.gmra.mxu0 %v1297
        %v1299 = vpop.f32.mrf.mxu0
        %v1300 = vadd.f32 %v1242, %v1299
        %v1301 = vand.u32 %v1099, 4294901760
        %v1302 = vsub.f32 %v1099, %v1301
        %1303 = vmatmul.f32.gmra.mxu0 %v1302
        %v1304 = vpop.f32.mrf.mxu0
        %v1305 = vadd.f32 %v1246, %v1304
        %v1306 = vand.u32 %v1102, 4294901760
        %v1307 = vsub.f32 %v1102, %v1306
        %1308 = vmatmul.f32.gmra.mxu0 %v1307
        %v1309 = vpop.f32.mrf.mxu0
        %v1310 = vadd.f32 %v1250, %v1309
        %v1311 = vand.u32 %v1105, 4294901760
        %v1312 = vsub.f32 %v1105, %v1311
        %1313 = vmatmul.f32.gmra.mxu0 %v1312
        %v1314 = vpop.f32.mrf.mxu0
        %v1315 = vadd.f32 %v1254, %v1314
        %v1316 = vand.u32 %v1108, 4294901760
        %v1317 = vsub.f32 %v1108, %v1316
        %1318 = vmatmul.f32.gmra.mxu0 %v1317
        %v1319 = vpop.f32.mrf.mxu0
        %v1320 = vadd.f32 %v1258, %v1319
        %v1321 = vand.u32 %v1111, 4294901760
        %v1322 = vsub.f32 %v1111, %v1321
        %1323 = vmatmul.f32.gmra.mxu0 %v1322
        %v1324 = vpop.f32.mrf.mxu0
        %v1325 = vadd.f32 %v1262, %v1324
        %1326 = vdwg.mxu0
        %1327 = vmatpush.msra.mxu0 0.0
        %1328 = vmatpush.msra.mxu0 0.0
        %1329 = vmatpush.msra.mxu0 0.0
        %1330 = vmatpush.msra.mxu0 0.0
        %1331 = vmatpush.msra.mxu0 0.0
        %1332 = vmatpush.msra.mxu0 0.0
        %1333 = vmatpush.msra.mxu0 0.0
        %1334 = vmatpush.msra.mxu0 0.0
        %1335 = vmatpush.msra.mxu0 0.0
        %1336 = vmatpush.msra.mxu0 0.0
        %1337 = vmatpush.msra.mxu0 0.0
        %1338 = vmatpush.msra.mxu0 0.0
        %1339 = vmatpush.msra.mxu0 0.0
        %v1340 = vand.u32 %v1114, 4294901760
        %1341 = vmatpush.msra.mxu0 %v1340
        %v1342 = vand.u32 %v657, 4294901760
        %1343 = vmatpush.msra.mxu0 %v1342
        %v1344 = vand.u32 %v656, 4294901760
        %1345 = vmatpush.msra.mxu0 %v1344
        %v1346 = vand.u32 %v1090, 4294901760
        %v1347 = vsub.f32 %v1090, %v1346
        %v1348 = vand.u32 %v1347, 4294901760
        %1349 = vmatmul.f32.gmra.mxu0 %v1348
        %v1350 = vpop.f32.mrf.mxu0
        %v1351 = vadd.f32 %v1290, %v1350
        %v1352 = vand.u32 %v1093, 4294901760
        %v1353 = vsub.f32 %v1093, %v1352
        %v1354 = vand.u32 %v1353, 4294901760
        %1355 = vmatmul.f32.gmra.mxu0 %v1354
        %v1356 = vpop.f32.mrf.mxu0
        %v1357 = vadd.f32 %v1295, %v1356
        %v1358 = vand.u32 %v1096, 4294901760
        %v1359 = vsub.f32 %v1096, %v1358
        %v1360 = vand.u32 %v1359, 4294901760
        %1361 = vmatmul.f32.gmra.mxu0 %v1360
        %v1362 = vpop.f32.mrf.mxu0
        %v1363 = vadd.f32 %v1300, %v1362
        %v1364 = vand.u32 %v1099, 4294901760
        %v1365 = vsub.f32 %v1099, %v1364
        %v1366 = vand.u32 %v1365, 4294901760
        %1367 = vmatmul.f32.gmra.mxu0 %v1366
        %v1368 = vpop.f32.mrf.mxu0
        %v1369 = vadd.f32 %v1305, %v1368
        %v1370 = vand.u32 %v1102, 4294901760
        %v1371 = vsub.f32 %v1102, %v1370
        %v1372 = vand.u32 %v1371, 4294901760
        %1373 = vmatmul.f32.gmra.mxu0 %v1372
        %v1374 = vpop.f32.mrf.mxu0
        %v1375 = vadd.f32 %v1310, %v1374
        %v1376 = vand.u32 %v1105, 4294901760
        %v1377 = vsub.f32 %v1105, %v1376
        %v1378 = vand.u32 %v1377, 4294901760
        %1379 = vmatmul.f32.gmra.mxu0 %v1378
        %v1380 = vpop.f32.mrf.mxu0
        %v1381 = vadd.f32 %v1315, %v1380
        %v1382 = vand.u32 %v1108, 4294901760
        %v1383 = vsub.f32 %v1108, %v1382
        %v1384 = vand.u32 %v1383, 4294901760
        %1385 = vmatmul.f32.gmra.mxu0 %v1384
        %v1386 = vpop.f32.mrf.mxu0
        %v1387 = vadd.f32 %v1320, %v1386
        %v1388 = vand.u32 %v1111, 4294901760
        %v1389 = vsub.f32 %v1111, %v1388
        %v1390 = vand.u32 %v1389, 4294901760
        %1391 = vmatmul.f32.gmra.mxu0 %v1390
        %v1392 = vpop.f32.mrf.mxu0
        %v1393 = vadd.f32 %v1325, %v1392
        %1394 = vdwg.mxu0
        %1395 = vmatpush.msra.mxu0 0.0
        %1396 = vmatpush.msra.mxu0 0.0
        %1397 = vmatpush.msra.mxu0 0.0
        %1398 = vmatpush.msra.mxu0 0.0
        %1399 = vmatpush.msra.mxu0 0.0
        %1400 = vmatpush.msra.mxu0 0.0
        %1401 = vmatpush.msra.mxu0 0.0
        %1402 = vmatpush.msra.mxu0 0.0
        %1403 = vmatpush.msra.mxu0 0.0
        %1404 = vmatpush.msra.mxu0 0.0
        %1405 = vmatpush.msra.mxu0 0.0
        %1406 = vmatpush.msra.mxu0 0.0
        %1407 = vmatpush.msra.mxu0 0.0
        %v1408 = vand.u32 %v1114, 4294901760
        %v1409 = vsub.f32 %v1114, %v1408
        %v1410 = vand.u32 %v1409, 4294901760
        %1411 = vmatpush.msra.mxu0 %v1410
        %v1412 = vand.u32 %v657, 4294901760
        %v1413 = vsub.f32 %v657, %v1412
        %v1414 = vand.u32 %v1413, 4294901760
        %1415 = vmatpush.msra.mxu0 %v1414
        %v1416 = vand.u32 %v656, 4294901760
        %v1417 = vsub.f32 %v656, %v1416
        %v1418 = vand.u32 %v1417, 4294901760
        %1419 = vmatpush.msra.mxu0 %v1418
        %v1420 = vand.u32 %v1090, 4294901760
        %1421 = vmatmul.f32.gmra.mxu0 %v1420
        %v1422 = vpop.f32.mrf.mxu0
        %v1423 = vadd.f32 %v1351, %v1422
        %v1424 = vand.u32 %v1093, 4294901760
        %1425 = vmatmul.f32.gmra.mxu0 %v1424
        %v1426 = vpop.f32.mrf.mxu0
        %v1427 = vadd.f32 %v1357, %v1426
        %v1428 = vand.u32 %v1096, 4294901760
        %1429 = vmatmul.f32.gmra.mxu0 %v1428
        %v1430 = vpop.f32.mrf.mxu0
        %v1431 = vadd.f32 %v1363, %v1430
        %v1432 = vand.u32 %v1099, 4294901760
        %1433 = vmatmul.f32.gmra.mxu0 %v1432
        %v1434 = vpop.f32.mrf.mxu0
        %v1435 = vadd.f32 %v1369, %v1434
        %v1436 = vand.u32 %v1102, 4294901760
        %1437 = vmatmul.f32.gmra.mxu0 %v1436
        %v1438 = vpop.f32.mrf.mxu0
        %v1439 = vadd.f32 %v1375, %v1438
        %v1440 = vand.u32 %v1105, 4294901760
        %1441 = vmatmul.f32.gmra.mxu0 %v1440
        %v1442 = vpop.f32.mrf.mxu0
        %v1443 = vadd.f32 %v1381, %v1442
        %v1444 = vand.u32 %v1108, 4294901760
        %1445 = vmatmul.f32.gmra.mxu0 %v1444
        %v1446 = vpop.f32.mrf.mxu0
        %v1447 = vadd.f32 %v1387, %v1446
        %v1448 = vand.u32 %v1111, 4294901760
        %1449 = vmatmul.f32.gmra.mxu0 %v1448
        %v1450 = vpop.f32.mrf.mxu0
        %v1451 = vadd.f32 %v1393, %v1450
        %1452 = vdwg.mxu0
        %1453 = vmatpush.msra.mxu0 0.0
        %1454 = vmatpush.msra.mxu0 0.0
        %1455 = vmatpush.msra.mxu0 0.0
        %1456 = vmatpush.msra.mxu0 0.0
        %1457 = vmatpush.msra.mxu0 0.0
        %1458 = vmatpush.msra.mxu0 0.0
        %1459 = vmatpush.msra.mxu0 0.0
        %1460 = vmatpush.msra.mxu0 0.0
        %1461 = vmatpush.msra.mxu0 0.0
        %1462 = vmatpush.msra.mxu0 0.0
        %1463 = vmatpush.msra.mxu0 0.0
        %1464 = vmatpush.msra.mxu0 0.0
        %1465 = vmatpush.msra.mxu0 0.0
        %v1466 = vand.u32 %v1114, 4294901760
        %1467 = vmatpush.msra.mxu0 %v1466
        %v1468 = vand.u32 %v657, 4294901760
        %1469 = vmatpush.msra.mxu0 %v1468
        %v1470 = vand.u32 %v656, 4294901760
        %1471 = vmatpush.msra.mxu0 %v1470
        %v1472 = vand.u32 %v1090, 4294901760
        %1473 = vmatmul.f32.gmra.mxu0 %v1472
        %v1474 = vpop.f32.mrf.mxu0
        %v1475 = vadd.f32 %v1423, %v1474
        %v1476 = vand.u32 %v1093, 4294901760
        %1477 = vmatmul.f32.gmra.mxu0 %v1476
        %v1478 = vpop.f32.mrf.mxu0
        %v1479 = vadd.f32 %v1427, %v1478
        %v1480 = vand.u32 %v1096, 4294901760
        %1481 = vmatmul.f32.gmra.mxu0 %v1480
        %v1482 = vpop.f32.mrf.mxu0
        %v1483 = vadd.f32 %v1431, %v1482
        %v1484 = vand.u32 %v1099, 4294901760
        %1485 = vmatmul.f32.gmra.mxu0 %v1484
        %v1486 = vpop.f32.mrf.mxu0
        %v1487 = vadd.f32 %v1435, %v1486
        %v1488 = vand.u32 %v1102, 4294901760
        %1489 = vmatmul.f32.gmra.mxu0 %v1488
        %v1490 = vpop.f32.mrf.mxu0
        %v1491 = vadd.f32 %v1439, %v1490
        %v1492 = vand.u32 %v1105, 4294901760
        %1493 = vmatmul.f32.gmra.mxu0 %v1492
        %v1494 = vpop.f32.mrf.mxu0
        %v1495 = vadd.f32 %v1443, %v1494
        %v1496 = vand.u32 %v1108, 4294901760
        %1497 = vmatmul.f32.gmra.mxu0 %v1496
        %v1498 = vpop.f32.mrf.mxu0
        %v1499 = vadd.f32 %v1447, %v1498
        %v1500 = vand.u32 %v1111, 4294901760
        %1501 = vmatmul.f32.gmra.mxu0 %v1500
        %v1502 = vpop.f32.mrf.mxu0
        %v1503 = vadd.f32 %v1451, %v1502
        %1504 = vdwg.mxu0
        %v1505 = vld [vmem:[%s190 + $0x2] sm:$0xff]
        %v1506 = vld [vmem:[%s190 + $0xa] sm:$0xff]
        %v1507 = vld [vmem:[%s190 + $0x1a] sm:$0xff]
        %v1508 = vld [vmem:[%s190 + $0x22] sm:$0xff]
        %v1509 = vld [vmem:[%s190 + $0x32] sm:$0xff]
        %v1510 = vld [vmem:[%s190 + $0x3a] sm:$0xff]
        %v1511 = vld [vmem:[%s190 + $0x4a] sm:$0xff]
        %v1512 = vld [vmem:[%s190 + $0x52] sm:$0xff]
        %s1513 = scalar_lea.vmem [#allocation2], 48
        %v1514 = vld [vmem:[%s1513] sm:$0xff]
        %v1515 = vld [vmem:[%s1513 + $0x8] sm:$0xff]
        %v1516 = vld [vmem:[%s1513 + $0x10] sm:$0x3f]
        %v1518 = vsel %vm671, %v1505, 0
        %v1521 = vsel %vm671, %v1506, 0
        %v1524 = vsel %vm671, %v1507, 0
        %v1527 = vsel %vm671, %v1508, 0
        %v1530 = vsel %vm671, %v1509, 0
        %v1533 = vsel %vm671, %v1510, 0
        %v1536 = vsel %vm671, %v1511, 0
        %v1539 = vsel %vm671, %v1512, 0
        %v1542 = vsel %vm696, %v1516, 0
        %1544 = vmatpush.msra.mxu0 0.0
        %1545 = vmatpush.msra.mxu0 0.0
        %1546 = vmatpush.msra.mxu0 0.0
        %1547 = vmatpush.msra.mxu0 0.0
        %1548 = vmatpush.msra.mxu0 0.0
        %1549 = vmatpush.msra.mxu0 0.0
        %1550 = vmatpush.msra.mxu0 0.0
        %1551 = vmatpush.msra.mxu0 0.0
        %1552 = vmatpush.msra.mxu0 0.0
        %1553 = vmatpush.msra.mxu0 0.0
        %1554 = vmatpush.msra.mxu0 0.0
        %1555 = vmatpush.msra.mxu0 0.0
        %1556 = vmatpush.msra.mxu0 0.0
        %v1557 = vand.u32 %v1542, 4294901760
        %1558 = vmatpush.msra.mxu0 %v1557
        %v1559 = vand.u32 %v1515, 4294901760
        %1560 = vmatpush.msra.mxu0 %v1559
        %v1561 = vand.u32 %v1514, 4294901760
        %1562 = vmatpush.msra.mxu0 %v1561
        %v1563 = vand.u32 %v1518, 4294901760
        %v1564 = vsub.f32 %v1518, %v1563
        %v1565 = vand.u32 %v1564, 4294901760
        %v1566 = vsub.f32 %v1564, %v1565
        %v1567 = vand.u32 %v1566, 4294901760
        %1568 = vmatmul.f32.gmra.mxu0 %v1567
        %v1569 = vpop.f32.mrf.mxu0
        %v1570 = vadd.f32 0.0, %v1569
        %v1571 = vand.u32 %v1521, 4294901760
        %v1572 = vsub.f32 %v1521, %v1571
        %v1573 = vand.u32 %v1572, 4294901760
        %v1574 = vsub.f32 %v1572, %v1573
        %v1575 = vand.u32 %v1574, 4294901760
        %1576 = vmatmul.f32.gmra.mxu0 %v1575
        %v1577 = vpop.f32.mrf.mxu0
        %v1578 = vadd.f32 0.0, %v1577
        %v1579 = vand.u32 %v1524, 4294901760
        %v1580 = vsub.f32 %v1524, %v1579
        %v1581 = vand.u32 %v1580, 4294901760
        %v1582 = vsub.f32 %v1580, %v1581
        %v1583 = vand.u32 %v1582, 4294901760
        %1584 = vmatmul.f32.gmra.mxu0 %v1583
        %v1585 = vpop.f32.mrf.mxu0
        %v1586 = vadd.f32 0.0, %v1585
        %v1587 = vand.u32 %v1527, 4294901760
        %v1588 = vsub.f32 %v1527, %v1587
        %v1589 = vand.u32 %v1588, 4294901760
        %v1590 = vsub.f32 %v1588, %v1589
        %v1591 = vand.u32 %v1590, 4294901760
        %1592 = vmatmul.f32.gmra.mxu0 %v1591
        %v1593 = vpop.f32.mrf.mxu0
        %v1594 = vadd.f32 0.0, %v1593
        %v1595 = vand.u32 %v1530, 4294901760
        %v1596 = vsub.f32 %v1530, %v1595
        %v1597 = vand.u32 %v1596, 4294901760
        %v1598 = vsub.f32 %v1596, %v1597
        %v1599 = vand.u32 %v1598, 4294901760
        %1600 = vmatmul.f32.gmra.mxu0 %v1599
        %v1601 = vpop.f32.mrf.mxu0
        %v1602 = vadd.f32 0.0, %v1601
        %v1603 = vand.u32 %v1533, 4294901760
        %v1604 = vsub.f32 %v1533, %v1603
        %v1605 = vand.u32 %v1604, 4294901760
        %v1606 = vsub.f32 %v1604, %v1605
        %v1607 = vand.u32 %v1606, 4294901760
        %1608 = vmatmul.f32.gmra.mxu0 %v1607
        %v1609 = vpop.f32.mrf.mxu0
        %v1610 = vadd.f32 0.0, %v1609
        %v1611 = vand.u32 %v1536, 4294901760
        %v1612 = vsub.f32 %v1536, %v1611
        %v1613 = vand.u32 %v1612, 4294901760
        %v1614 = vsub.f32 %v1612, %v1613
        %v1615 = vand.u32 %v1614, 4294901760
        %1616 = vmatmul.f32.gmra.mxu0 %v1615
        %v1617 = vpop.f32.mrf.mxu0
        %v1618 = vadd.f32 0.0, %v1617
        %v1619 = vand.u32 %v1539, 4294901760
        %v1620 = vsub.f32 %v1539, %v1619
        %v1621 = vand.u32 %v1620, 4294901760
        %v1622 = vsub.f32 %v1620, %v1621
        %v1623 = vand.u32 %v1622, 4294901760
        %1624 = vmatmul.f32.gmra.mxu0 %v1623
        %v1625 = vpop.f32.mrf.mxu0
        %v1626 = vadd.f32 0.0, %v1625
        %1627 = vdwg.mxu0
        %1628 = vmatpush.msra.mxu0 0.0
        %1629 = vmatpush.msra.mxu0 0.0
        %1630 = vmatpush.msra.mxu0 0.0
        %1631 = vmatpush.msra.mxu0 0.0
        %1632 = vmatpush.msra.mxu0 0.0
        %1633 = vmatpush.msra.mxu0 0.0
        %1634 = vmatpush.msra.mxu0 0.0
        %1635 = vmatpush.msra.mxu0 0.0
        %1636 = vmatpush.msra.mxu0 0.0
        %1637 = vmatpush.msra.mxu0 0.0
        %1638 = vmatpush.msra.mxu0 0.0
        %1639 = vmatpush.msra.mxu0 0.0
        %1640 = vmatpush.msra.mxu0 0.0
        %v1641 = vand.u32 %v1542, 4294901760
        %v1642 = vsub.f32 %v1542, %v1641
        %v1643 = vand.u32 %v1642, 4294901760
        %v1644 = vsub.f32 %v1642, %v1643
        %v1645 = vand.u32 %v1644, 4294901760
        %1646 = vmatpush.msra.mxu0 %v1645
        %v1647 = vand.u32 %v1515, 4294901760
        %v1648 = vsub.f32 %v1515, %v1647
        %v1649 = vand.u32 %v1648, 4294901760
        %v1650 = vsub.f32 %v1648, %v1649
        %v1651 = vand.u32 %v1650, 4294901760
        %1652 = vmatpush.msra.mxu0 %v1651
        %v1653 = vand.u32 %v1514, 4294901760
        %v1654 = vsub.f32 %v1514, %v1653
        %v1655 = vand.u32 %v1654, 4294901760
        %v1656 = vsub.f32 %v1654, %v1655
        %v1657 = vand.u32 %v1656, 4294901760
        %1658 = vmatpush.msra.mxu0 %v1657
        %v1659 = vand.u32 %v1518, 4294901760
        %1660 = vmatmul.f32.gmra.mxu0 %v1659
        %v1661 = vpop.f32.mrf.mxu0
        %v1662 = vadd.f32 %v1570, %v1661
        %v1663 = vand.u32 %v1521, 4294901760
        %1664 = vmatmul.f32.gmra.mxu0 %v1663
        %v1665 = vpop.f32.mrf.mxu0
        %v1666 = vadd.f32 %v1578, %v1665
        %v1667 = vand.u32 %v1524, 4294901760
        %1668 = vmatmul.f32.gmra.mxu0 %v1667
        %v1669 = vpop.f32.mrf.mxu0
        %v1670 = vadd.f32 %v1586, %v1669
        %v1671 = vand.u32 %v1527, 4294901760
        %1672 = vmatmul.f32.gmra.mxu0 %v1671
        %v1673 = vpop.f32.mrf.mxu0
        %v1674 = vadd.f32 %v1594, %v1673
        %v1675 = vand.u32 %v1530, 4294901760
        %1676 = vmatmul.f32.gmra.mxu0 %v1675
        %v1677 = vpop.f32.mrf.mxu0
        %v1678 = vadd.f32 %v1602, %v1677
        %v1679 = vand.u32 %v1533, 4294901760
        %1680 = vmatmul.f32.gmra.mxu0 %v1679
        %v1681 = vpop.f32.mrf.mxu0
        %v1682 = vadd.f32 %v1610, %v1681
        %v1683 = vand.u32 %v1536, 4294901760
        %1684 = vmatmul.f32.gmra.mxu0 %v1683
        %v1685 = vpop.f32.mrf.mxu0
        %v1686 = vadd.f32 %v1618, %v1685
        %v1687 = vand.u32 %v1539, 4294901760
        %1688 = vmatmul.f32.gmra.mxu0 %v1687
        %v1689 = vpop.f32.mrf.mxu0
        %v1690 = vadd.f32 %v1626, %v1689
        %1691 = vdwg.mxu0
        %1692 = vmatpush.msra.mxu0 0.0
        %1693 = vmatpush.msra.mxu0 0.0
        %1694 = vmatpush.msra.mxu0 0.0
        %1695 = vmatpush.msra.mxu0 0.0
        %1696 = vmatpush.msra.mxu0 0.0
        %1697 = vmatpush.msra.mxu0 0.0
        %1698 = vmatpush.msra.mxu0 0.0
        %1699 = vmatpush.msra.mxu0 0.0
        %1700 = vmatpush.msra.mxu0 0.0
        %1701 = vmatpush.msra.mxu0 0.0
        %1702 = vmatpush.msra.mxu0 0.0
        %1703 = vmatpush.msra.mxu0 0.0
        %1704 = vmatpush.msra.mxu0 0.0
        %v1705 = vand.u32 %v1542, 4294901760
        %v1706 = vsub.f32 %v1542, %v1705
        %1707 = vmatpush.msra.mxu0 %v1706
        %v1708 = vand.u32 %v1515, 4294901760
        %v1709 = vsub.f32 %v1515, %v1708
        %1710 = vmatpush.msra.mxu0 %v1709
        %v1711 = vand.u32 %v1514, 4294901760
        %v1712 = vsub.f32 %v1514, %v1711
        %1713 = vmatpush.msra.mxu0 %v1712
        %v1714 = vand.u32 %v1518, 4294901760
        %v1715 = vsub.f32 %v1518, %v1714
        %1716 = vmatmul.f32.gmra.mxu0 %v1715
        %v1717 = vpop.f32.mrf.mxu0
        %v1718 = vadd.f32 %v1662, %v1717
        %v1719 = vand.u32 %v1521, 4294901760
        %v1720 = vsub.f32 %v1521, %v1719
        %1721 = vmatmul.f32.gmra.mxu0 %v1720
        %v1722 = vpop.f32.mrf.mxu0
        %v1723 = vadd.f32 %v1666, %v1722
        %v1724 = vand.u32 %v1524, 4294901760
        %v1725 = vsub.f32 %v1524, %v1724
        %1726 = vmatmul.f32.gmra.mxu0 %v1725
        %v1727 = vpop.f32.mrf.mxu0
        %v1728 = vadd.f32 %v1670, %v1727
        %v1729 = vand.u32 %v1527, 4294901760
        %v1730 = vsub.f32 %v1527, %v1729
        %1731 = vmatmul.f32.gmra.mxu0 %v1730
        %v1732 = vpop.f32.mrf.mxu0
        %v1733 = vadd.f32 %v1674, %v1732
        %v1734 = vand.u32 %v1530, 4294901760
        %v1735 = vsub.f32 %v1530, %v1734
        %1736 = vmatmul.f32.gmra.mxu0 %v1735
        %v1737 = vpop.f32.mrf.mxu0
        %v1738 = vadd.f32 %v1678, %v1737
        %v1739 = vand.u32 %v1533, 4294901760
        %v1740 = vsub.f32 %v1533, %v1739
        %1741 = vmatmul.f32.gmra.mxu0 %v1740
        %v1742 = vpop.f32.mrf.mxu0
        %v1743 = vadd.f32 %v1682, %v1742
        %v1744 = vand.u32 %v1536, 4294901760
        %v1745 = vsub.f32 %v1536, %v1744
        %1746 = vmatmul.f32.gmra.mxu0 %v1745
        %v1747 = vpop.f32.mrf.mxu0
        %v1748 = vadd.f32 %v1686, %v1747
        %v1749 = vand.u32 %v1539, 4294901760
        %v1750 = vsub.f32 %v1539, %v1749
        %1751 = vmatmul.f32.gmra.mxu0 %v1750
        %v1752 = vpop.f32.mrf.mxu0
        %v1753 = vadd.f32 %v1690, %v1752
        %1754 = vdwg.mxu0
        %1755 = vmatpush.msra.mxu0 0.0
        %1756 = vmatpush.msra.mxu0 0.0
        %1757 = vmatpush.msra.mxu0 0.0
        %1758 = vmatpush.msra.mxu0 0.0
        %1759 = vmatpush.msra.mxu0 0.0
        %1760 = vmatpush.msra.mxu0 0.0
        %1761 = vmatpush.msra.mxu0 0.0
        %1762 = vmatpush.msra.mxu0 0.0
        %1763 = vmatpush.msra.mxu0 0.0
        %1764 = vmatpush.msra.mxu0 0.0
        %1765 = vmatpush.msra.mxu0 0.0
        %1766 = vmatpush.msra.mxu0 0.0
        %1767 = vmatpush.msra.mxu0 0.0
        %v1768 = vand.u32 %v1542, 4294901760
        %1769 = vmatpush.msra.mxu0 %v1768
        %v1770 = vand.u32 %v1515, 4294901760
        %1771 = vmatpush.msra.mxu0 %v1770
        %v1772 = vand.u32 %v1514, 4294901760
        %1773 = vmatpush.msra.mxu0 %v1772
        %v1774 = vand.u32 %v1518, 4294901760
        %v1775 = vsub.f32 %v1518, %v1774
        %v1776 = vand.u32 %v1775, 4294901760
        %1777 = vmatmul.f32.gmra.mxu0 %v1776
        %v1778 = vpop.f32.mrf.mxu0
        %v1779 = vadd.f32 %v1718, %v1778
        %v1780 = vand.u32 %v1521, 4294901760
        %v1781 = vsub.f32 %v1521, %v1780
        %v1782 = vand.u32 %v1781, 4294901760
        %1783 = vmatmul.f32.gmra.mxu0 %v1782
        %v1784 = vpop.f32.mrf.mxu0
        %v1785 = vadd.f32 %v1723, %v1784
        %v1786 = vand.u32 %v1524, 4294901760
        %v1787 = vsub.f32 %v1524, %v1786
        %v1788 = vand.u32 %v1787, 4294901760
        %1789 = vmatmul.f32.gmra.mxu0 %v1788
        %v1790 = vpop.f32.mrf.mxu0
        %v1791 = vadd.f32 %v1728, %v1790
        %v1792 = vand.u32 %v1527, 4294901760
        %v1793 = vsub.f32 %v1527, %v1792
        %v1794 = vand.u32 %v1793, 4294901760
        %1795 = vmatmul.f32.gmra.mxu0 %v1794
        %v1796 = vpop.f32.mrf.mxu0
        %v1797 = vadd.f32 %v1733, %v1796
        %v1798 = vand.u32 %v1530, 4294901760
        %v1799 = vsub.f32 %v1530, %v1798
        %v1800 = vand.u32 %v1799, 4294901760
        %1801 = vmatmul.f32.gmra.mxu0 %v1800
        %v1802 = vpop.f32.mrf.mxu0
        %v1803 = vadd.f32 %v1738, %v1802
        %v1804 = vand.u32 %v1533, 4294901760
        %v1805 = vsub.f32 %v1533, %v1804
        %v1806 = vand.u32 %v1805, 4294901760
        %1807 = vmatmul.f32.gmra.mxu0 %v1806
        %v1808 = vpop.f32.mrf.mxu0
        %v1809 = vadd.f32 %v1743, %v1808
        %v1810 = vand.u32 %v1536, 4294901760
        %v1811 = vsub.f32 %v1536, %v1810
        %v1812 = vand.u32 %v1811, 4294901760
        %1813 = vmatmul.f32.gmra.mxu0 %v1812
        %v1814 = vpop.f32.mrf.mxu0
        %v1815 = vadd.f32 %v1748, %v1814
        %v1816 = vand.u32 %v1539, 4294901760
        %v1817 = vsub.f32 %v1539, %v1816
        %v1818 = vand.u32 %v1817, 4294901760
        %1819 = vmatmul.f32.gmra.mxu0 %v1818
        %v1820 = vpop.f32.mrf.mxu0
        %v1821 = vadd.f32 %v1753, %v1820
        %1822 = vdwg.mxu0
        %1823 = vmatpush.msra.mxu0 0.0
        %1824 = vmatpush.msra.mxu0 0.0
        %1825 = vmatpush.msra.mxu0 0.0
        %1826 = vmatpush.msra.mxu0 0.0
        %1827 = vmatpush.msra.mxu0 0.0
        %1828 = vmatpush.msra.mxu0 0.0
        %1829 = vmatpush.msra.mxu0 0.0
        %1830 = vmatpush.msra.mxu0 0.0
        %1831 = vmatpush.msra.mxu0 0.0
        %1832 = vmatpush.msra.mxu0 0.0
        %1833 = vmatpush.msra.mxu0 0.0
        %1834 = vmatpush.msra.mxu0 0.0
        %1835 = vmatpush.msra.mxu0 0.0
        %v1836 = vand.u32 %v1542, 4294901760
        %v1837 = vsub.f32 %v1542, %v1836
        %v1838 = vand.u32 %v1837, 4294901760
        %1839 = vmatpush.msra.mxu0 %v1838
        %v1840 = vand.u32 %v1515, 4294901760
        %v1841 = vsub.f32 %v1515, %v1840
        %v1842 = vand.u32 %v1841, 4294901760
        %1843 = vmatpush.msra.mxu0 %v1842
        %v1844 = vand.u32 %v1514, 4294901760
        %v1845 = vsub.f32 %v1514, %v1844
        %v1846 = vand.u32 %v1845, 4294901760
        %1847 = vmatpush.msra.mxu0 %v1846
        %v1848 = vand.u32 %v1518, 4294901760
        %1849 = vmatmul.f32.gmra.mxu0 %v1848
        %v1850 = vpop.f32.mrf.mxu0
        %v1851 = vadd.f32 %v1779, %v1850
        %v1852 = vand.u32 %v1521, 4294901760
        %1853 = vmatmul.f32.gmra.mxu0 %v1852
        %v1854 = vpop.f32.mrf.mxu0
        %v1855 = vadd.f32 %v1785, %v1854
        %v1856 = vand.u32 %v1524, 4294901760
        %1857 = vmatmul.f32.gmra.mxu0 %v1856
        %v1858 = vpop.f32.mrf.mxu0
        %v1859 = vadd.f32 %v1791, %v1858
        %v1860 = vand.u32 %v1527, 4294901760
        %1861 = vmatmul.f32.gmra.mxu0 %v1860
        %v1862 = vpop.f32.mrf.mxu0
        %v1863 = vadd.f32 %v1797, %v1862
        %v1864 = vand.u32 %v1530, 4294901760
        %1865 = vmatmul.f32.gmra.mxu0 %v1864
        %v1866 = vpop.f32.mrf.mxu0
        %v1867 = vadd.f32 %v1803, %v1866
        %v1868 = vand.u32 %v1533, 4294901760
        %1869 = vmatmul.f32.gmra.mxu0 %v1868
        %v1870 = vpop.f32.mrf.mxu0
        %v1871 = vadd.f32 %v1809, %v1870
        %v1872 = vand.u32 %v1536, 4294901760
        %1873 = vmatmul.f32.gmra.mxu0 %v1872
        %v1874 = vpop.f32.mrf.mxu0
        %v1875 = vadd.f32 %v1815, %v1874
        %v1876 = vand.u32 %v1539, 4294901760
        %1877 = vmatmul.f32.gmra.mxu0 %v1876
        %v1878 = vpop.f32.mrf.mxu0
        %v1879 = vadd.f32 %v1821, %v1878
        %1880 = vdwg.mxu0
        %1881 = vmatpush.msra.mxu0 0.0
        %1882 = vmatpush.msra.mxu0 0.0
        %1883 = vmatpush.msra.mxu0 0.0
        %1884 = vmatpush.msra.mxu0 0.0
        %1885 = vmatpush.msra.mxu0 0.0
        %1886 = vmatpush.msra.mxu0 0.0
        %1887 = vmatpush.msra.mxu0 0.0
        %1888 = vmatpush.msra.mxu0 0.0
        %1889 = vmatpush.msra.mxu0 0.0
        %1890 = vmatpush.msra.mxu0 0.0
        %1891 = vmatpush.msra.mxu0 0.0
        %1892 = vmatpush.msra.mxu0 0.0
        %1893 = vmatpush.msra.mxu0 0.0
        %v1894 = vand.u32 %v1542, 4294901760
        %1895 = vmatpush.msra.mxu0 %v1894
        %v1896 = vand.u32 %v1515, 4294901760
        %1897 = vmatpush.msra.mxu0 %v1896
        %v1898 = vand.u32 %v1514, 4294901760
        %1899 = vmatpush.msra.mxu0 %v1898
        %v1900 = vand.u32 %v1518, 4294901760
        %1901 = vmatmul.f32.gmra.mxu0 %v1900
        %v1902 = vpop.f32.mrf.mxu0
        %v1903 = vadd.f32 %v1851, %v1902
        %v1904 = vand.u32 %v1521, 4294901760
        %1905 = vmatmul.f32.gmra.mxu0 %v1904
        %v1906 = vpop.f32.mrf.mxu0
        %v1907 = vadd.f32 %v1855, %v1906
        %v1908 = vand.u32 %v1524, 4294901760
        %1909 = vmatmul.f32.gmra.mxu0 %v1908
        %v1910 = vpop.f32.mrf.mxu0
        %v1911 = vadd.f32 %v1859, %v1910
        %v1912 = vand.u32 %v1527, 4294901760
        %1913 = vmatmul.f32.gmra.mxu0 %v1912
        %v1914 = vpop.f32.mrf.mxu0
        %v1915 = vadd.f32 %v1863, %v1914
        %v1916 = vand.u32 %v1530, 4294901760
        %1917 = vmatmul.f32.gmra.mxu0 %v1916
        %v1918 = vpop.f32.mrf.mxu0
        %v1919 = vadd.f32 %v1867, %v1918
        %v1920 = vand.u32 %v1533, 4294901760
        %1921 = vmatmul.f32.gmra.mxu0 %v1920
        %v1922 = vpop.f32.mrf.mxu0
        %v1923 = vadd.f32 %v1871, %v1922
        %v1924 = vand.u32 %v1536, 4294901760
        %1925 = vmatmul.f32.gmra.mxu0 %v1924
        %v1926 = vpop.f32.mrf.mxu0
        %v1927 = vadd.f32 %v1875, %v1926
        %v1928 = vand.u32 %v1539, 4294901760
        %1929 = vmatmul.f32.gmra.mxu0 %v1928
        %v1930 = vpop.f32.mrf.mxu0
        %v1931 = vadd.f32 %v1879, %v1930
        %1932 = vdwg.mxu0
        %v1933 = vadd.f32 %v1475, %v1903
        %v1934 = vadd.f32 %v1479, %v1907
        %v1935 = vadd.f32 %v1483, %v1911
        %v1936 = vadd.f32 %v1487, %v1915
        %v1937 = vadd.f32 %v1491, %v1919
        %v1938 = vadd.f32 %v1495, %v1923
        %v1939 = vadd.f32 %v1499, %v1927
        %v1940 = vadd.f32 %v1503, %v1931
        %v1941 = vld [vmem:[%s190 + $0x3] sm:$0xff]
        %v1942 = vld [vmem:[%s190 + $0xb] sm:$0xff]
        %v1943 = vld [vmem:[%s190 + $0x1b] sm:$0xff]
        %v1944 = vld [vmem:[%s190 + $0x23] sm:$0xff]
        %v1945 = vld [vmem:[%s190 + $0x33] sm:$0xff]
        %v1946 = vld [vmem:[%s190 + $0x3b] sm:$0xff]
        %v1947 = vld [vmem:[%s190 + $0x4b] sm:$0xff]
        %v1948 = vld [vmem:[%s190 + $0x53] sm:$0xff]
        %s1949 = scalar_lea.vmem [#allocation2], 72
        %v1950 = vld [vmem:[%s1949] sm:$0xff]
        %v1951 = vld [vmem:[%s1949 + $0x8] sm:$0xff]
        %v1952 = vld [vmem:[%s1949 + $0x10] sm:$0x3f]
        %v1954 = vsel %vm671, %v1941, 0
        %v1957 = vsel %vm671, %v1942, 0
        %v1960 = vsel %vm671, %v1943, 0
        %v1963 = vsel %vm671, %v1944, 0
        %v1966 = vsel %vm671, %v1945, 0
        %v1969 = vsel %vm671, %v1946, 0
        %v1972 = vsel %vm671, %v1947, 0
        %v1975 = vsel %vm671, %v1948, 0
        %v1978 = vsel %vm696, %v1952, 0
        %1980 = vmatpush.msra.mxu0 0.0
        %1981 = vmatpush.msra.mxu0 0.0
        %1982 = vmatpush.msra.mxu0 0.0
        %1983 = vmatpush.msra.mxu0 0.0
        %1984 = vmatpush.msra.mxu0 0.0
        %1985 = vmatpush.msra.mxu0 0.0
        %1986 = vmatpush.msra.mxu0 0.0
        %1987 = vmatpush.msra.mxu0 0.0
        %1988 = vmatpush.msra.mxu0 0.0
        %1989 = vmatpush.msra.mxu0 0.0
        %1990 = vmatpush.msra.mxu0 0.0
        %1991 = vmatpush.msra.mxu0 0.0
        %1992 = vmatpush.msra.mxu0 0.0
        %v1993 = vand.u32 %v1978, 4294901760
        %1994 = vmatpush.msra.mxu0 %v1993
        %v1995 = vand.u32 %v1951, 4294901760
        %1996 = vmatpush.msra.mxu0 %v1995
        %v1997 = vand.u32 %v1950, 4294901760
        %1998 = vmatpush.msra.mxu0 %v1997
        %v1999 = vand.u32 %v1954, 4294901760
        %v2000 = vsub.f32 %v1954, %v1999
        %v2001 = vand.u32 %v2000, 4294901760
        %v2002 = vsub.f32 %v2000, %v2001
        %v2003 = vand.u32 %v2002, 4294901760
        %2004 = vmatmul.f32.gmra.mxu0 %v2003
        %v2005 = vpop.f32.mrf.mxu0
        %v2006 = vadd.f32 0.0, %v2005
        %v2007 = vand.u32 %v1957, 4294901760
        %v2008 = vsub.f32 %v1957, %v2007
        %v2009 = vand.u32 %v2008, 4294901760
        %v2010 = vsub.f32 %v2008, %v2009
        %v2011 = vand.u32 %v2010, 4294901760
        %2012 = vmatmul.f32.gmra.mxu0 %v2011
        %v2013 = vpop.f32.mrf.mxu0
        %v2014 = vadd.f32 0.0, %v2013
        %v2015 = vand.u32 %v1960, 4294901760
        %v2016 = vsub.f32 %v1960, %v2015
        %v2017 = vand.u32 %v2016, 4294901760
        %v2018 = vsub.f32 %v2016, %v2017
        %v2019 = vand.u32 %v2018, 4294901760
        %2020 = vmatmul.f32.gmra.mxu0 %v2019
        %v2021 = vpop.f32.mrf.mxu0
        %v2022 = vadd.f32 0.0, %v2021
        %v2023 = vand.u32 %v1963, 4294901760
        %v2024 = vsub.f32 %v1963, %v2023
        %v2025 = vand.u32 %v2024, 4294901760
        %v2026 = vsub.f32 %v2024, %v2025
        %v2027 = vand.u32 %v2026, 4294901760
        %2028 = vmatmul.f32.gmra.mxu0 %v2027
        %v2029 = vpop.f32.mrf.mxu0
        %v2030 = vadd.f32 0.0, %v2029
        %v2031 = vand.u32 %v1966, 4294901760
        %v2032 = vsub.f32 %v1966, %v2031
        %v2033 = vand.u32 %v2032, 4294901760
        %v2034 = vsub.f32 %v2032, %v2033
        %v2035 = vand.u32 %v2034, 4294901760
        %2036 = vmatmul.f32.gmra.mxu0 %v2035
        %v2037 = vpop.f32.mrf.mxu0
        %v2038 = vadd.f32 0.0, %v2037
        %v2039 = vand.u32 %v1969, 4294901760
        %v2040 = vsub.f32 %v1969, %v2039
        %v2041 = vand.u32 %v2040, 4294901760
        %v2042 = vsub.f32 %v2040, %v2041
        %v2043 = vand.u32 %v2042, 4294901760
        %2044 = vmatmul.f32.gmra.mxu0 %v2043
        %v2045 = vpop.f32.mrf.mxu0
        %v2046 = vadd.f32 0.0, %v2045
        %v2047 = vand.u32 %v1972, 4294901760
        %v2048 = vsub.f32 %v1972, %v2047
        %v2049 = vand.u32 %v2048, 4294901760
        %v2050 = vsub.f32 %v2048, %v2049
        %v2051 = vand.u32 %v2050, 4294901760
        %2052 = vmatmul.f32.gmra.mxu0 %v2051
        %v2053 = vpop.f32.mrf.mxu0
        %v2054 = vadd.f32 0.0, %v2053
        %v2055 = vand.u32 %v1975, 4294901760
        %v2056 = vsub.f32 %v1975, %v2055
        %v2057 = vand.u32 %v2056, 4294901760
        %v2058 = vsub.f32 %v2056, %v2057
        %v2059 = vand.u32 %v2058, 4294901760
        %2060 = vmatmul.f32.gmra.mxu0 %v2059
        %v2061 = vpop.f32.mrf.mxu0
        %v2062 = vadd.f32 0.0, %v2061
        %2063 = vdwg.mxu0
        %2064 = vmatpush.msra.mxu0 0.0
        %2065 = vmatpush.msra.mxu0 0.0
        %2066 = vmatpush.msra.mxu0 0.0
        %2067 = vmatpush.msra.mxu0 0.0
        %2068 = vmatpush.msra.mxu0 0.0
        %2069 = vmatpush.msra.mxu0 0.0
        %2070 = vmatpush.msra.mxu0 0.0
        %2071 = vmatpush.msra.mxu0 0.0
        %2072 = vmatpush.msra.mxu0 0.0
        %2073 = vmatpush.msra.mxu0 0.0
        %2074 = vmatpush.msra.mxu0 0.0
        %2075 = vmatpush.msra.mxu0 0.0
        %2076 = vmatpush.msra.mxu0 0.0
        %v2077 = vand.u32 %v1978, 4294901760
        %v2078 = vsub.f32 %v1978, %v2077
        %v2079 = vand.u32 %v2078, 4294901760
        %v2080 = vsub.f32 %v2078, %v2079
        %v2081 = vand.u32 %v2080, 4294901760
        %2082 = vmatpush.msra.mxu0 %v2081
        %v2083 = vand.u32 %v1951, 4294901760
        %v2084 = vsub.f32 %v1951, %v2083
        %v2085 = vand.u32 %v2084, 4294901760
        %v2086 = vsub.f32 %v2084, %v2085
        %v2087 = vand.u32 %v2086, 4294901760
        %2088 = vmatpush.msra.mxu0 %v2087
        %v2089 = vand.u32 %v1950, 4294901760
        %v2090 = vsub.f32 %v1950, %v2089
        %v2091 = vand.u32 %v2090, 4294901760
        %v2092 = vsub.f32 %v2090, %v2091
        %v2093 = vand.u32 %v2092, 4294901760
        %2094 = vmatpush.msra.mxu0 %v2093
        %v2095 = vand.u32 %v1954, 4294901760
        %2096 = vmatmul.f32.gmra.mxu0 %v2095
        %v2097 = vpop.f32.mrf.mxu0
        %v2098 = vadd.f32 %v2006, %v2097
        %v2099 = vand.u32 %v1957, 4294901760
        %2100 = vmatmul.f32.gmra.mxu0 %v2099
        %v2101 = vpop.f32.mrf.mxu0
        %v2102 = vadd.f32 %v2014, %v2101
        %v2103 = vand.u32 %v1960, 4294901760
        %2104 = vmatmul.f32.gmra.mxu0 %v2103
        %v2105 = vpop.f32.mrf.mxu0
        %v2106 = vadd.f32 %v2022, %v2105
        %v2107 = vand.u32 %v1963, 4294901760
        %2108 = vmatmul.f32.gmra.mxu0 %v2107
        %v2109 = vpop.f32.mrf.mxu0
        %v2110 = vadd.f32 %v2030, %v2109
        %v2111 = vand.u32 %v1966, 4294901760
        %2112 = vmatmul.f32.gmra.mxu0 %v2111
        %v2113 = vpop.f32.mrf.mxu0
        %v2114 = vadd.f32 %v2038, %v2113
        %v2115 = vand.u32 %v1969, 4294901760
        %2116 = vmatmul.f32.gmra.mxu0 %v2115
        %v2117 = vpop.f32.mrf.mxu0
        %v2118 = vadd.f32 %v2046, %v2117
        %v2119 = vand.u32 %v1972, 4294901760
        %2120 = vmatmul.f32.gmra.mxu0 %v2119
        %v2121 = vpop.f32.mrf.mxu0
        %v2122 = vadd.f32 %v2054, %v2121
        %v2123 = vand.u32 %v1975, 4294901760
        %2124 = vmatmul.f32.gmra.mxu0 %v2123
        %v2125 = vpop.f32.mrf.mxu0
        %v2126 = vadd.f32 %v2062, %v2125
        %2127 = vdwg.mxu0
        %2128 = vmatpush.msra.mxu0 0.0
        %2129 = vmatpush.msra.mxu0 0.0
        %2130 = vmatpush.msra.mxu0 0.0
        %2131 = vmatpush.msra.mxu0 0.0
        %2132 = vmatpush.msra.mxu0 0.0
        %2133 = vmatpush.msra.mxu0 0.0
        %2134 = vmatpush.msra.mxu0 0.0
        %2135 = vmatpush.msra.mxu0 0.0
        %2136 = vmatpush.msra.mxu0 0.0
        %2137 = vmatpush.msra.mxu0 0.0
        %2138 = vmatpush.msra.mxu0 0.0
        %2139 = vmatpush.msra.mxu0 0.0
        %2140 = vmatpush.msra.mxu0 0.0
        %v2141 = vand.u32 %v1978, 4294901760
        %v2142 = vsub.f32 %v1978, %v2141
        %2143 = vmatpush.msra.mxu0 %v2142
        %v2144 = vand.u32 %v1951, 4294901760
        %v2145 = vsub.f32 %v1951, %v2144
        %2146 = vmatpush.msra.mxu0 %v2145
        %v2147 = vand.u32 %v1950, 4294901760
        %v2148 = vsub.f32 %v1950, %v2147
        %2149 = vmatpush.msra.mxu0 %v2148
        %v2150 = vand.u32 %v1954, 4294901760
        %v2151 = vsub.f32 %v1954, %v2150
        %2152 = vmatmul.f32.gmra.mxu0 %v2151
        %v2153 = vpop.f32.mrf.mxu0
        %v2154 = vadd.f32 %v2098, %v2153
        %v2155 = vand.u32 %v1957, 4294901760
        %v2156 = vsub.f32 %v1957, %v2155
        %2157 = vmatmul.f32.gmra.mxu0 %v2156
        %v2158 = vpop.f32.mrf.mxu0
        %v2159 = vadd.f32 %v2102, %v2158
        %v2160 = vand.u32 %v1960, 4294901760
        %v2161 = vsub.f32 %v1960, %v2160
        %2162 = vmatmul.f32.gmra.mxu0 %v2161
        %v2163 = vpop.f32.mrf.mxu0
        %v2164 = vadd.f32 %v2106, %v2163
        %v2165 = vand.u32 %v1963, 4294901760
        %v2166 = vsub.f32 %v1963, %v2165
        %2167 = vmatmul.f32.gmra.mxu0 %v2166
        %v2168 = vpop.f32.mrf.mxu0
        %v2169 = vadd.f32 %v2110, %v2168
        %v2170 = vand.u32 %v1966, 4294901760
        %v2171 = vsub.f32 %v1966, %v2170
        %2172 = vmatmul.f32.gmra.mxu0 %v2171
        %v2173 = vpop.f32.mrf.mxu0
        %v2174 = vadd.f32 %v2114, %v2173
        %v2175 = vand.u32 %v1969, 4294901760
        %v2176 = vsub.f32 %v1969, %v2175
        %2177 = vmatmul.f32.gmra.mxu0 %v2176
        %v2178 = vpop.f32.mrf.mxu0
        %v2179 = vadd.f32 %v2118, %v2178
        %v2180 = vand.u32 %v1972, 4294901760
        %v2181 = vsub.f32 %v1972, %v2180
        %2182 = vmatmul.f32.gmra.mxu0 %v2181
        %v2183 = vpop.f32.mrf.mxu0
        %v2184 = vadd.f32 %v2122, %v2183
        %v2185 = vand.u32 %v1975, 4294901760
        %v2186 = vsub.f32 %v1975, %v2185
        %2187 = vmatmul.f32.gmra.mxu0 %v2186
        %v2188 = vpop.f32.mrf.mxu0
        %v2189 = vadd.f32 %v2126, %v2188
        %2190 = vdwg.mxu0
        %2191 = vmatpush.msra.mxu0 0.0
        %2192 = vmatpush.msra.mxu0 0.0
        %2193 = vmatpush.msra.mxu0 0.0
        %2194 = vmatpush.msra.mxu0 0.0
        %2195 = vmatpush.msra.mxu0 0.0
        %2196 = vmatpush.msra.mxu0 0.0
        %2197 = vmatpush.msra.mxu0 0.0
        %2198 = vmatpush.msra.mxu0 0.0
        %2199 = vmatpush.msra.mxu0 0.0
        %2200 = vmatpush.msra.mxu0 0.0
        %2201 = vmatpush.msra.mxu0 0.0
        %2202 = vmatpush.msra.mxu0 0.0
        %2203 = vmatpush.msra.mxu0 0.0
        %v2204 = vand.u32 %v1978, 4294901760
        %2205 = vmatpush.msra.mxu0 %v2204
        %v2206 = vand.u32 %v1951, 4294901760
        %2207 = vmatpush.msra.mxu0 %v2206
        %v2208 = vand.u32 %v1950, 4294901760
        %2209 = vmatpush.msra.mxu0 %v2208
        %v2210 = vand.u32 %v1954, 4294901760
        %v2211 = vsub.f32 %v1954, %v2210
        %v2212 = vand.u32 %v2211, 4294901760
        %2213 = vmatmul.f32.gmra.mxu0 %v2212
        %v2214 = vpop.f32.mrf.mxu0
        %v2215 = vadd.f32 %v2154, %v2214
        %v2216 = vand.u32 %v1957, 4294901760
        %v2217 = vsub.f32 %v1957, %v2216
        %v2218 = vand.u32 %v2217, 4294901760
        %2219 = vmatmul.f32.gmra.mxu0 %v2218
        %v2220 = vpop.f32.mrf.mxu0
        %v2221 = vadd.f32 %v2159, %v2220
        %v2222 = vand.u32 %v1960, 4294901760
        %v2223 = vsub.f32 %v1960, %v2222
        %v2224 = vand.u32 %v2223, 4294901760
        %2225 = vmatmul.f32.gmra.mxu0 %v2224
        %v2226 = vpop.f32.mrf.mxu0
        %v2227 = vadd.f32 %v2164, %v2226
        %v2228 = vand.u32 %v1963, 4294901760
        %v2229 = vsub.f32 %v1963, %v2228
        %v2230 = vand.u32 %v2229, 4294901760
        %2231 = vmatmul.f32.gmra.mxu0 %v2230
        %v2232 = vpop.f32.mrf.mxu0
        %v2233 = vadd.f32 %v2169, %v2232
        %v2234 = vand.u32 %v1966, 4294901760
        %v2235 = vsub.f32 %v1966, %v2234
        %v2236 = vand.u32 %v2235, 4294901760
        %2237 = vmatmul.f32.gmra.mxu0 %v2236
        %v2238 = vpop.f32.mrf.mxu0
        %v2239 = vadd.f32 %v2174, %v2238
        %v2240 = vand.u32 %v1969, 4294901760
        %v2241 = vsub.f32 %v1969, %v2240
        %v2242 = vand.u32 %v2241, 4294901760
        %2243 = vmatmul.f32.gmra.mxu0 %v2242
        %v2244 = vpop.f32.mrf.mxu0
        %v2245 = vadd.f32 %v2179, %v2244
        %v2246 = vand.u32 %v1972, 4294901760
        %v2247 = vsub.f32 %v1972, %v2246
        %v2248 = vand.u32 %v2247, 4294901760
        %2249 = vmatmul.f32.gmra.mxu0 %v2248
        %v2250 = vpop.f32.mrf.mxu0
        %v2251 = vadd.f32 %v2184, %v2250
        %v2252 = vand.u32 %v1975, 4294901760
        %v2253 = vsub.f32 %v1975, %v2252
        %v2254 = vand.u32 %v2253, 4294901760
        %2255 = vmatmul.f32.gmra.mxu0 %v2254
        %v2256 = vpop.f32.mrf.mxu0
        %v2257 = vadd.f32 %v2189, %v2256
        %2258 = vdwg.mxu0
        %2259 = vmatpush.msra.mxu0 0.0
        %2260 = vmatpush.msra.mxu0 0.0
        %2261 = vmatpush.msra.mxu0 0.0
        %2262 = vmatpush.msra.mxu0 0.0
        %2263 = vmatpush.msra.mxu0 0.0
        %2264 = vmatpush.msra.mxu0 0.0
        %2265 = vmatpush.msra.mxu0 0.0
        %2266 = vmatpush.msra.mxu0 0.0
        %2267 = vmatpush.msra.mxu0 0.0
        %2268 = vmatpush.msra.mxu0 0.0
        %2269 = vmatpush.msra.mxu0 0.0
        %2270 = vmatpush.msra.mxu0 0.0
        %2271 = vmatpush.msra.mxu0 0.0
        %v2272 = vand.u32 %v1978, 4294901760
        %v2273 = vsub.f32 %v1978, %v2272
        %v2274 = vand.u32 %v2273, 4294901760
        %2275 = vmatpush.msra.mxu0 %v2274
        %v2276 = vand.u32 %v1951, 4294901760
        %v2277 = vsub.f32 %v1951, %v2276
        %v2278 = vand.u32 %v2277, 4294901760
        %2279 = vmatpush.msra.mxu0 %v2278
        %v2280 = vand.u32 %v1950, 4294901760
        %v2281 = vsub.f32 %v1950, %v2280
        %v2282 = vand.u32 %v2281, 4294901760
        %2283 = vmatpush.msra.mxu0 %v2282
        %v2284 = vand.u32 %v1954, 4294901760
        %2285 = vmatmul.f32.gmra.mxu0 %v2284
        %v2286 = vpop.f32.mrf.mxu0
        %v2287 = vadd.f32 %v2215, %v2286
        %v2288 = vand.u32 %v1957, 4294901760
        %2289 = vmatmul.f32.gmra.mxu0 %v2288
        %v2290 = vpop.f32.mrf.mxu0
        %v2291 = vadd.f32 %v2221, %v2290
        %v2292 = vand.u32 %v1960, 4294901760
        %2293 = vmatmul.f32.gmra.mxu0 %v2292
        %v2294 = vpop.f32.mrf.mxu0
        %v2295 = vadd.f32 %v2227, %v2294
        %v2296 = vand.u32 %v1963, 4294901760
        %2297 = vmatmul.f32.gmra.mxu0 %v2296
        %v2298 = vpop.f32.mrf.mxu0
        %v2299 = vadd.f32 %v2233, %v2298
        %v2300 = vand.u32 %v1966, 4294901760
        %2301 = vmatmul.f32.gmra.mxu0 %v2300
        %v2302 = vpop.f32.mrf.mxu0
        %v2303 = vadd.f32 %v2239, %v2302
        %v2304 = vand.u32 %v1969, 4294901760
        %2305 = vmatmul.f32.gmra.mxu0 %v2304
        %v2306 = vpop.f32.mrf.mxu0
        %v2307 = vadd.f32 %v2245, %v2306
        %v2308 = vand.u32 %v1972, 4294901760
        %2309 = vmatmul.f32.gmra.mxu0 %v2308
        %v2310 = vpop.f32.mrf.mxu0
        %v2311 = vadd.f32 %v2251, %v2310
        %v2312 = vand.u32 %v1975, 4294901760
        %2313 = vmatmul.f32.gmra.mxu0 %v2312
        %v2314 = vpop.f32.mrf.mxu0
        %v2315 = vadd.f32 %v2257, %v2314
        %2316 = vdwg.mxu0
        %2317 = vmatpush.msra.mxu0 0.0
        %2318 = vmatpush.msra.mxu0 0.0
        %2319 = vmatpush.msra.mxu0 0.0
        %2320 = vmatpush.msra.mxu0 0.0
        %2321 = vmatpush.msra.mxu0 0.0
        %2322 = vmatpush.msra.mxu0 0.0
        %2323 = vmatpush.msra.mxu0 0.0
        %2324 = vmatpush.msra.mxu0 0.0
        %2325 = vmatpush.msra.mxu0 0.0
        %2326 = vmatpush.msra.mxu0 0.0
        %2327 = vmatpush.msra.mxu0 0.0
        %2328 = vmatpush.msra.mxu0 0.0
        %2329 = vmatpush.msra.mxu0 0.0
        %v2330 = vand.u32 %v1978, 4294901760
        %2331 = vmatpush.msra.mxu0 %v2330
        %v2332 = vand.u32 %v1951, 4294901760
        %2333 = vmatpush.msra.mxu0 %v2332
        %v2334 = vand.u32 %v1950, 4294901760
        %2335 = vmatpush.msra.mxu0 %v2334
        %v2336 = vand.u32 %v1954, 4294901760
        %2337 = vmatmul.f32.gmra.mxu0 %v2336
        %v2338 = vpop.f32.mrf.mxu0
        %v2339 = vadd.f32 %v2287, %v2338
        %v2340 = vand.u32 %v1957, 4294901760
        %2341 = vmatmul.f32.gmra.mxu0 %v2340
        %v2342 = vpop.f32.mrf.mxu0
        %v2343 = vadd.f32 %v2291, %v2342
        %v2344 = vand.u32 %v1960, 4294901760
        %2345 = vmatmul.f32.gmra.mxu0 %v2344
        %v2346 = vpop.f32.mrf.mxu0
        %v2347 = vadd.f32 %v2295, %v2346
        %v2348 = vand.u32 %v1963, 4294901760
        %2349 = vmatmul.f32.gmra.mxu0 %v2348
        %v2350 = vpop.f32.mrf.mxu0
        %v2351 = vadd.f32 %v2299, %v2350
        %v2352 = vand.u32 %v1966, 4294901760
        %2353 = vmatmul.f32.gmra.mxu0 %v2352
        %v2354 = vpop.f32.mrf.mxu0
        %v2355 = vadd.f32 %v2303, %v2354
        %v2356 = vand.u32 %v1969, 4294901760
        %2357 = vmatmul.f32.gmra.mxu0 %v2356
        %v2358 = vpop.f32.mrf.mxu0
        %v2359 = vadd.f32 %v2307, %v2358
        %v2360 = vand.u32 %v1972, 4294901760
        %2361 = vmatmul.f32.gmra.mxu0 %v2360
        %v2362 = vpop.f32.mrf.mxu0
        %v2363 = vadd.f32 %v2311, %v2362
        %v2364 = vand.u32 %v1975, 4294901760
        %2365 = vmatmul.f32.gmra.mxu0 %v2364
        %v2366 = vpop.f32.mrf.mxu0
        %v2367 = vadd.f32 %v2315, %v2366
        %2368 = vdwg.mxu0
        %v2369 = vadd.f32 %v1933, %v2339
        %v2370 = vadd.f32 %v1934, %v2343
        %v2371 = vadd.f32 %v1935, %v2347
        %v2372 = vadd.f32 %v1936, %v2351
        %v2373 = vadd.f32 %v1937, %v2355
        %v2374 = vadd.f32 %v1938, %v2359
        %v2375 = vadd.f32 %v1939, %v2363
        %v2376 = vadd.f32 %v1940, %v2367
        %v2377 = vld [vmem:[%s190 + $0x4] sm:$0xff]
        %v2378 = vld [vmem:[%s190 + $0xc] sm:$0xff]
        %v2379 = vld [vmem:[%s190 + $0x1c] sm:$0xff]
        %v2380 = vld [vmem:[%s190 + $0x24] sm:$0xff]
        %v2381 = vld [vmem:[%s190 + $0x34] sm:$0xff]
        %v2382 = vld [vmem:[%s190 + $0x3c] sm:$0xff]
        %v2383 = vld [vmem:[%s190 + $0x4c] sm:$0xff]
        %v2384 = vld [vmem:[%s190 + $0x54] sm:$0xff]
        %s2385 = scalar_lea.vmem [#allocation2], 96
        %v2386 = vld [vmem:[%s2385] sm:$0xff]
        %v2387 = vld [vmem:[%s2385 + $0x8] sm:$0xff]
        %v2388 = vld [vmem:[%s2385 + $0x10] sm:$0x3f]
        %v2390 = vsel %vm671, %v2377, 0
        %v2393 = vsel %vm671, %v2378, 0
        %v2396 = vsel %vm671, %v2379, 0
        %v2399 = vsel %vm671, %v2380, 0
        %v2402 = vsel %vm671, %v2381, 0
        %v2405 = vsel %vm671, %v2382, 0
        %v2408 = vsel %vm671, %v2383, 0
        %v2411 = vsel %vm671, %v2384, 0
        %v2414 = vsel %vm696, %v2388, 0
        %2416 = vmatpush.msra.mxu0 0.0
        %2417 = vmatpush.msra.mxu0 0.0
        %2418 = vmatpush.msra.mxu0 0.0
        %2419 = vmatpush.msra.mxu0 0.0
        %2420 = vmatpush.msra.mxu0 0.0
        %2421 = vmatpush.msra.mxu0 0.0
        %2422 = vmatpush.msra.mxu0 0.0
        %2423 = vmatpush.msra.mxu0 0.0
        %2424 = vmatpush.msra.mxu0 0.0
        %2425 = vmatpush.msra.mxu0 0.0
        %2426 = vmatpush.msra.mxu0 0.0
        %2427 = vmatpush.msra.mxu0 0.0
        %2428 = vmatpush.msra.mxu0 0.0
        %v2429 = vand.u32 %v2414, 4294901760
        %2430 = vmatpush.msra.mxu0 %v2429
        %v2431 = vand.u32 %v2387, 4294901760
        %2432 = vmatpush.msra.mxu0 %v2431
        %v2433 = vand.u32 %v2386, 4294901760
        %2434 = vmatpush.msra.mxu0 %v2433
        %v2435 = vand.u32 %v2390, 4294901760
        %v2436 = vsub.f32 %v2390, %v2435
        %v2437 = vand.u32 %v2436, 4294901760
        %v2438 = vsub.f32 %v2436, %v2437
        %v2439 = vand.u32 %v2438, 4294901760
        %2440 = vmatmul.f32.gmra.mxu0 %v2439
        %v2441 = vpop.f32.mrf.mxu0
        %v2442 = vadd.f32 0.0, %v2441
        %v2443 = vand.u32 %v2393, 4294901760
        %v2444 = vsub.f32 %v2393, %v2443
        %v2445 = vand.u32 %v2444, 4294901760
        %v2446 = vsub.f32 %v2444, %v2445
        %v2447 = vand.u32 %v2446, 4294901760
        %2448 = vmatmul.f32.gmra.mxu0 %v2447
        %v2449 = vpop.f32.mrf.mxu0
        %v2450 = vadd.f32 0.0, %v2449
        %v2451 = vand.u32 %v2396, 4294901760
        %v2452 = vsub.f32 %v2396, %v2451
        %v2453 = vand.u32 %v2452, 4294901760
        %v2454 = vsub.f32 %v2452, %v2453
        %v2455 = vand.u32 %v2454, 4294901760
        %2456 = vmatmul.f32.gmra.mxu0 %v2455
        %v2457 = vpop.f32.mrf.mxu0
        %v2458 = vadd.f32 0.0, %v2457
        %v2459 = vand.u32 %v2399, 4294901760
        %v2460 = vsub.f32 %v2399, %v2459
        %v2461 = vand.u32 %v2460, 4294901760
        %v2462 = vsub.f32 %v2460, %v2461
        %v2463 = vand.u32 %v2462, 4294901760
        %2464 = vmatmul.f32.gmra.mxu0 %v2463
        %v2465 = vpop.f32.mrf.mxu0
        %v2466 = vadd.f32 0.0, %v2465
        %v2467 = vand.u32 %v2402, 4294901760
        %v2468 = vsub.f32 %v2402, %v2467
        %v2469 = vand.u32 %v2468, 4294901760
        %v2470 = vsub.f32 %v2468, %v2469
        %v2471 = vand.u32 %v2470, 4294901760
        %2472 = vmatmul.f32.gmra.mxu0 %v2471
        %v2473 = vpop.f32.mrf.mxu0
        %v2474 = vadd.f32 0.0, %v2473
        %v2475 = vand.u32 %v2405, 4294901760
        %v2476 = vsub.f32 %v2405, %v2475
        %v2477 = vand.u32 %v2476, 4294901760
        %v2478 = vsub.f32 %v2476, %v2477
        %v2479 = vand.u32 %v2478, 4294901760
        %2480 = vmatmul.f32.gmra.mxu0 %v2479
        %v2481 = vpop.f32.mrf.mxu0
        %v2482 = vadd.f32 0.0, %v2481
        %v2483 = vand.u32 %v2408, 4294901760
        %v2484 = vsub.f32 %v2408, %v2483
        %v2485 = vand.u32 %v2484, 4294901760
        %v2486 = vsub.f32 %v2484, %v2485
        %v2487 = vand.u32 %v2486, 4294901760
        %2488 = vmatmul.f32.gmra.mxu0 %v2487
        %v2489 = vpop.f32.mrf.mxu0
        %v2490 = vadd.f32 0.0, %v2489
        %v2491 = vand.u32 %v2411, 4294901760
        %v2492 = vsub.f32 %v2411, %v2491
        %v2493 = vand.u32 %v2492, 4294901760
        %v2494 = vsub.f32 %v2492, %v2493
        %v2495 = vand.u32 %v2494, 4294901760
        %2496 = vmatmul.f32.gmra.mxu0 %v2495
        %v2497 = vpop.f32.mrf.mxu0
        %v2498 = vadd.f32 0.0, %v2497
        %2499 = vdwg.mxu0
        %2500 = vmatpush.msra.mxu0 0.0
        %2501 = vmatpush.msra.mxu0 0.0
        %2502 = vmatpush.msra.mxu0 0.0
        %2503 = vmatpush.msra.mxu0 0.0
        %2504 = vmatpush.msra.mxu0 0.0
        %2505 = vmatpush.msra.mxu0 0.0
        %2506 = vmatpush.msra.mxu0 0.0
        %2507 = vmatpush.msra.mxu0 0.0
        %2508 = vmatpush.msra.mxu0 0.0
        %2509 = vmatpush.msra.mxu0 0.0
        %2510 = vmatpush.msra.mxu0 0.0
        %2511 = vmatpush.msra.mxu0 0.0
        %2512 = vmatpush.msra.mxu0 0.0
        %v2513 = vand.u32 %v2414, 4294901760
        %v2514 = vsub.f32 %v2414, %v2513
        %v2515 = vand.u32 %v2514, 4294901760
        %v2516 = vsub.f32 %v2514, %v2515
        %v2517 = vand.u32 %v2516, 4294901760
        %2518 = vmatpush.msra.mxu0 %v2517
        %v2519 = vand.u32 %v2387, 4294901760
        %v2520 = vsub.f32 %v2387, %v2519
        %v2521 = vand.u32 %v2520, 4294901760
        %v2522 = vsub.f32 %v2520, %v2521
        %v2523 = vand.u32 %v2522, 4294901760
        %2524 = vmatpush.msra.mxu0 %v2523
        %v2525 = vand.u32 %v2386, 4294901760
        %v2526 = vsub.f32 %v2386, %v2525
        %v2527 = vand.u32 %v2526, 4294901760
        %v2528 = vsub.f32 %v2526, %v2527
        %v2529 = vand.u32 %v2528, 4294901760
        %2530 = vmatpush.msra.mxu0 %v2529
        %v2531 = vand.u32 %v2390, 4294901760
        %2532 = vmatmul.f32.gmra.mxu0 %v2531
        %v2533 = vpop.f32.mrf.mxu0
        %v2534 = vadd.f32 %v2442, %v2533
        %v2535 = vand.u32 %v2393, 4294901760
        %2536 = vmatmul.f32.gmra.mxu0 %v2535
        %v2537 = vpop.f32.mrf.mxu0
        %v2538 = vadd.f32 %v2450, %v2537
        %v2539 = vand.u32 %v2396, 4294901760
        %2540 = vmatmul.f32.gmra.mxu0 %v2539
        %v2541 = vpop.f32.mrf.mxu0
        %v2542 = vadd.f32 %v2458, %v2541
        %v2543 = vand.u32 %v2399, 4294901760
        %2544 = vmatmul.f32.gmra.mxu0 %v2543
        %v2545 = vpop.f32.mrf.mxu0
        %v2546 = vadd.f32 %v2466, %v2545
        %v2547 = vand.u32 %v2402, 4294901760
        %2548 = vmatmul.f32.gmra.mxu0 %v2547
        %v2549 = vpop.f32.mrf.mxu0
        %v2550 = vadd.f32 %v2474, %v2549
        %v2551 = vand.u32 %v2405, 4294901760
        %2552 = vmatmul.f32.gmra.mxu0 %v2551
        %v2553 = vpop.f32.mrf.mxu0
        %v2554 = vadd.f32 %v2482, %v2553
        %v2555 = vand.u32 %v2408, 4294901760
        %2556 = vmatmul.f32.gmra.mxu0 %v2555
        %v2557 = vpop.f32.mrf.mxu0
        %v2558 = vadd.f32 %v2490, %v2557
        %v2559 = vand.u32 %v2411, 4294901760
        %2560 = vmatmul.f32.gmra.mxu0 %v2559
        %v2561 = vpop.f32.mrf.mxu0
        %v2562 = vadd.f32 %v2498, %v2561
        %2563 = vdwg.mxu0
        %2564 = vmatpush.msra.mxu0 0.0
        %2565 = vmatpush.msra.mxu0 0.0
        %2566 = vmatpush.msra.mxu0 0.0
        %2567 = vmatpush.msra.mxu0 0.0
        %2568 = vmatpush.msra.mxu0 0.0
        %2569 = vmatpush.msra.mxu0 0.0
        %2570 = vmatpush.msra.mxu0 0.0
        %2571 = vmatpush.msra.mxu0 0.0
        %2572 = vmatpush.msra.mxu0 0.0
        %2573 = vmatpush.msra.mxu0 0.0
        %2574 = vmatpush.msra.mxu0 0.0
        %2575 = vmatpush.msra.mxu0 0.0
        %2576 = vmatpush.msra.mxu0 0.0
        %v2577 = vand.u32 %v2414, 4294901760
        %v2578 = vsub.f32 %v2414, %v2577
        %2579 = vmatpush.msra.mxu0 %v2578
        %v2580 = vand.u32 %v2387, 4294901760
        %v2581 = vsub.f32 %v2387, %v2580
        %2582 = vmatpush.msra.mxu0 %v2581
        %v2583 = vand.u32 %v2386, 4294901760
        %v2584 = vsub.f32 %v2386, %v2583
        %2585 = vmatpush.msra.mxu0 %v2584
        %v2586 = vand.u32 %v2390, 4294901760
        %v2587 = vsub.f32 %v2390, %v2586
        %2588 = vmatmul.f32.gmra.mxu0 %v2587
        %v2589 = vpop.f32.mrf.mxu0
        %v2590 = vadd.f32 %v2534, %v2589
        %v2591 = vand.u32 %v2393, 4294901760
        %v2592 = vsub.f32 %v2393, %v2591
        %2593 = vmatmul.f32.gmra.mxu0 %v2592
        %v2594 = vpop.f32.mrf.mxu0
        %v2595 = vadd.f32 %v2538, %v2594
        %v2596 = vand.u32 %v2396, 4294901760
        %v2597 = vsub.f32 %v2396, %v2596
        %2598 = vmatmul.f32.gmra.mxu0 %v2597
        %v2599 = vpop.f32.mrf.mxu0
        %v2600 = vadd.f32 %v2542, %v2599
        %v2601 = vand.u32 %v2399, 4294901760
        %v2602 = vsub.f32 %v2399, %v2601
        %2603 = vmatmul.f32.gmra.mxu0 %v2602
        %v2604 = vpop.f32.mrf.mxu0
        %v2605 = vadd.f32 %v2546, %v2604
        %v2606 = vand.u32 %v2402, 4294901760
        %v2607 = vsub.f32 %v2402, %v2606
        %2608 = vmatmul.f32.gmra.mxu0 %v2607
        %v2609 = vpop.f32.mrf.mxu0
        %v2610 = vadd.f32 %v2550, %v2609
        %v2611 = vand.u32 %v2405, 4294901760
        %v2612 = vsub.f32 %v2405, %v2611
        %2613 = vmatmul.f32.gmra.mxu0 %v2612
        %v2614 = vpop.f32.mrf.mxu0
        %v2615 = vadd.f32 %v2554, %v2614
        %v2616 = vand.u32 %v2408, 4294901760
        %v2617 = vsub.f32 %v2408, %v2616
        %2618 = vmatmul.f32.gmra.mxu0 %v2617
        %v2619 = vpop.f32.mrf.mxu0
        %v2620 = vadd.f32 %v2558, %v2619
        %v2621 = vand.u32 %v2411, 4294901760
        %v2622 = vsub.f32 %v2411, %v2621
        %2623 = vmatmul.f32.gmra.mxu0 %v2622
        %v2624 = vpop.f32.mrf.mxu0
        %v2625 = vadd.f32 %v2562, %v2624
        %2626 = vdwg.mxu0
        %2627 = vmatpush.msra.mxu0 0.0
        %2628 = vmatpush.msra.mxu0 0.0
        %2629 = vmatpush.msra.mxu0 0.0
        %2630 = vmatpush.msra.mxu0 0.0
        %2631 = vmatpush.msra.mxu0 0.0
        %2632 = vmatpush.msra.mxu0 0.0
        %2633 = vmatpush.msra.mxu0 0.0
        %2634 = vmatpush.msra.mxu0 0.0
        %2635 = vmatpush.msra.mxu0 0.0
        %2636 = vmatpush.msra.mxu0 0.0
        %2637 = vmatpush.msra.mxu0 0.0
        %2638 = vmatpush.msra.mxu0 0.0
        %2639 = vmatpush.msra.mxu0 0.0
        %v2640 = vand.u32 %v2414, 4294901760
        %2641 = vmatpush.msra.mxu0 %v2640
        %v2642 = vand.u32 %v2387, 4294901760
        %2643 = vmatpush.msra.mxu0 %v2642
        %v2644 = vand.u32 %v2386, 4294901760
        %2645 = vmatpush.msra.mxu0 %v2644
        %v2646 = vand.u32 %v2390, 4294901760
        %v2647 = vsub.f32 %v2390, %v2646
        %v2648 = vand.u32 %v2647, 4294901760
        %2649 = vmatmul.f32.gmra.mxu0 %v2648
        %v2650 = vpop.f32.mrf.mxu0
        %v2651 = vadd.f32 %v2590, %v2650
        %v2652 = vand.u32 %v2393, 4294901760
        %v2653 = vsub.f32 %v2393, %v2652
        %v2654 = vand.u32 %v2653, 4294901760
        %2655 = vmatmul.f32.gmra.mxu0 %v2654
        %v2656 = vpop.f32.mrf.mxu0
        %v2657 = vadd.f32 %v2595, %v2656
        %v2658 = vand.u32 %v2396, 4294901760
        %v2659 = vsub.f32 %v2396, %v2658
        %v2660 = vand.u32 %v2659, 4294901760
        %2661 = vmatmul.f32.gmra.mxu0 %v2660
        %v2662 = vpop.f32.mrf.mxu0
        %v2663 = vadd.f32 %v2600, %v2662
        %v2664 = vand.u32 %v2399, 4294901760
        %v2665 = vsub.f32 %v2399, %v2664
        %v2666 = vand.u32 %v2665, 4294901760
        %2667 = vmatmul.f32.gmra.mxu0 %v2666
        %v2668 = vpop.f32.mrf.mxu0
        %v2669 = vadd.f32 %v2605, %v2668
        %v2670 = vand.u32 %v2402, 4294901760
        %v2671 = vsub.f32 %v2402, %v2670
        %v2672 = vand.u32 %v2671, 4294901760
        %2673 = vmatmul.f32.gmra.mxu0 %v2672
        %v2674 = vpop.f32.mrf.mxu0
        %v2675 = vadd.f32 %v2610, %v2674
        %v2676 = vand.u32 %v2405, 4294901760
        %v2677 = vsub.f32 %v2405, %v2676
        %v2678 = vand.u32 %v2677, 4294901760
        %2679 = vmatmul.f32.gmra.mxu0 %v2678
        %v2680 = vpop.f32.mrf.mxu0
        %v2681 = vadd.f32 %v2615, %v2680
        %v2682 = vand.u32 %v2408, 4294901760
        %v2683 = vsub.f32 %v2408, %v2682
        %v2684 = vand.u32 %v2683, 4294901760
        %2685 = vmatmul.f32.gmra.mxu0 %v2684
        %v2686 = vpop.f32.mrf.mxu0
        %v2687 = vadd.f32 %v2620, %v2686
        %v2688 = vand.u32 %v2411, 4294901760
        %v2689 = vsub.f32 %v2411, %v2688
        %v2690 = vand.u32 %v2689, 4294901760
        %2691 = vmatmul.f32.gmra.mxu0 %v2690
        %v2692 = vpop.f32.mrf.mxu0
        %v2693 = vadd.f32 %v2625, %v2692
        %2694 = vdwg.mxu0
        %2695 = vmatpush.msra.mxu0 0.0
        %2696 = vmatpush.msra.mxu0 0.0
        %2697 = vmatpush.msra.mxu0 0.0
        %2698 = vmatpush.msra.mxu0 0.0
        %2699 = vmatpush.msra.mxu0 0.0
        %2700 = vmatpush.msra.mxu0 0.0
        %2701 = vmatpush.msra.mxu0 0.0
        %2702 = vmatpush.msra.mxu0 0.0
        %2703 = vmatpush.msra.mxu0 0.0
        %2704 = vmatpush.msra.mxu0 0.0
        %2705 = vmatpush.msra.mxu0 0.0
        %2706 = vmatpush.msra.mxu0 0.0
        %2707 = vmatpush.msra.mxu0 0.0
        %v2708 = vand.u32 %v2414, 4294901760
        %v2709 = vsub.f32 %v2414, %v2708
        %v2710 = vand.u32 %v2709, 4294901760
        %2711 = vmatpush.msra.mxu0 %v2710
        %v2712 = vand.u32 %v2387, 4294901760
        %v2713 = vsub.f32 %v2387, %v2712
        %v2714 = vand.u32 %v2713, 4294901760
        %2715 = vmatpush.msra.mxu0 %v2714
        %v2716 = vand.u32 %v2386, 4294901760
        %v2717 = vsub.f32 %v2386, %v2716
        %v2718 = vand.u32 %v2717, 4294901760
        %2719 = vmatpush.msra.mxu0 %v2718
        %v2720 = vand.u32 %v2390, 4294901760
        %2721 = vmatmul.f32.gmra.mxu0 %v2720
        %v2722 = vpop.f32.mrf.mxu0
        %v2723 = vadd.f32 %v2651, %v2722
        %v2724 = vand.u32 %v2393, 4294901760
        %2725 = vmatmul.f32.gmra.mxu0 %v2724
        %v2726 = vpop.f32.mrf.mxu0
        %v2727 = vadd.f32 %v2657, %v2726
        %v2728 = vand.u32 %v2396, 4294901760
        %2729 = vmatmul.f32.gmra.mxu0 %v2728
        %v2730 = vpop.f32.mrf.mxu0
        %v2731 = vadd.f32 %v2663, %v2730
        %v2732 = vand.u32 %v2399, 4294901760
        %2733 = vmatmul.f32.gmra.mxu0 %v2732
        %v2734 = vpop.f32.mrf.mxu0
        %v2735 = vadd.f32 %v2669, %v2734
        %v2736 = vand.u32 %v2402, 4294901760
        %2737 = vmatmul.f32.gmra.mxu0 %v2736
        %v2738 = vpop.f32.mrf.mxu0
        %v2739 = vadd.f32 %v2675, %v2738
        %v2740 = vand.u32 %v2405, 4294901760
        %2741 = vmatmul.f32.gmra.mxu0 %v2740
        %v2742 = vpop.f32.mrf.mxu0
        %v2743 = vadd.f32 %v2681, %v2742
        %v2744 = vand.u32 %v2408, 4294901760
        %2745 = vmatmul.f32.gmra.mxu0 %v2744
        %v2746 = vpop.f32.mrf.mxu0
        %v2747 = vadd.f32 %v2687, %v2746
        %v2748 = vand.u32 %v2411, 4294901760
        %2749 = vmatmul.f32.gmra.mxu0 %v2748
        %v2750 = vpop.f32.mrf.mxu0
        %v2751 = vadd.f32 %v2693, %v2750
        %2752 = vdwg.mxu0
        %2753 = vmatpush.msra.mxu0 0.0
        %2754 = vmatpush.msra.mxu0 0.0
        %2755 = vmatpush.msra.mxu0 0.0
        %2756 = vmatpush.msra.mxu0 0.0
        %2757 = vmatpush.msra.mxu0 0.0
        %2758 = vmatpush.msra.mxu0 0.0
        %2759 = vmatpush.msra.mxu0 0.0
        %2760 = vmatpush.msra.mxu0 0.0
        %2761 = vmatpush.msra.mxu0 0.0
        %2762 = vmatpush.msra.mxu0 0.0
        %2763 = vmatpush.msra.mxu0 0.0
        %2764 = vmatpush.msra.mxu0 0.0
        %2765 = vmatpush.msra.mxu0 0.0
        %v2766 = vand.u32 %v2414, 4294901760
        %2767 = vmatpush.msra.mxu0 %v2766
        %v2768 = vand.u32 %v2387, 4294901760
        %2769 = vmatpush.msra.mxu0 %v2768
        %v2770 = vand.u32 %v2386, 4294901760
        %2771 = vmatpush.msra.mxu0 %v2770
        %v2772 = vand.u32 %v2390, 4294901760
        %2773 = vmatmul.f32.gmra.mxu0 %v2772
        %v2774 = vpop.f32.mrf.mxu0
        %v2775 = vadd.f32 %v2723, %v2774
        %v2776 = vand.u32 %v2393, 4294901760
        %2777 = vmatmul.f32.gmra.mxu0 %v2776
        %v2778 = vpop.f32.mrf.mxu0
        %v2779 = vadd.f32 %v2727, %v2778
        %v2780 = vand.u32 %v2396, 4294901760
        %2781 = vmatmul.f32.gmra.mxu0 %v2780
        %v2782 = vpop.f32.mrf.mxu0
        %v2783 = vadd.f32 %v2731, %v2782
        %v2784 = vand.u32 %v2399, 4294901760
        %2785 = vmatmul.f32.gmra.mxu0 %v2784
        %v2786 = vpop.f32.mrf.mxu0
        %v2787 = vadd.f32 %v2735, %v2786
        %v2788 = vand.u32 %v2402, 4294901760
        %2789 = vmatmul.f32.gmra.mxu0 %v2788
        %v2790 = vpop.f32.mrf.mxu0
        %v2791 = vadd.f32 %v2739, %v2790
        %v2792 = vand.u32 %v2405, 4294901760
        %2793 = vmatmul.f32.gmra.mxu0 %v2792
        %v2794 = vpop.f32.mrf.mxu0
        %v2795 = vadd.f32 %v2743, %v2794
        %v2796 = vand.u32 %v2408, 4294901760
        %2797 = vmatmul.f32.gmra.mxu0 %v2796
        %v2798 = vpop.f32.mrf.mxu0
        %v2799 = vadd.f32 %v2747, %v2798
        %v2800 = vand.u32 %v2411, 4294901760
        %2801 = vmatmul.f32.gmra.mxu0 %v2800
        %v2802 = vpop.f32.mrf.mxu0
        %v2803 = vadd.f32 %v2751, %v2802
        %2804 = vdwg.mxu0
        %v2805 = vadd.f32 %v2369, %v2775
        %v2806 = vadd.f32 %v2370, %v2779
        %v2807 = vadd.f32 %v2371, %v2783
        %v2808 = vadd.f32 %v2372, %v2787
        %v2809 = vadd.f32 %v2373, %v2791
        %v2810 = vadd.f32 %v2374, %v2795
        %v2811 = vadd.f32 %v2375, %v2799
        %v2812 = vadd.f32 %v2376, %v2803
        %v2813 = vld [vmem:[%s190 + $0x5] sm:$0xff]
        %v2814 = vld [vmem:[%s190 + $0xd] sm:$0xff]
        %v2815 = vld [vmem:[%s190 + $0x1d] sm:$0xff]
        %v2816 = vld [vmem:[%s190 + $0x25] sm:$0xff]
        %v2817 = vld [vmem:[%s190 + $0x35] sm:$0xff]
        %v2818 = vld [vmem:[%s190 + $0x3d] sm:$0xff]
        %v2819 = vld [vmem:[%s190 + $0x4d] sm:$0xff]
        %v2820 = vld [vmem:[%s190 + $0x55] sm:$0xff]
        %s2821 = scalar_lea.vmem [#allocation2], 120
        %v2822 = vld [vmem:[%s2821] sm:$0xff]
        %v2823 = vld [vmem:[%s2821 + $0x8] sm:$0xff]
        %v2824 = vld [vmem:[%s2821 + $0x10] sm:$0x3f]
        %v2826 = vsel %vm671, %v2813, 0
        %v2829 = vsel %vm671, %v2814, 0
        %v2832 = vsel %vm671, %v2815, 0
        %v2835 = vsel %vm671, %v2816, 0
        %v2838 = vsel %vm671, %v2817, 0
        %v2841 = vsel %vm671, %v2818, 0
        %v2844 = vsel %vm671, %v2819, 0
        %v2847 = vsel %vm671, %v2820, 0
        %v2850 = vsel %vm696, %v2824, 0
        %2852 = vmatpush.msra.mxu0 0.0
        %2853 = vmatpush.msra.mxu0 0.0
        %2854 = vmatpush.msra.mxu0 0.0
        %2855 = vmatpush.msra.mxu0 0.0
        %2856 = vmatpush.msra.mxu0 0.0
        %2857 = vmatpush.msra.mxu0 0.0
        %2858 = vmatpush.msra.mxu0 0.0
        %2859 = vmatpush.msra.mxu0 0.0
        %2860 = vmatpush.msra.mxu0 0.0
        %2861 = vmatpush.msra.mxu0 0.0
        %2862 = vmatpush.msra.mxu0 0.0
        %2863 = vmatpush.msra.mxu0 0.0
        %2864 = vmatpush.msra.mxu0 0.0
        %v2865 = vand.u32 %v2850, 4294901760
        %2866 = vmatpush.msra.mxu0 %v2865
        %v2867 = vand.u32 %v2823, 4294901760
        %2868 = vmatpush.msra.mxu0 %v2867
        %v2869 = vand.u32 %v2822, 4294901760
        %2870 = vmatpush.msra.mxu0 %v2869
        %v2871 = vand.u32 %v2826, 4294901760
        %v2872 = vsub.f32 %v2826, %v2871
        %v2873 = vand.u32 %v2872, 4294901760
        %v2874 = vsub.f32 %v2872, %v2873
        %v2875 = vand.u32 %v2874, 4294901760
        %2876 = vmatmul.f32.gmra.mxu0 %v2875
        %v2877 = vpop.f32.mrf.mxu0
        %v2878 = vadd.f32 0.0, %v2877
        %v2879 = vand.u32 %v2829, 4294901760
        %v2880 = vsub.f32 %v2829, %v2879
        %v2881 = vand.u32 %v2880, 4294901760
        %v2882 = vsub.f32 %v2880, %v2881
        %v2883 = vand.u32 %v2882, 4294901760
        %2884 = vmatmul.f32.gmra.mxu0 %v2883
        %v2885 = vpop.f32.mrf.mxu0
        %v2886 = vadd.f32 0.0, %v2885
        %v2887 = vand.u32 %v2832, 4294901760
        %v2888 = vsub.f32 %v2832, %v2887
        %v2889 = vand.u32 %v2888, 4294901760
        %v2890 = vsub.f32 %v2888, %v2889
        %v2891 = vand.u32 %v2890, 4294901760
        %2892 = vmatmul.f32.gmra.mxu0 %v2891
        %v2893 = vpop.f32.mrf.mxu0
        %v2894 = vadd.f32 0.0, %v2893
        %v2895 = vand.u32 %v2835, 4294901760
        %v2896 = vsub.f32 %v2835, %v2895
        %v2897 = vand.u32 %v2896, 4294901760
        %v2898 = vsub.f32 %v2896, %v2897
        %v2899 = vand.u32 %v2898, 4294901760
        %2900 = vmatmul.f32.gmra.mxu0 %v2899
        %v2901 = vpop.f32.mrf.mxu0
        %v2902 = vadd.f32 0.0, %v2901
        %v2903 = vand.u32 %v2838, 4294901760
        %v2904 = vsub.f32 %v2838, %v2903
        %v2905 = vand.u32 %v2904, 4294901760
        %v2906 = vsub.f32 %v2904, %v2905
        %v2907 = vand.u32 %v2906, 4294901760
        %2908 = vmatmul.f32.gmra.mxu0 %v2907
        %v2909 = vpop.f32.mrf.mxu0
        %v2910 = vadd.f32 0.0, %v2909
        %v2911 = vand.u32 %v2841, 4294901760
        %v2912 = vsub.f32 %v2841, %v2911
        %v2913 = vand.u32 %v2912, 4294901760
        %v2914 = vsub.f32 %v2912, %v2913
        %v2915 = vand.u32 %v2914, 4294901760
        %2916 = vmatmul.f32.gmra.mxu0 %v2915
        %v2917 = vpop.f32.mrf.mxu0
        %v2918 = vadd.f32 0.0, %v2917
        %v2919 = vand.u32 %v2844, 4294901760
        %v2920 = vsub.f32 %v2844, %v2919
        %v2921 = vand.u32 %v2920, 4294901760
        %v2922 = vsub.f32 %v2920, %v2921
        %v2923 = vand.u32 %v2922, 4294901760
        %2924 = vmatmul.f32.gmra.mxu0 %v2923
        %v2925 = vpop.f32.mrf.mxu0
        %v2926 = vadd.f32 0.0, %v2925
        %v2927 = vand.u32 %v2847, 4294901760
        %v2928 = vsub.f32 %v2847, %v2927
        %v2929 = vand.u32 %v2928, 4294901760
        %v2930 = vsub.f32 %v2928, %v2929
        %v2931 = vand.u32 %v2930, 4294901760
        %2932 = vmatmul.f32.gmra.mxu0 %v2931
        %v2933 = vpop.f32.mrf.mxu0
        %v2934 = vadd.f32 0.0, %v2933
        %2935 = vdwg.mxu0
        %2936 = vmatpush.msra.mxu0 0.0
        %2937 = vmatpush.msra.mxu0 0.0
        %2938 = vmatpush.msra.mxu0 0.0
        %2939 = vmatpush.msra.mxu0 0.0
        %2940 = vmatpush.msra.mxu0 0.0
        %2941 = vmatpush.msra.mxu0 0.0
        %2942 = vmatpush.msra.mxu0 0.0
        %2943 = vmatpush.msra.mxu0 0.0
        %2944 = vmatpush.msra.mxu0 0.0
        %2945 = vmatpush.msra.mxu0 0.0
        %2946 = vmatpush.msra.mxu0 0.0
        %2947 = vmatpush.msra.mxu0 0.0
        %2948 = vmatpush.msra.mxu0 0.0
        %v2949 = vand.u32 %v2850, 4294901760
        %v2950 = vsub.f32 %v2850, %v2949
        %v2951 = vand.u32 %v2950, 4294901760
        %v2952 = vsub.f32 %v2950, %v2951
        %v2953 = vand.u32 %v2952, 4294901760
        %2954 = vmatpush.msra.mxu0 %v2953
        %v2955 = vand.u32 %v2823, 4294901760
        %v2956 = vsub.f32 %v2823, %v2955
        %v2957 = vand.u32 %v2956, 4294901760
        %v2958 = vsub.f32 %v2956, %v2957
        %v2959 = vand.u32 %v2958, 4294901760
        %2960 = vmatpush.msra.mxu0 %v2959
        %v2961 = vand.u32 %v2822, 4294901760
        %v2962 = vsub.f32 %v2822, %v2961
        %v2963 = vand.u32 %v2962, 4294901760
        %v2964 = vsub.f32 %v2962, %v2963
        %v2965 = vand.u32 %v2964, 4294901760
        %2966 = vmatpush.msra.mxu0 %v2965
        %v2967 = vand.u32 %v2826, 4294901760
        %2968 = vmatmul.f32.gmra.mxu0 %v2967
        %v2969 = vpop.f32.mrf.mxu0
        %v2970 = vadd.f32 %v2878, %v2969
        %v2971 = vand.u32 %v2829, 4294901760
        %2972 = vmatmul.f32.gmra.mxu0 %v2971
        %v2973 = vpop.f32.mrf.mxu0
        %v2974 = vadd.f32 %v2886, %v2973
        %v2975 = vand.u32 %v2832, 4294901760
        %2976 = vmatmul.f32.gmra.mxu0 %v2975
        %v2977 = vpop.f32.mrf.mxu0
        %v2978 = vadd.f32 %v2894, %v2977
        %v2979 = vand.u32 %v2835, 4294901760
        %2980 = vmatmul.f32.gmra.mxu0 %v2979
        %v2981 = vpop.f32.mrf.mxu0
        %v2982 = vadd.f32 %v2902, %v2981
        %v2983 = vand.u32 %v2838, 4294901760
        %2984 = vmatmul.f32.gmra.mxu0 %v2983
        %v2985 = vpop.f32.mrf.mxu0
        %v2986 = vadd.f32 %v2910, %v2985
        %v2987 = vand.u32 %v2841, 4294901760
        %2988 = vmatmul.f32.gmra.mxu0 %v2987
        %v2989 = vpop.f32.mrf.mxu0
        %v2990 = vadd.f32 %v2918, %v2989
        %v2991 = vand.u32 %v2844, 4294901760
        %2992 = vmatmul.f32.gmra.mxu0 %v2991
        %v2993 = vpop.f32.mrf.mxu0
        %v2994 = vadd.f32 %v2926, %v2993
        %v2995 = vand.u32 %v2847, 4294901760
        %2996 = vmatmul.f32.gmra.mxu0 %v2995
        %v2997 = vpop.f32.mrf.mxu0
        %v2998 = vadd.f32 %v2934, %v2997
        %2999 = vdwg.mxu0
        %3000 = vmatpush.msra.mxu0 0.0
        %3001 = vmatpush.msra.mxu0 0.0
        %3002 = vmatpush.msra.mxu0 0.0
        %3003 = vmatpush.msra.mxu0 0.0
        %3004 = vmatpush.msra.mxu0 0.0
        %3005 = vmatpush.msra.mxu0 0.0
        %3006 = vmatpush.msra.mxu0 0.0
        %3007 = vmatpush.msra.mxu0 0.0
        %3008 = vmatpush.msra.mxu0 0.0
        %3009 = vmatpush.msra.mxu0 0.0
        %3010 = vmatpush.msra.mxu0 0.0
        %3011 = vmatpush.msra.mxu0 0.0
        %3012 = vmatpush.msra.mxu0 0.0
        %v3013 = vand.u32 %v2850, 4294901760
        %v3014 = vsub.f32 %v2850, %v3013
        %3015 = vmatpush.msra.mxu0 %v3014
        %v3016 = vand.u32 %v2823, 4294901760
        %v3017 = vsub.f32 %v2823, %v3016
        %3018 = vmatpush.msra.mxu0 %v3017
        %v3019 = vand.u32 %v2822, 4294901760
        %v3020 = vsub.f32 %v2822, %v3019
        %3021 = vmatpush.msra.mxu0 %v3020
        %v3022 = vand.u32 %v2826, 4294901760
        %v3023 = vsub.f32 %v2826, %v3022
        %3024 = vmatmul.f32.gmra.mxu0 %v3023
        %v3025 = vpop.f32.mrf.mxu0
        %v3026 = vadd.f32 %v2970, %v3025
        %v3027 = vand.u32 %v2829, 4294901760
        %v3028 = vsub.f32 %v2829, %v3027
        %3029 = vmatmul.f32.gmra.mxu0 %v3028
        %v3030 = vpop.f32.mrf.mxu0
        %v3031 = vadd.f32 %v2974, %v3030
        %v3032 = vand.u32 %v2832, 4294901760
        %v3033 = vsub.f32 %v2832, %v3032
        %3034 = vmatmul.f32.gmra.mxu0 %v3033
        %v3035 = vpop.f32.mrf.mxu0
        %v3036 = vadd.f32 %v2978, %v3035
        %v3037 = vand.u32 %v2835, 4294901760
        %v3038 = vsub.f32 %v2835, %v3037
        %3039 = vmatmul.f32.gmra.mxu0 %v3038
        %v3040 = vpop.f32.mrf.mxu0
        %v3041 = vadd.f32 %v2982, %v3040
        %v3042 = vand.u32 %v2838, 4294901760
        %v3043 = vsub.f32 %v2838, %v3042
        %3044 = vmatmul.f32.gmra.mxu0 %v3043
        %v3045 = vpop.f32.mrf.mxu0
        %v3046 = vadd.f32 %v2986, %v3045
        %v3047 = vand.u32 %v2841, 4294901760
        %v3048 = vsub.f32 %v2841, %v3047
        %3049 = vmatmul.f32.gmra.mxu0 %v3048
        %v3050 = vpop.f32.mrf.mxu0
        %v3051 = vadd.f32 %v2990, %v3050
        %v3052 = vand.u32 %v2844, 4294901760
        %v3053 = vsub.f32 %v2844, %v3052
        %3054 = vmatmul.f32.gmra.mxu0 %v3053
        %v3055 = vpop.f32.mrf.mxu0
        %v3056 = vadd.f32 %v2994, %v3055
        %v3057 = vand.u32 %v2847, 4294901760
        %v3058 = vsub.f32 %v2847, %v3057
        %3059 = vmatmul.f32.gmra.mxu0 %v3058
        %v3060 = vpop.f32.mrf.mxu0
        %v3061 = vadd.f32 %v2998, %v3060
        %3062 = vdwg.mxu0
        %3063 = vmatpush.msra.mxu0 0.0
        %3064 = vmatpush.msra.mxu0 0.0
        %3065 = vmatpush.msra.mxu0 0.0
        %3066 = vmatpush.msra.mxu0 0.0
        %3067 = vmatpush.msra.mxu0 0.0
        %3068 = vmatpush.msra.mxu0 0.0
        %3069 = vmatpush.msra.mxu0 0.0
        %3070 = vmatpush.msra.mxu0 0.0
        %3071 = vmatpush.msra.mxu0 0.0
        %3072 = vmatpush.msra.mxu0 0.0
        %3073 = vmatpush.msra.mxu0 0.0
        %3074 = vmatpush.msra.mxu0 0.0
        %3075 = vmatpush.msra.mxu0 0.0
        %v3076 = vand.u32 %v2850, 4294901760
        %3077 = vmatpush.msra.mxu0 %v3076
        %v3078 = vand.u32 %v2823, 4294901760
        %3079 = vmatpush.msra.mxu0 %v3078
        %v3080 = vand.u32 %v2822, 4294901760
        %3081 = vmatpush.msra.mxu0 %v3080
        %v3082 = vand.u32 %v2826, 4294901760
        %v3083 = vsub.f32 %v2826, %v3082
        %v3084 = vand.u32 %v3083, 4294901760
        %3085 = vmatmul.f32.gmra.mxu0 %v3084
        %v3086 = vpop.f32.mrf.mxu0
        %v3087 = vadd.f32 %v3026, %v3086
        %v3088 = vand.u32 %v2829, 4294901760
        %v3089 = vsub.f32 %v2829, %v3088
        %v3090 = vand.u32 %v3089, 4294901760
        %3091 = vmatmul.f32.gmra.mxu0 %v3090
        %v3092 = vpop.f32.mrf.mxu0
        %v3093 = vadd.f32 %v3031, %v3092
        %v3094 = vand.u32 %v2832, 4294901760
        %v3095 = vsub.f32 %v2832, %v3094
        %v3096 = vand.u32 %v3095, 4294901760
        %3097 = vmatmul.f32.gmra.mxu0 %v3096
        %v3098 = vpop.f32.mrf.mxu0
        %v3099 = vadd.f32 %v3036, %v3098
        %v3100 = vand.u32 %v2835, 4294901760
        %v3101 = vsub.f32 %v2835, %v3100
        %v3102 = vand.u32 %v3101, 4294901760
        %3103 = vmatmul.f32.gmra.mxu0 %v3102
        %v3104 = vpop.f32.mrf.mxu0
        %v3105 = vadd.f32 %v3041, %v3104
        %v3106 = vand.u32 %v2838, 4294901760
        %v3107 = vsub.f32 %v2838, %v3106
        %v3108 = vand.u32 %v3107, 4294901760
        %3109 = vmatmul.f32.gmra.mxu0 %v3108
        %v3110 = vpop.f32.mrf.mxu0
        %v3111 = vadd.f32 %v3046, %v3110
        %v3112 = vand.u32 %v2841, 4294901760
        %v3113 = vsub.f32 %v2841, %v3112
        %v3114 = vand.u32 %v3113, 4294901760
        %3115 = vmatmul.f32.gmra.mxu0 %v3114
        %v3116 = vpop.f32.mrf.mxu0
        %v3117 = vadd.f32 %v3051, %v3116
        %v3118 = vand.u32 %v2844, 4294901760
        %v3119 = vsub.f32 %v2844, %v3118
        %v3120 = vand.u32 %v3119, 4294901760
        %3121 = vmatmul.f32.gmra.mxu0 %v3120
        %v3122 = vpop.f32.mrf.mxu0
        %v3123 = vadd.f32 %v3056, %v3122
        %v3124 = vand.u32 %v2847, 4294901760
        %v3125 = vsub.f32 %v2847, %v3124
        %v3126 = vand.u32 %v3125, 4294901760
        %3127 = vmatmul.f32.gmra.mxu0 %v3126
        %v3128 = vpop.f32.mrf.mxu0
        %v3129 = vadd.f32 %v3061, %v3128
        %3130 = vdwg.mxu0
        %3131 = vmatpush.msra.mxu0 0.0
        %3132 = vmatpush.msra.mxu0 0.0
        %3133 = vmatpush.msra.mxu0 0.0
        %3134 = vmatpush.msra.mxu0 0.0
        %3135 = vmatpush.msra.mxu0 0.0
        %3136 = vmatpush.msra.mxu0 0.0
        %3137 = vmatpush.msra.mxu0 0.0
        %3138 = vmatpush.msra.mxu0 0.0
        %3139 = vmatpush.msra.mxu0 0.0
        %3140 = vmatpush.msra.mxu0 0.0
        %3141 = vmatpush.msra.mxu0 0.0
        %3142 = vmatpush.msra.mxu0 0.0
        %3143 = vmatpush.msra.mxu0 0.0
        %v3144 = vand.u32 %v2850, 4294901760
        %v3145 = vsub.f32 %v2850, %v3144
        %v3146 = vand.u32 %v3145, 4294901760
        %3147 = vmatpush.msra.mxu0 %v3146
        %v3148 = vand.u32 %v2823, 4294901760
        %v3149 = vsub.f32 %v2823, %v3148
        %v3150 = vand.u32 %v3149, 4294901760
        %3151 = vmatpush.msra.mxu0 %v3150
        %v3152 = vand.u32 %v2822, 4294901760
        %v3153 = vsub.f32 %v2822, %v3152
        %v3154 = vand.u32 %v3153, 4294901760
        %3155 = vmatpush.msra.mxu0 %v3154
        %v3156 = vand.u32 %v2826, 4294901760
        %3157 = vmatmul.f32.gmra.mxu0 %v3156
        %v3158 = vpop.f32.mrf.mxu0
        %v3159 = vadd.f32 %v3087, %v3158
        %v3160 = vand.u32 %v2829, 4294901760
        %3161 = vmatmul.f32.gmra.mxu0 %v3160
        %v3162 = vpop.f32.mrf.mxu0
        %v3163 = vadd.f32 %v3093, %v3162
        %v3164 = vand.u32 %v2832, 4294901760
        %3165 = vmatmul.f32.gmra.mxu0 %v3164
        %v3166 = vpop.f32.mrf.mxu0
        %v3167 = vadd.f32 %v3099, %v3166
        %v3168 = vand.u32 %v2835, 4294901760
        %3169 = vmatmul.f32.gmra.mxu0 %v3168
        %v3170 = vpop.f32.mrf.mxu0
        %v3171 = vadd.f32 %v3105, %v3170
        %v3172 = vand.u32 %v2838, 4294901760
        %3173 = vmatmul.f32.gmra.mxu0 %v3172
        %v3174 = vpop.f32.mrf.mxu0
        %v3175 = vadd.f32 %v3111, %v3174
        %v3176 = vand.u32 %v2841, 4294901760
        %3177 = vmatmul.f32.gmra.mxu0 %v3176
        %v3178 = vpop.f32.mrf.mxu0
        %v3179 = vadd.f32 %v3117, %v3178
        %v3180 = vand.u32 %v2844, 4294901760
        %3181 = vmatmul.f32.gmra.mxu0 %v3180
        %v3182 = vpop.f32.mrf.mxu0
        %v3183 = vadd.f32 %v3123, %v3182
        %v3184 = vand.u32 %v2847, 4294901760
        %3185 = vmatmul.f32.gmra.mxu0 %v3184
        %v3186 = vpop.f32.mrf.mxu0
        %v3187 = vadd.f32 %v3129, %v3186
        %3188 = vdwg.mxu0
        %3189 = vmatpush.msra.mxu0 0.0
        %3190 = vmatpush.msra.mxu0 0.0
        %3191 = vmatpush.msra.mxu0 0.0
        %3192 = vmatpush.msra.mxu0 0.0
        %3193 = vmatpush.msra.mxu0 0.0
        %3194 = vmatpush.msra.mxu0 0.0
        %3195 = vmatpush.msra.mxu0 0.0
        %3196 = vmatpush.msra.mxu0 0.0
        %3197 = vmatpush.msra.mxu0 0.0
        %3198 = vmatpush.msra.mxu0 0.0
        %3199 = vmatpush.msra.mxu0 0.0
        %3200 = vmatpush.msra.mxu0 0.0
        %3201 = vmatpush.msra.mxu0 0.0
        %v3202 = vand.u32 %v2850, 4294901760
        %3203 = vmatpush.msra.mxu0 %v3202
        %v3204 = vand.u32 %v2823, 4294901760
        %3205 = vmatpush.msra.mxu0 %v3204
        %v3206 = vand.u32 %v2822, 4294901760
        %3207 = vmatpush.msra.mxu0 %v3206
        %v3208 = vand.u32 %v2826, 4294901760
        %3209 = vmatmul.f32.gmra.mxu0 %v3208
        %v3210 = vpop.f32.mrf.mxu0
        %v3211 = vadd.f32 %v3159, %v3210
        %v3212 = vand.u32 %v2829, 4294901760
        %3213 = vmatmul.f32.gmra.mxu0 %v3212
        %v3214 = vpop.f32.mrf.mxu0
        %v3215 = vadd.f32 %v3163, %v3214
        %v3216 = vand.u32 %v2832, 4294901760
        %3217 = vmatmul.f32.gmra.mxu0 %v3216
        %v3218 = vpop.f32.mrf.mxu0
        %v3219 = vadd.f32 %v3167, %v3218
        %v3220 = vand.u32 %v2835, 4294901760
        %3221 = vmatmul.f32.gmra.mxu0 %v3220
        %v3222 = vpop.f32.mrf.mxu0
        %v3223 = vadd.f32 %v3171, %v3222
        %v3224 = vand.u32 %v2838, 4294901760
        %3225 = vmatmul.f32.gmra.mxu0 %v3224
        %v3226 = vpop.f32.mrf.mxu0
        %v3227 = vadd.f32 %v3175, %v3226
        %v3228 = vand.u32 %v2841, 4294901760
        %3229 = vmatmul.f32.gmra.mxu0 %v3228
        %v3230 = vpop.f32.mrf.mxu0
        %v3231 = vadd.f32 %v3179, %v3230
        %v3232 = vand.u32 %v2844, 4294901760
        %3233 = vmatmul.f32.gmra.mxu0 %v3232
        %v3234 = vpop.f32.mrf.mxu0
        %v3235 = vadd.f32 %v3183, %v3234
        %v3236 = vand.u32 %v2847, 4294901760
        %3237 = vmatmul.f32.gmra.mxu0 %v3236
        %v3238 = vpop.f32.mrf.mxu0
        %v3239 = vadd.f32 %v3187, %v3238
        %3240 = vdwg.mxu0
        %v3241 = vadd.f32 %v2805, %v3211
        %v3242 = vadd.f32 %v2806, %v3215
        %v3243 = vadd.f32 %v2807, %v3219
        %v3244 = vadd.f32 %v2808, %v3223
        %v3245 = vadd.f32 %v2809, %v3227
        %v3246 = vadd.f32 %v2810, %v3231
        %v3247 = vadd.f32 %v2811, %v3235
        %v3248 = vadd.f32 %v2812, %v3239
        %v3249 = vld [vmem:[%s190 + $0x6] sm:$0xff]
        %v3250 = vld [vmem:[%s190 + $0xe] sm:$0xff]
        %v3251 = vld [vmem:[%s190 + $0x1e] sm:$0xff]
        %v3252 = vld [vmem:[%s190 + $0x26] sm:$0xff]
        %v3253 = vld [vmem:[%s190 + $0x36] sm:$0xff]
        %v3254 = vld [vmem:[%s190 + $0x3e] sm:$0xff]
        %v3255 = vld [vmem:[%s190 + $0x4e] sm:$0xff]
        %v3256 = vld [vmem:[%s190 + $0x56] sm:$0xff]
        %s3257 = scalar_lea.vmem [#allocation2], 144
        %v3258 = vld [vmem:[%s3257] sm:$0xff]
        %v3259 = vld [vmem:[%s3257 + $0x8] sm:$0xff]
        %v3260 = vld [vmem:[%s3257 + $0x10] sm:$0x3f]
        %v3262 = vsel %vm671, %v3249, 0
        %v3265 = vsel %vm671, %v3250, 0
        %v3268 = vsel %vm671, %v3251, 0
        %v3271 = vsel %vm671, %v3252, 0
        %v3274 = vsel %vm671, %v3253, 0
        %v3277 = vsel %vm671, %v3254, 0
        %v3280 = vsel %vm671, %v3255, 0
        %v3283 = vsel %vm671, %v3256, 0
        %v3286 = vsel %vm696, %v3260, 0
        %3288 = vmatpush.msra.mxu0 0.0
        %3289 = vmatpush.msra.mxu0 0.0
        %3290 = vmatpush.msra.mxu0 0.0
        %3291 = vmatpush.msra.mxu0 0.0
        %3292 = vmatpush.msra.mxu0 0.0
        %3293 = vmatpush.msra.mxu0 0.0
        %3294 = vmatpush.msra.mxu0 0.0
        %3295 = vmatpush.msra.mxu0 0.0
        %3296 = vmatpush.msra.mxu0 0.0
        %3297 = vmatpush.msra.mxu0 0.0
        %3298 = vmatpush.msra.mxu0 0.0
        %3299 = vmatpush.msra.mxu0 0.0
        %3300 = vmatpush.msra.mxu0 0.0
        %v3301 = vand.u32 %v3286, 4294901760
        %3302 = vmatpush.msra.mxu0 %v3301
        %v3303 = vand.u32 %v3259, 4294901760
        %3304 = vmatpush.msra.mxu0 %v3303
        %v3305 = vand.u32 %v3258, 4294901760
        %3306 = vmatpush.msra.mxu0 %v3305
        %v3307 = vand.u32 %v3262, 4294901760
        %v3308 = vsub.f32 %v3262, %v3307
        %v3309 = vand.u32 %v3308, 4294901760
        %v3310 = vsub.f32 %v3308, %v3309
        %v3311 = vand.u32 %v3310, 4294901760
        %3312 = vmatmul.f32.gmra.mxu0 %v3311
        %v3313 = vpop.f32.mrf.mxu0
        %v3314 = vadd.f32 0.0, %v3313
        %v3315 = vand.u32 %v3265, 4294901760
        %v3316 = vsub.f32 %v3265, %v3315
        %v3317 = vand.u32 %v3316, 4294901760
        %v3318 = vsub.f32 %v3316, %v3317
        %v3319 = vand.u32 %v3318, 4294901760
        %3320 = vmatmul.f32.gmra.mxu0 %v3319
        %v3321 = vpop.f32.mrf.mxu0
        %v3322 = vadd.f32 0.0, %v3321
        %v3323 = vand.u32 %v3268, 4294901760
        %v3324 = vsub.f32 %v3268, %v3323
        %v3325 = vand.u32 %v3324, 4294901760
        %v3326 = vsub.f32 %v3324, %v3325
        %v3327 = vand.u32 %v3326, 4294901760
        %3328 = vmatmul.f32.gmra.mxu0 %v3327
        %v3329 = vpop.f32.mrf.mxu0
        %v3330 = vadd.f32 0.0, %v3329
        %v3331 = vand.u32 %v3271, 4294901760
        %v3332 = vsub.f32 %v3271, %v3331
        %v3333 = vand.u32 %v3332, 4294901760
        %v3334 = vsub.f32 %v3332, %v3333
        %v3335 = vand.u32 %v3334, 4294901760
        %3336 = vmatmul.f32.gmra.mxu0 %v3335
        %v3337 = vpop.f32.mrf.mxu0
        %v3338 = vadd.f32 0.0, %v3337
        %v3339 = vand.u32 %v3274, 4294901760
        %v3340 = vsub.f32 %v3274, %v3339
        %v3341 = vand.u32 %v3340, 4294901760
        %v3342 = vsub.f32 %v3340, %v3341
        %v3343 = vand.u32 %v3342, 4294901760
        %3344 = vmatmul.f32.gmra.mxu0 %v3343
        %v3345 = vpop.f32.mrf.mxu0
        %v3346 = vadd.f32 0.0, %v3345
        %v3347 = vand.u32 %v3277, 4294901760
        %v3348 = vsub.f32 %v3277, %v3347
        %v3349 = vand.u32 %v3348, 4294901760
        %v3350 = vsub.f32 %v3348, %v3349
        %v3351 = vand.u32 %v3350, 4294901760
        %3352 = vmatmul.f32.gmra.mxu0 %v3351
        %v3353 = vpop.f32.mrf.mxu0
        %v3354 = vadd.f32 0.0, %v3353
        %v3355 = vand.u32 %v3280, 4294901760
        %v3356 = vsub.f32 %v3280, %v3355
        %v3357 = vand.u32 %v3356, 4294901760
        %v3358 = vsub.f32 %v3356, %v3357
        %v3359 = vand.u32 %v3358, 4294901760
        %3360 = vmatmul.f32.gmra.mxu0 %v3359
        %v3361 = vpop.f32.mrf.mxu0
        %v3362 = vadd.f32 0.0, %v3361
        %v3363 = vand.u32 %v3283, 4294901760
        %v3364 = vsub.f32 %v3283, %v3363
        %v3365 = vand.u32 %v3364, 4294901760
        %v3366 = vsub.f32 %v3364, %v3365
        %v3367 = vand.u32 %v3366, 4294901760
        %3368 = vmatmul.f32.gmra.mxu0 %v3367
        %v3369 = vpop.f32.mrf.mxu0
        %v3370 = vadd.f32 0.0, %v3369
        %3371 = vdwg.mxu0
        %3372 = vmatpush.msra.mxu0 0.0
        %3373 = vmatpush.msra.mxu0 0.0
        %3374 = vmatpush.msra.mxu0 0.0
        %3375 = vmatpush.msra.mxu0 0.0
        %3376 = vmatpush.msra.mxu0 0.0
        %3377 = vmatpush.msra.mxu0 0.0
        %3378 = vmatpush.msra.mxu0 0.0
        %3379 = vmatpush.msra.mxu0 0.0
        %3380 = vmatpush.msra.mxu0 0.0
        %3381 = vmatpush.msra.mxu0 0.0
        %3382 = vmatpush.msra.mxu0 0.0
        %3383 = vmatpush.msra.mxu0 0.0
        %3384 = vmatpush.msra.mxu0 0.0
        %v3385 = vand.u32 %v3286, 4294901760
        %v3386 = vsub.f32 %v3286, %v3385
        %v3387 = vand.u32 %v3386, 4294901760
        %v3388 = vsub.f32 %v3386, %v3387
        %v3389 = vand.u32 %v3388, 4294901760
        %3390 = vmatpush.msra.mxu0 %v3389
        %v3391 = vand.u32 %v3259, 4294901760
        %v3392 = vsub.f32 %v3259, %v3391
        %v3393 = vand.u32 %v3392, 4294901760
        %v3394 = vsub.f32 %v3392, %v3393
        %v3395 = vand.u32 %v3394, 4294901760
        %3396 = vmatpush.msra.mxu0 %v3395
        %v3397 = vand.u32 %v3258, 4294901760
        %v3398 = vsub.f32 %v3258, %v3397
        %v3399 = vand.u32 %v3398, 4294901760
        %v3400 = vsub.f32 %v3398, %v3399
        %v3401 = vand.u32 %v3400, 4294901760
        %3402 = vmatpush.msra.mxu0 %v3401
        %v3403 = vand.u32 %v3262, 4294901760
        %3404 = vmatmul.f32.gmra.mxu0 %v3403
        %v3405 = vpop.f32.mrf.mxu0
        %v3406 = vadd.f32 %v3314, %v3405
        %v3407 = vand.u32 %v3265, 4294901760
        %3408 = vmatmul.f32.gmra.mxu0 %v3407
        %v3409 = vpop.f32.mrf.mxu0
        %v3410 = vadd.f32 %v3322, %v3409
        %v3411 = vand.u32 %v3268, 4294901760
        %3412 = vmatmul.f32.gmra.mxu0 %v3411
        %v3413 = vpop.f32.mrf.mxu0
        %v3414 = vadd.f32 %v3330, %v3413
        %v3415 = vand.u32 %v3271, 4294901760
        %3416 = vmatmul.f32.gmra.mxu0 %v3415
        %v3417 = vpop.f32.mrf.mxu0
        %v3418 = vadd.f32 %v3338, %v3417
        %v3419 = vand.u32 %v3274, 4294901760
        %3420 = vmatmul.f32.gmra.mxu0 %v3419
        %v3421 = vpop.f32.mrf.mxu0
        %v3422 = vadd.f32 %v3346, %v3421
        %v3423 = vand.u32 %v3277, 4294901760
        %3424 = vmatmul.f32.gmra.mxu0 %v3423
        %v3425 = vpop.f32.mrf.mxu0
        %v3426 = vadd.f32 %v3354, %v3425
        %v3427 = vand.u32 %v3280, 4294901760
        %3428 = vmatmul.f32.gmra.mxu0 %v3427
        %v3429 = vpop.f32.mrf.mxu0
        %v3430 = vadd.f32 %v3362, %v3429
        %v3431 = vand.u32 %v3283, 4294901760
        %3432 = vmatmul.f32.gmra.mxu0 %v3431
        %v3433 = vpop.f32.mrf.mxu0
        %v3434 = vadd.f32 %v3370, %v3433
        %3435 = vdwg.mxu0
        %3436 = vmatpush.msra.mxu0 0.0
        %3437 = vmatpush.msra.mxu0 0.0
        %3438 = vmatpush.msra.mxu0 0.0
        %3439 = vmatpush.msra.mxu0 0.0
        %3440 = vmatpush.msra.mxu0 0.0
        %3441 = vmatpush.msra.mxu0 0.0
        %3442 = vmatpush.msra.mxu0 0.0
        %3443 = vmatpush.msra.mxu0 0.0
        %3444 = vmatpush.msra.mxu0 0.0
        %3445 = vmatpush.msra.mxu0 0.0
        %3446 = vmatpush.msra.mxu0 0.0
        %3447 = vmatpush.msra.mxu0 0.0
        %3448 = vmatpush.msra.mxu0 0.0
        %v3449 = vand.u32 %v3286, 4294901760
        %v3450 = vsub.f32 %v3286, %v3449
        %3451 = vmatpush.msra.mxu0 %v3450
        %v3452 = vand.u32 %v3259, 4294901760
        %v3453 = vsub.f32 %v3259, %v3452
        %3454 = vmatpush.msra.mxu0 %v3453
        %v3455 = vand.u32 %v3258, 4294901760
        %v3456 = vsub.f32 %v3258, %v3455
        %3457 = vmatpush.msra.mxu0 %v3456
        %v3458 = vand.u32 %v3262, 4294901760
        %v3459 = vsub.f32 %v3262, %v3458
        %3460 = vmatmul.f32.gmra.mxu0 %v3459
        %v3461 = vpop.f32.mrf.mxu0
        %v3462 = vadd.f32 %v3406, %v3461
        %v3463 = vand.u32 %v3265, 4294901760
        %v3464 = vsub.f32 %v3265, %v3463
        %3465 = vmatmul.f32.gmra.mxu0 %v3464
        %v3466 = vpop.f32.mrf.mxu0
        %v3467 = vadd.f32 %v3410, %v3466
        %v3468 = vand.u32 %v3268, 4294901760
        %v3469 = vsub.f32 %v3268, %v3468
        %3470 = vmatmul.f32.gmra.mxu0 %v3469
        %v3471 = vpop.f32.mrf.mxu0
        %v3472 = vadd.f32 %v3414, %v3471
        %v3473 = vand.u32 %v3271, 4294901760
        %v3474 = vsub.f32 %v3271, %v3473
        %3475 = vmatmul.f32.gmra.mxu0 %v3474
        %v3476 = vpop.f32.mrf.mxu0
        %v3477 = vadd.f32 %v3418, %v3476
        %v3478 = vand.u32 %v3274, 4294901760
        %v3479 = vsub.f32 %v3274, %v3478
        %3480 = vmatmul.f32.gmra.mxu0 %v3479
        %v3481 = vpop.f32.mrf.mxu0
        %v3482 = vadd.f32 %v3422, %v3481
        %v3483 = vand.u32 %v3277, 4294901760
        %v3484 = vsub.f32 %v3277, %v3483
        %3485 = vmatmul.f32.gmra.mxu0 %v3484
        %v3486 = vpop.f32.mrf.mxu0
        %v3487 = vadd.f32 %v3426, %v3486
        %v3488 = vand.u32 %v3280, 4294901760
        %v3489 = vsub.f32 %v3280, %v3488
        %3490 = vmatmul.f32.gmra.mxu0 %v3489
        %v3491 = vpop.f32.mrf.mxu0
        %v3492 = vadd.f32 %v3430, %v3491
        %v3493 = vand.u32 %v3283, 4294901760
        %v3494 = vsub.f32 %v3283, %v3493
        %3495 = vmatmul.f32.gmra.mxu0 %v3494
        %v3496 = vpop.f32.mrf.mxu0
        %v3497 = vadd.f32 %v3434, %v3496
        %3498 = vdwg.mxu0
        %3499 = vmatpush.msra.mxu0 0.0
        %3500 = vmatpush.msra.mxu0 0.0
        %3501 = vmatpush.msra.mxu0 0.0
        %3502 = vmatpush.msra.mxu0 0.0
        %3503 = vmatpush.msra.mxu0 0.0
        %3504 = vmatpush.msra.mxu0 0.0
        %3505 = vmatpush.msra.mxu0 0.0
        %3506 = vmatpush.msra.mxu0 0.0
        %3507 = vmatpush.msra.mxu0 0.0
        %3508 = vmatpush.msra.mxu0 0.0
        %3509 = vmatpush.msra.mxu0 0.0
        %3510 = vmatpush.msra.mxu0 0.0
        %3511 = vmatpush.msra.mxu0 0.0
        %v3512 = vand.u32 %v3286, 4294901760
        %3513 = vmatpush.msra.mxu0 %v3512
        %v3514 = vand.u32 %v3259, 4294901760
        %3515 = vmatpush.msra.mxu0 %v3514
        %v3516 = vand.u32 %v3258, 4294901760
        %3517 = vmatpush.msra.mxu0 %v3516
        %v3518 = vand.u32 %v3262, 4294901760
        %v3519 = vsub.f32 %v3262, %v3518
        %v3520 = vand.u32 %v3519, 4294901760
        %3521 = vmatmul.f32.gmra.mxu0 %v3520
        %v3522 = vpop.f32.mrf.mxu0
        %v3523 = vadd.f32 %v3462, %v3522
        %v3524 = vand.u32 %v3265, 4294901760
        %v3525 = vsub.f32 %v3265, %v3524
        %v3526 = vand.u32 %v3525, 4294901760
        %3527 = vmatmul.f32.gmra.mxu0 %v3526
        %v3528 = vpop.f32.mrf.mxu0
        %v3529 = vadd.f32 %v3467, %v3528
        %v3530 = vand.u32 %v3268, 4294901760
        %v3531 = vsub.f32 %v3268, %v3530
        %v3532 = vand.u32 %v3531, 4294901760
        %3533 = vmatmul.f32.gmra.mxu0 %v3532
        %v3534 = vpop.f32.mrf.mxu0
        %v3535 = vadd.f32 %v3472, %v3534
        %v3536 = vand.u32 %v3271, 4294901760
        %v3537 = vsub.f32 %v3271, %v3536
        %v3538 = vand.u32 %v3537, 4294901760
        %3539 = vmatmul.f32.gmra.mxu0 %v3538
        %v3540 = vpop.f32.mrf.mxu0
        %v3541 = vadd.f32 %v3477, %v3540
        %v3542 = vand.u32 %v3274, 4294901760
        %v3543 = vsub.f32 %v3274, %v3542
        %v3544 = vand.u32 %v3543, 4294901760
        %3545 = vmatmul.f32.gmra.mxu0 %v3544
        %v3546 = vpop.f32.mrf.mxu0
        %v3547 = vadd.f32 %v3482, %v3546
        %v3548 = vand.u32 %v3277, 4294901760
        %v3549 = vsub.f32 %v3277, %v3548
        %v3550 = vand.u32 %v3549, 4294901760
        %3551 = vmatmul.f32.gmra.mxu0 %v3550
        %v3552 = vpop.f32.mrf.mxu0
        %v3553 = vadd.f32 %v3487, %v3552
        %v3554 = vand.u32 %v3280, 4294901760
        %v3555 = vsub.f32 %v3280, %v3554
        %v3556 = vand.u32 %v3555, 4294901760
        %3557 = vmatmul.f32.gmra.mxu0 %v3556
        %v3558 = vpop.f32.mrf.mxu0
        %v3559 = vadd.f32 %v3492, %v3558
        %v3560 = vand.u32 %v3283, 4294901760
        %v3561 = vsub.f32 %v3283, %v3560
        %v3562 = vand.u32 %v3561, 4294901760
        %3563 = vmatmul.f32.gmra.mxu0 %v3562
        %v3564 = vpop.f32.mrf.mxu0
        %v3565 = vadd.f32 %v3497, %v3564
        %3566 = vdwg.mxu0
        %3567 = vmatpush.msra.mxu0 0.0
        %3568 = vmatpush.msra.mxu0 0.0
        %3569 = vmatpush.msra.mxu0 0.0
        %3570 = vmatpush.msra.mxu0 0.0
        %3571 = vmatpush.msra.mxu0 0.0
        %3572 = vmatpush.msra.mxu0 0.0
        %3573 = vmatpush.msra.mxu0 0.0
        %3574 = vmatpush.msra.mxu0 0.0
        %3575 = vmatpush.msra.mxu0 0.0
        %3576 = vmatpush.msra.mxu0 0.0
        %3577 = vmatpush.msra.mxu0 0.0
        %3578 = vmatpush.msra.mxu0 0.0
        %3579 = vmatpush.msra.mxu0 0.0
        %v3580 = vand.u32 %v3286, 4294901760
        %v3581 = vsub.f32 %v3286, %v3580
        %v3582 = vand.u32 %v3581, 4294901760
        %3583 = vmatpush.msra.mxu0 %v3582
        %v3584 = vand.u32 %v3259, 4294901760
        %v3585 = vsub.f32 %v3259, %v3584
        %v3586 = vand.u32 %v3585, 4294901760
        %3587 = vmatpush.msra.mxu0 %v3586
        %v3588 = vand.u32 %v3258, 4294901760
        %v3589 = vsub.f32 %v3258, %v3588
        %v3590 = vand.u32 %v3589, 4294901760
        %3591 = vmatpush.msra.mxu0 %v3590
        %v3592 = vand.u32 %v3262, 4294901760
        %3593 = vmatmul.f32.gmra.mxu0 %v3592
        %v3594 = vpop.f32.mrf.mxu0
        %v3595 = vadd.f32 %v3523, %v3594
        %v3596 = vand.u32 %v3265, 4294901760
        %3597 = vmatmul.f32.gmra.mxu0 %v3596
        %v3598 = vpop.f32.mrf.mxu0
        %v3599 = vadd.f32 %v3529, %v3598
        %v3600 = vand.u32 %v3268, 4294901760
        %3601 = vmatmul.f32.gmra.mxu0 %v3600
        %v3602 = vpop.f32.mrf.mxu0
        %v3603 = vadd.f32 %v3535, %v3602
        %v3604 = vand.u32 %v3271, 4294901760
        %3605 = vmatmul.f32.gmra.mxu0 %v3604
        %v3606 = vpop.f32.mrf.mxu0
        %v3607 = vadd.f32 %v3541, %v3606
        %v3608 = vand.u32 %v3274, 4294901760
        %3609 = vmatmul.f32.gmra.mxu0 %v3608
        %v3610 = vpop.f32.mrf.mxu0
        %v3611 = vadd.f32 %v3547, %v3610
        %v3612 = vand.u32 %v3277, 4294901760
        %3613 = vmatmul.f32.gmra.mxu0 %v3612
        %v3614 = vpop.f32.mrf.mxu0
        %v3615 = vadd.f32 %v3553, %v3614
        %v3616 = vand.u32 %v3280, 4294901760
        %3617 = vmatmul.f32.gmra.mxu0 %v3616
        %v3618 = vpop.f32.mrf.mxu0
        %v3619 = vadd.f32 %v3559, %v3618
        %v3620 = vand.u32 %v3283, 4294901760
        %3621 = vmatmul.f32.gmra.mxu0 %v3620
        %v3622 = vpop.f32.mrf.mxu0
        %v3623 = vadd.f32 %v3565, %v3622
        %3624 = vdwg.mxu0
        %3625 = vmatpush.msra.mxu0 0.0
        %3626 = vmatpush.msra.mxu0 0.0
        %3627 = vmatpush.msra.mxu0 0.0
        %3628 = vmatpush.msra.mxu0 0.0
        %3629 = vmatpush.msra.mxu0 0.0
        %3630 = vmatpush.msra.mxu0 0.0
        %3631 = vmatpush.msra.mxu0 0.0
        %3632 = vmatpush.msra.mxu0 0.0
        %3633 = vmatpush.msra.mxu0 0.0
        %3634 = vmatpush.msra.mxu0 0.0
        %3635 = vmatpush.msra.mxu0 0.0
        %3636 = vmatpush.msra.mxu0 0.0
        %3637 = vmatpush.msra.mxu0 0.0
        %v3638 = vand.u32 %v3286, 4294901760
        %3639 = vmatpush.msra.mxu0 %v3638
        %v3640 = vand.u32 %v3259, 4294901760
        %3641 = vmatpush.msra.mxu0 %v3640
        %v3642 = vand.u32 %v3258, 4294901760
        %3643 = vmatpush.msra.mxu0 %v3642
        %v3644 = vand.u32 %v3262, 4294901760
        %3645 = vmatmul.f32.gmra.mxu0 %v3644
        %v3646 = vpop.f32.mrf.mxu0
        %v3647 = vadd.f32 %v3595, %v3646
        %v3648 = vand.u32 %v3265, 4294901760
        %3649 = vmatmul.f32.gmra.mxu0 %v3648
        %v3650 = vpop.f32.mrf.mxu0
        %v3651 = vadd.f32 %v3599, %v3650
        %v3652 = vand.u32 %v3268, 4294901760
        %3653 = vmatmul.f32.gmra.mxu0 %v3652
        %v3654 = vpop.f32.mrf.mxu0
        %v3655 = vadd.f32 %v3603, %v3654
        %v3656 = vand.u32 %v3271, 4294901760
        %3657 = vmatmul.f32.gmra.mxu0 %v3656
        %v3658 = vpop.f32.mrf.mxu0
        %v3659 = vadd.f32 %v3607, %v3658
        %v3660 = vand.u32 %v3274, 4294901760
        %3661 = vmatmul.f32.gmra.mxu0 %v3660
        %v3662 = vpop.f32.mrf.mxu0
        %v3663 = vadd.f32 %v3611, %v3662
        %v3664 = vand.u32 %v3277, 4294901760
        %3665 = vmatmul.f32.gmra.mxu0 %v3664
        %v3666 = vpop.f32.mrf.mxu0
        %v3667 = vadd.f32 %v3615, %v3666
        %v3668 = vand.u32 %v3280, 4294901760
        %3669 = vmatmul.f32.gmra.mxu0 %v3668
        %v3670 = vpop.f32.mrf.mxu0
        %v3671 = vadd.f32 %v3619, %v3670
        %v3672 = vand.u32 %v3283, 4294901760
        %3673 = vmatmul.f32.gmra.mxu0 %v3672
        %v3674 = vpop.f32.mrf.mxu0
        %v3675 = vadd.f32 %v3623, %v3674
        %3676 = vdwg.mxu0
        %v3677 = vadd.f32 %v3241, %v3647
        %v3678 = vadd.f32 %v3242, %v3651
        %v3679 = vadd.f32 %v3243, %v3655
        %v3680 = vadd.f32 %v3244, %v3659
        %v3681 = vadd.f32 %v3245, %v3663
        %v3682 = vadd.f32 %v3246, %v3667
        %v3683 = vadd.f32 %v3247, %v3671
        %v3684 = vadd.f32 %v3248, %v3675
        %vm3685 = vcmask 130048
        %3686 = vst.msk [vmem:[%s176] sm:$0xff] %vm3685, %v3677
        %3687 = vst.msk [vmem:[%s176 + $0x8] sm:$0xff] %vm3685, %v3678
        %3688 = vst.msk [vmem:[%s176 + $0x10] sm:$0xff] %vm3685, %v3679
        %3689 = vst.msk [vmem:[%s176 + $0x18] sm:$0xff] %vm3685, %v3680
        %3690 = vst.msk [vmem:[%s176 + $0x20] sm:$0xff] %vm3685, %v3681
        %3691 = vst.msk [vmem:[%s176 + $0x28] sm:$0xff] %vm3685, %v3682
        %3692 = vst.msk [vmem:[%s176 + $0x30] sm:$0xff] %vm3685, %v3683
        %3693 = vst.msk [vmem:[%s176 + $0x38] sm:$0xff] %vm3685, %v3684
        %s3694 = sand.u32 %s92, 1
        %s3695 = scalar_lea.sflag [#allocation4], %s3694
        %s3696 = sand.u32 %s92, 1
        %s3697 = smul.addr %s3696, 64
        %s3698 = scalar_lea.vmem [#allocation3], %s3697
        // Predicated region
        $region33: #{tpu_custom_call.1} parent=27 // pred_check
          %p3699 = pneg %p102
        $region34: #{tpu_custom_call.1} parent=27 // pred_check_branch
          %3701 = sbr.rel (%p3699) target = $region36
        $region35: #{tpu_custom_call.1} parent=27 // pred_region
          %s3702 = smul.u32 4, %s21
          %3704 = vsyncadd %s3695, 0
          %s3705 = smul.addr %s3702, 2
          %s3706 = smul.addr %s20, 8
          %s3707 = sadd.s32 %s3705, %s3706
          %s3708 = smul.addr %s3707, 8
          %s3709 = scalar_lea.hbm %s2, %s3708
          %s3710 = sshll.u32 %s3698, 4
          %s3711 = int_to_ptr.vmem [resolvable:$true] %s3710
          %s3712 = sshll.u32 %s3709, 4
          %s3713 = int_to_ptr.hbm [resolvable:$true] %s3712
          %3718 = dma.vmem_to_hbm [thread:$0]  %s3711, 1024, %s3713, %s3695, 128, 128, 8
        $region36: #{tpu_custom_call.1} parent=27 // pred_fallthru
          _
      $region28: #{tpu_custom_call.1} parent=5 // pred_fallthru
        _
      %p3719 = scmp.le.s32.totalorder 2, %s11
      // Predicated region
      $region37: #{tpu_custom_call.1} parent=5 // pred_check
        %p3720 = pneg %p3719
      $region38: #{tpu_custom_call.1} parent=5 // pred_check_branch
        %3722 = sbr.rel (%p3720) target = $region40
      $region39: #{tpu_custom_call.1} parent=5 // pred_region
        %s3723 = ssub.s32 %s11, 2
        // Predicated region
        $region41: #{tpu_custom_call.1} parent=39 // pred_check
          %p3724 = pneg %p108
        $region42: #{tpu_custom_call.1} parent=39 // pred_check_branch
          %3726 = sbr.rel (%p3724) target = $region44
        $region43: #{tpu_custom_call.1} parent=39 // pred_region
          %s3727 = sand.u32 %s93, 1
          %s3728 = scalar_lea.sflag [#allocation4], %s3727
          %s3729 = sand.u32 %s93, 1
          %s3730 = smul.addr %s3729, 64
          %s3731 = scalar_lea.vmem [#allocation3], %s3730
          %3733 = dma.done %s3728, 1024
        $region44: #{tpu_custom_call.1} parent=39 // pred_fallthru
          _
      $region40: #{tpu_custom_call.1} parent=5 // pred_fallthru
        _
    $region6: #{tpu_custom_call.1} parent=1 // loop_footer
      %s15 = sadd.s32 1, %s11
    $region7: #{tpu_custom_call.1} parent=1 // loop_footer_branch
      %10 = sbr.rel target = $region3
    $region8: #{tpu_custom_call.1} parent=1 // loop_exit
      _
    %3734 = vsyncpa [#allocation4], 1
    %s3735 = scalar_lea.sflag [#allocation4], 1
    %3736 = vsyncpa %s3735, 1

</llo_original>
